<compile_context>
chip_gen: v6e
topology: v6e:2x2x1
jax: 0.10.0
libtpu: 0.0.40
codegen_flags: <defaults>
</compile_context>

<pallas_src>
import math
import jax
import jax.numpy as jnp
from jax.experimental import pallas as pl
from jax.experimental.pallas import tpu as pltpu  # noqa: F401  (TPU backend)

# ---- model hyper-parameters (small, consistent with the module) ----
D_MODEL = 32
N_HEADS = 4
D_K = D_MODEL // N_HEADS
D_FF = 64
N_LAYERS = 2
VOCAB = 16
MAX_LEN = 64
EPS = 1e-6        # Annotated-Transformer LayerNorm eps
NEG_INF = -1e9
LANES = 128

# ---- packed weight-slab layout (rows x 128 lanes, f32) ----
# per-layer block (LAYER_ROWS rows, 8-aligned), row offsets relative to layer start:
#   [0:32)   : wqkv (32,96) in cols [0:96),   wo (32,32) in cols [96:128)
#   [32:64)  : w1   (32,64) in cols [0:64)
#   [32:96)  : w2   (64,32) in cols [64:96)
#   [96]     : bqkv (96,) cols [0:96), bo (32,) cols [96:128)
#   [97]     : ln1a [0:32) ln1b [32:64) ln2a [64:96) ln2b [96:128)
#   [98]     : b1 [0:64), b2 [64:96)
LAYER_ROWS = 104
ROW_BIAS1 = 96
ROW_LN = 97
ROW_BIAS2 = 98
GROW = N_LAYERS * LAYER_ROWS          # 208, 8-aligned
# global block, row offsets relative to GROW:
#   [0:32)   : gen_w padded to (32,128) (cols >= VOCAB are 0)
#   [32]     : gen_b padded to (128,)   (cols >= VOCAB are -1e9)
#   [33]     : lnf_a [0:32), lnf_b [32:64)
#   [40:56)  : embedding table (VOCAB, 32) in cols [0:32)
#   [56:120) : positional encoding (MAX_LEN, 32) in cols [0:32)
ROW_GENB = 32
ROW_LNF = 33
ROW_EMB = 40
ROW_PE = 56
TOTAL_ROWS = GROW + ROW_PE + MAX_LEN  # 328


def _layernorm(x, a, b):
    # a * (x - mean) * rsqrt(var + eps) + b, unbiased (n-1) variance like torch .std().
    mean = jnp.mean(x, axis=-1, keepdims=True)
    d = x - mean
    var = jnp.sum(d * d, axis=-1, keepdims=True) * (1.0 / (x.shape[-1] - 1))
    inv = jax.lax.rsqrt(var + EPS)    # single EUP push per LayerNorm
    return a * d * inv + b


# ------------------------------ fused kernel ------------------------------- #
def make_fused_kernel(B, S):
    nt = B * S
    sqrt_d = math.sqrt(D_MODEL)
    inv_sqrt_dk = 1.0 / math.sqrt(D_K)

    def kernel(ids_ref, keyok_ref, slab_ref, out_ref):
        # ---- embedding lookup as one-hot matmul + positional encoding ----
        ids = ids_ref[...]                                               # (nt, 1) int32
        vocab_iota = jax.lax.broadcasted_iota(jnp.int32, (nt, VOCAB), 1)
        onehot = (vocab_iota == ids).astype(jnp.float32)                 # (nt, V)
        emb = slab_ref[GROW + ROW_EMB:GROW + ROW_EMB + VOCAB, 0:D_MODEL]
        x = jnp.dot(onehot, emb, preferred_element_type=jnp.float32) * sqrt_d
        pe = slab_ref[GROW + ROW_PE:GROW + ROW_PE + S, 0:D_MODEL]        # (S, D)
        x = x + (jnp.concatenate([pe] * B, axis=0) if B > 1 else pe)

        # ---- block-diagonal additive mask from O(nt) inputs (no (nt,nt) operand) ----
        tok_r = jax.lax.broadcasted_iota(jnp.int32, (nt, nt), 0)
        tok_c = jax.lax.broadcasted_iota(jnp.int32, (nt, nt), 1)
        same_batch = None
        for b in range(B):                      # trace-time unroll; pure VPU compares
            rb = (tok_r >= b * S) & (tok_r < (b + 1) * S)
            cb = (tok_c >= b * S) & (tok_c < (b + 1) * S)
            blk = rb & cb
            same_batch = blk if same_batch is None else (same_batch | blk)
        key_ok = keyok_ref[...] > 0.0                                    # (1, nt)
        mask_add = jnp.where(same_batch & key_ok, 0.0, NEG_INF).astype(jnp.float32)

        for l in range(N_LAYERS):               # static unroll over layers
            r = l * LAYER_ROWS
            wqkv = slab_ref[r:r + D_MODEL, 0:3 * D_MODEL]                # (32, 96)
            wo = slab_ref[r:r + D_MODEL, 96:128]                         # (32, 32)
            w1 = slab_ref[r + 32:r + 64, 0:D_FF]                         # (32, 64)
            w2 = slab_ref[r + 32:r + 96, 64:96]                          # (64, 32)
            bqkv = slab_ref[r + ROW_BIAS1:r + ROW_BIAS1 + 1, 0:3 * D_MODEL]
            bo = slab_ref[r + ROW_BIAS1:r + ROW_BIAS1 + 1, 96:128]
            ln1a = slab_ref[r + ROW_LN:r + ROW_LN + 1, 0:32]
            ln1b = slab_ref[r + ROW_LN:r + ROW_LN + 1, 32:64]
            ln2a = slab_ref[r + ROW_LN:r + ROW_LN + 1, 64:96]
            ln2b = slab_ref[r + ROW_LN:r + ROW_LN + 1, 96:128]
            b1 = slab_ref[r + ROW_BIAS2:r + ROW_BIAS2 + 1, 0:D_FF]
            b2 = slab_ref[r + ROW_BIAS2:r + ROW_BIAS2 + 1, 64:96]

            # ---- self-attention sub-layer: x + MHA(LayerNorm(x)) ----
            xn = _layernorm(x, ln1a, ln1b)
            qkv = jnp.dot(xn, wqkv, preferred_element_type=jnp.float32) + bqkv  # (nt, 96)
            q = qkv[:, 0:D_MODEL]
            k = qkv[:, D_MODEL:2 * D_MODEL]
            v = qkv[:, 2 * D_MODEL:3 * D_MODEL]
            k_t = k.T                                                    # one transpose per layer
            heads = []
            for h in range(N_HEADS):            # static unroll over heads
                lo, hi = h * D_K, (h + 1) * D_K
                s = jnp.dot(q[:, lo:hi], k_t[lo:hi, :],
                            preferred_element_type=jnp.float32) * inv_sqrt_dk
                s = s + mask_add
                s = s - jnp.max(s, axis=-1, keepdims=True)
                p = jnp.exp(s)
                p = p * pl.reciprocal(jnp.sum(p, axis=-1, keepdims=True), approx=True)
                heads.append(jnp.dot(p, v[:, lo:hi], preferred_element_type=jnp.float32))
            attn = jnp.concatenate(heads, axis=-1)                       # (nt, D)
            x = x + jnp.dot(attn, wo, preferred_element_type=jnp.float32) + bo

            # ---- feed-forward sub-layer: x + FFN(LayerNorm(x)) ----
            xn2 = _layernorm(x, ln2a, ln2b)
            h1 = jnp.maximum(
                jnp.dot(xn2, w1, preferred_element_type=jnp.float32) + b1, 0.0)
            x = x + jnp.dot(h1, w2, preferred_element_type=jnp.float32) + b2

        # ---- final LayerNorm + generator (lane-dense 128-wide output) ----
        lnfa = slab_ref[GROW + ROW_LNF:GROW + ROW_LNF + 1, 0:D_MODEL]
        lnfb = slab_ref[GROW + ROW_LNF:GROW + ROW_LNF + 1, D_MODEL:2 * D_MODEL]
        genw = slab_ref[GROW:GROW + D_MODEL, :]                          # (32, 128)
        genb = slab_ref[GROW + ROW_GENB:GROW + ROW_GENB + 1, :]          # (1, 128)
        xf = _layernorm(x, lnfa, lnfb)
        logits = jnp.dot(xf, genw, preferred_element_type=jnp.float32) + genb
        # padded columns carry logit = -1e9 -> exp underflows to 0 -> exact log_softmax
        z = logits - jnp.max(logits, axis=-1, keepdims=True)
        lse = jnp.log(jnp.sum(jnp.exp(z), axis=-1, keepdims=True))
        out_ref[...] = (z - lse).astype(out_ref.dtype)

    return kernel


# ------------------------------- JAX glue ----------------------------------- #
def make_pe(max_len, d_model):
    pos = jnp.arange(max_len, dtype=jnp.float32)[:, None]
    div = jnp.exp(jnp.arange(0, d_model, 2, dtype=jnp.float32)
                  * -(math.log(10000.0) / d_model))
    pe = jnp.zeros((max_len, d_model), jnp.float32)
    pe = pe.at[:, 0::2].set(jnp.sin(pos * div))
    pe = pe.at[:, 1::2].set(jnp.cos(pos * div))
    return pe


def init_params(key):
    keys = jax.random.split(key, 12)
    ki = iter(keys)

    def nrm(shape, scale=0.1):
        return jax.random.normal(next(ki), shape, dtype=jnp.float32) * scale

    L, D = N_LAYERS, D_MODEL
    return dict(
        emb=nrm((VOCAB, D), 1.0 / math.sqrt(D)),
        pe=make_pe(MAX_LEN, D),
        wq=nrm((L, D, D)), bq=jnp.zeros((L, D), jnp.float32),
        wk=nrm((L, D, D)), bk=jnp.zeros((L, D), jnp.float32),
        wv=nrm((L, D, D)), bv=jnp.zeros((L, D), jnp.float32),
        wo=nrm((L, D, D)), bo=jnp.zeros((L, D), jnp.float32),
        ln1a=jnp.ones((L, D), jnp.float32), ln1b=jnp.zeros((L, D), jnp.float32),
        w1=nrm((L, D, D_FF)), b1=jnp.zeros((L, D_FF), jnp.float32),
        w2=nrm((L, D_FF, D)), b2=jnp.zeros((L, D), jnp.float32),
        ln2a=jnp.ones((L, D), jnp.float32), ln2b=jnp.zeros((L, D), jnp.float32),
        lnf_a=jnp.ones((D,), jnp.float32), lnf_b=jnp.zeros((D,), jnp.float32),
        gen_w=nrm((D, VOCAB)), gen_b=jnp.zeros((VOCAB,), jnp.float32),
    )


def pack_params(p):
    """Pack all static parameters into one (TOTAL_ROWS, 128) f32 slab (done once)."""
    slab = jnp.zeros((TOTAL_ROWS, LANES), jnp.float32)
    for l in range(N_LAYERS):
        r = l * LAYER_ROWS
        wqkv = jnp.concatenate([p["wq"][l], p["wk"][l], p["wv"][l]], axis=1)   # (32, 96)
        bqkv = jnp.concatenate([p["bq"][l], p["bk"][l], p["bv"][l]], axis=0)   # (96,)
        slab = slab.at[r:r + D_MODEL, 0:3 * D_MODEL].set(wqkv)
        slab = slab.at[r:r + D_MODEL, 96:128].set(p["wo"][l])
        slab = slab.at[r + 32:r + 64, 0:D_FF].set(p["w1"][l])
        slab = slab.at[r + 32:r + 96, 64:96].set(p["w2"][l])
        slab = slab.at[r + ROW_BIAS1, 0:3 * D_MODEL].set(bqkv)
        slab = slab.at[r + ROW_BIAS1, 96:128].set(p["bo"][l])
        slab = slab.at[r + ROW_LN, 0:32].set(p["ln1a"][l])
        slab = slab.at[r + ROW_LN, 32:64].set(p["ln1b"][l])
        slab = slab.at[r + ROW_LN, 64:96].set(p["ln2a"][l])
        slab = slab.at[r + ROW_LN, 96:128].set(p["ln2b"][l])
        slab = slab.at[r + ROW_BIAS2, 0:D_FF].set(p["b1"][l])
        slab = slab.at[r + ROW_BIAS2, 64:96].set(p["b2"][l])
    g = GROW
    slab = slab.at[g:g + D_MODEL, 0:VOCAB].set(p["gen_w"])
    slab = slab.at[g + ROW_GENB, 0:VOCAB].set(p["gen_b"])
    slab = slab.at[g + ROW_GENB, VOCAB:LANES].set(
        jnp.full((LANES - VOCAB,), NEG_INF, jnp.float32))
    slab = slab.at[g + ROW_LNF, 0:D_MODEL].set(p["lnf_a"])
    slab = slab.at[g + ROW_LNF, D_MODEL:2 * D_MODEL].set(p["lnf_b"])
    slab = slab.at[g + ROW_EMB:g + ROW_EMB + VOCAB, 0:D_MODEL].set(p["emb"])
    slab = slab.at[g + ROW_PE:g + ROW_PE + MAX_LEN, 0:D_MODEL].set(p["pe"])
    return slab


def encoder_decoder_forward(src, src_mask, slab):
    """EncoderDecoder.forward(src, src_mask) = generator(encode(src, src_mask))."""
    B, S = src.shape
    nt = B * S
    ids = src.reshape(nt, 1).astype(jnp.int32)
    key_ok = (src_mask[:, 0, :].reshape(1, nt) > 0.0).astype(jnp.float32)  # (1, B*S)

    out = pl.pallas_call(
        make_fused_kernel(B, S),
        out_shape=jax.ShapeDtypeStruct((nt, LANES), jnp.float32),
        # no grid: single invocation, 3 operands, everything resident in VMEM
    )(ids, key_ok, slab)
    return out[:, :VOCAB].reshape(B, S, VOCAB)                             # log-probs


if __name__ == "__main__":
    key = jax.random.PRNGKey(0)
    k_param, k_src = jax.random.split(key)

    params = init_params(k_param)
    slab = pack_params(params)           # packed once, outside the jitted forward

    B, S = 2, 8
    src = jax.random.randint(k_src, (B, S), 0, VOCAB, dtype=jnp.int32)
    # src_mask: (B, 1, S); second batch element has its last two tokens masked out.
    src_mask = jnp.ones((B, 1, S), jnp.float32)
    src_mask = src_mask.at[1, 0, S - 2:].set(0.0)

    fwd = jax.jit(encoder_decoder_forward)
    out = fwd(src, src_mask, slab)
    out = jax.block_until_ready(out)

    assert out.shape == (B, S, VOCAB)
    assert bool(jnp.all(jnp.isfinite(out)))
    # rows of log_softmax must exp-sum to 1 (generator log_softmax is exact)
    assert bool(jnp.allclose(jnp.sum(jnp.exp(out), axis=-1), 1.0, atol=1e-4))
    print("KERNEL_OK")
</pallas_src>

<mosaic_0001>
module attributes {stable_mosaic.version = 11 : i64} {
  func.func @kernel(%arg0: memref<16x1xi32, #tpu.memory_space<vmem>>, %arg1: memref<1x16xf32, #tpu.memory_space<vmem>>, %arg2: memref<328x128xf32, #tpu.memory_space<vmem>>, %arg3: memref<16x128xf32, #tpu.memory_space<vmem>>) attributes {dimension_semantics = [], scalar_prefetch = 0 : i64, scratch_operands = 0 : i64, tpu.core_type = #tpu.core_type<tc>} {
    %c0 = arith.constant 0 : index
    %c0_0 = arith.constant 0 : index
    %0 = vector.load %arg0[%c0, %c0_0] : memref<16x1xi32, #tpu.memory_space<vmem>>, vector<16x1xi32>
    %1 = tpu.iota {dimensions = array<i32: 1>} : vector<16x16xi32>
    %2 = vector.broadcast %0 : vector<16x1xi32> to vector<16x16xi32>
    %3 = arith.cmpi eq, %1, %2 : vector<16x16xi32>
    %4 = arith.extui %3 : vector<16x16xi1> to vector<16x16xi32>
    %5 = arith.sitofp %4 : vector<16x16xi32> to vector<16x16xf32>
    %c248 = arith.constant 248 : index
    %c0_1 = arith.constant 0 : index
    %6 = vector.load %arg2[%c248, %c0_1] : memref<328x128xf32, #tpu.memory_space<vmem>>, vector<16x32xf32>
    %cst = arith.constant dense<0.000000e+00> : vector<16x32xf32>
    %7 = tpu.matmul %5, %6, %cst {dimension_numbers = #tpu.dot_dimension_numbers<[1], [0], [0], [1], [0, 0, 1, 1], [], []>} : vector<16x16xf32>, vector<16x32xf32>, vector<16x32xf32> -> vector<16x32xf32>
    %cst_2 = arith.constant 5.65685415 : f32
    %8 = vector.broadcast %cst_2 : f32 to vector<16x32xf32>
    %9 = arith.mulf %7, %8 : vector<16x32xf32>
    %c264 = arith.constant 264 : index
    %c0_3 = arith.constant 0 : index
    %10 = vector.load %arg2[%c264, %c0_3] : memref<328x128xf32, #tpu.memory_space<vmem>>, vector<8x32xf32>
    %11 = tpu.concatenate %10, %10 in 0 : vector<8x32xf32>, vector<8x32xf32> -> vector<16x32xf32>
    %12 = arith.addf %9, %11 : vector<16x32xf32>
    %13 = tpu.iota {dimensions = array<i32: 0>} : vector<16x16xi32>
    %14 = tpu.iota {dimensions = array<i32: 1>} : vector<16x16xi32>
    %c0_i32 = arith.constant 0 : i32
    %15 = vector.broadcast %c0_i32 : i32 to vector<16x16xi32>
    %16 = arith.cmpi sge, %13, %15 : vector<16x16xi32>
    %c8_i32 = arith.constant 8 : i32
    %17 = vector.broadcast %c8_i32 : i32 to vector<16x16xi32>
    %18 = arith.cmpi slt, %13, %17 : vector<16x16xi32>
    %19 = arith.andi %16, %18 : vector<16x16xi1>
    %c0_i32_4 = arith.constant 0 : i32
    %20 = vector.broadcast %c0_i32_4 : i32 to vector<16x16xi32>
    %21 = arith.cmpi sge, %14, %20 : vector<16x16xi32>
    %c8_i32_5 = arith.constant 8 : i32
    %22 = vector.broadcast %c8_i32_5 : i32 to vector<16x16xi32>
    %23 = arith.cmpi slt, %14, %22 : vector<16x16xi32>
    %24 = arith.andi %21, %23 : vector<16x16xi1>
    %25 = arith.andi %19, %24 : vector<16x16xi1>
    %c8_i32_6 = arith.constant 8 : i32
    %26 = vector.broadcast %c8_i32_6 : i32 to vector<16x16xi32>
    %27 = arith.cmpi sge, %13, %26 : vector<16x16xi32>
    %c16_i32 = arith.constant 16 : i32
    %28 = vector.broadcast %c16_i32 : i32 to vector<16x16xi32>
    %29 = arith.cmpi slt, %13, %28 : vector<16x16xi32>
    %30 = arith.andi %27, %29 : vector<16x16xi1>
    %c8_i32_7 = arith.constant 8 : i32
    %31 = vector.broadcast %c8_i32_7 : i32 to vector<16x16xi32>
    %32 = arith.cmpi sge, %14, %31 : vector<16x16xi32>
    %c16_i32_8 = arith.constant 16 : i32
    %33 = vector.broadcast %c16_i32_8 : i32 to vector<16x16xi32>
    %34 = arith.cmpi slt, %14, %33 : vector<16x16xi32>
    %35 = arith.andi %32, %34 : vector<16x16xi1>
    %36 = arith.andi %30, %35 : vector<16x16xi1>
    %37 = arith.ori %25, %36 : vector<16x16xi1>
    %c0_9 = arith.constant 0 : index
    %c0_10 = arith.constant 0 : index
    %38 = vector.load %arg1[%c0_9, %c0_10] : memref<1x16xf32, #tpu.memory_space<vmem>>, vector<1x16xf32>
    %cst_11 = arith.constant 0.000000e+00 : f32
    %39 = vector.broadcast %cst_11 : f32 to vector<1x16xf32>
    %40 = arith.cmpf ogt, %38, %39 : vector<1x16xf32>
    %41 = vector.broadcast %40 : vector<1x16xi1> to vector<16x16xi1>
    %42 = arith.andi %37, %41 : vector<16x16xi1>
    %cst_12 = arith.constant 0.000000e+00 : f32
    %cst_13 = arith.constant -1.000000e+09 : f32
    %43 = vector.broadcast %cst_12 : f32 to vector<16x16xf32>
    %44 = vector.broadcast %cst_13 : f32 to vector<16x16xf32>
    %45 = arith.select %42, %43, %44 : vector<16x16xi1>, vector<16x16xf32>
    %c0_14 = arith.constant 0 : index
    %c0_15 = arith.constant 0 : index
    %46 = vector.load %arg2[%c0_14, %c0_15] : memref<328x128xf32, #tpu.memory_space<vmem>>, vector<32x96xf32>
    %c0_16 = arith.constant 0 : index
    %c96 = arith.constant 96 : index
    %47 = vector.load %arg2[%c0_16, %c96] : memref<328x128xf32, #tpu.memory_space<vmem>>, vector<32x32xf32>
    %c32 = arith.constant 32 : index
    %c0_17 = arith.constant 0 : index
    %48 = vector.load %arg2[%c32, %c0_17] : memref<328x128xf32, #tpu.memory_space<vmem>>, vector<32x64xf32>
    %c32_18 = arith.constant 32 : index
    %c64 = arith.constant 64 : index
    %49 = vector.load %arg2[%c32_18, %c64] : memref<328x128xf32, #tpu.memory_space<vmem>>, vector<64x32xf32>
    %c96_19 = arith.constant 96 : index
    %c0_20 = arith.constant 0 : index
    %50 = vector.load %arg2[%c96_19, %c0_20] : memref<328x128xf32, #tpu.memory_space<vmem>>, vector<1x96xf32>
    %c96_21 = arith.constant 96 : index
    %c96_22 = arith.constant 96 : index
    %51 = vector.load %arg2[%c96_21, %c96_22] : memref<328x128xf32, #tpu.memory_space<vmem>>, vector<1x32xf32>
    %c97 = arith.constant 97 : index
    %c0_23 = arith.constant 0 : index
    %52 = vector.load %arg2[%c97, %c0_23] : memref<328x128xf32, #tpu.memory_space<vmem>>, vector<1x32xf32>
    %c97_24 = arith.constant 97 : index
    %c32_25 = arith.constant 32 : index
    %53 = vector.load %arg2[%c97_24, %c32_25] : memref<328x128xf32, #tpu.memory_space<vmem>>, vector<1x32xf32>
    %c97_26 = arith.constant 97 : index
    %c64_27 = arith.constant 64 : index
    %54 = vector.load %arg2[%c97_26, %c64_27] : memref<328x128xf32, #tpu.memory_space<vmem>>, vector<1x32xf32>
    %c97_28 = arith.constant 97 : index
    %c96_29 = arith.constant 96 : index
    %55 = vector.load %arg2[%c97_28, %c96_29] : memref<328x128xf32, #tpu.memory_space<vmem>>, vector<1x32xf32>
    %c98 = arith.constant 98 : index
    %c0_30 = arith.constant 0 : index
    %56 = vector.load %arg2[%c98, %c0_30] : memref<328x128xf32, #tpu.memory_space<vmem>>, vector<1x64xf32>
    %c98_31 = arith.constant 98 : index
    %c64_32 = arith.constant 64 : index
    %57 = vector.load %arg2[%c98_31, %c64_32] : memref<328x128xf32, #tpu.memory_space<vmem>>, vector<1x32xf32>
    %cst_33 = arith.constant dense<0.000000e+00> : vector<16xf32>
    %58 = vector.multi_reduction <add>, %12, %cst_33 [1] : vector<16x32xf32> to vector<16xf32>
    %59 = vector.shape_cast %58 : vector<16xf32> to vector<16x1xf32>
    %cst_34 = arith.constant 3.200000e+01 : f32
    %60 = vector.broadcast %cst_34 : f32 to vector<16x1xf32>
    %61 = arith.divf %59, %60 : vector<16x1xf32>
    %62 = vector.broadcast %61 : vector<16x1xf32> to vector<16x32xf32>
    %63 = arith.subf %12, %62 : vector<16x32xf32>
    %64 = arith.mulf %63, %63 : vector<16x32xf32>
    %cst_35 = arith.constant dense<0.000000e+00> : vector<16xf32>
    %65 = vector.multi_reduction <add>, %64, %cst_35 [1] : vector<16x32xf32> to vector<16xf32>
    %66 = vector.shape_cast %65 : vector<16xf32> to vector<16x1xf32>
    %cst_36 = arith.constant 0.0322580636 : f32
    %67 = vector.broadcast %cst_36 : f32 to vector<16x1xf32>
    %68 = arith.mulf %66, %67 : vector<16x1xf32>
    %cst_37 = arith.constant 9.99999997E-7 : f32
    %69 = vector.broadcast %cst_37 : f32 to vector<16x1xf32>
    %70 = arith.addf %68, %69 : vector<16x1xf32>
    %71 = math.rsqrt %70 : vector<16x1xf32>
    %72 = vector.broadcast %52 : vector<1x32xf32> to vector<16x32xf32>
    %73 = arith.mulf %72, %63 : vector<16x32xf32>
    %74 = vector.broadcast %71 : vector<16x1xf32> to vector<16x32xf32>
    %75 = arith.mulf %73, %74 : vector<16x32xf32>
    %76 = vector.broadcast %53 : vector<1x32xf32> to vector<16x32xf32>
    %77 = arith.addf %75, %76 : vector<16x32xf32>
    %cst_38 = arith.constant dense<0.000000e+00> : vector<16x96xf32>
    %78 = tpu.matmul %77, %46, %cst_38 {dimension_numbers = #tpu.dot_dimension_numbers<[1], [0], [0], [1], [0, 0, 1, 1], [], []>} : vector<16x32xf32>, vector<32x96xf32>, vector<16x96xf32> -> vector<16x96xf32>
    %79 = vector.broadcast %50 : vector<1x96xf32> to vector<16x96xf32>
    %80 = arith.addf %78, %79 : vector<16x96xf32>
    %81 = vector.extract_strided_slice %80 {offsets = [0, 0], sizes = [16, 32], strides = [1, 1]} : vector<16x96xf32> to vector<16x32xf32>
    %82 = vector.extract_strided_slice %80 {offsets = [0, 32], sizes = [16, 32], strides = [1, 1]} : vector<16x96xf32> to vector<16x32xf32>
    %83 = vector.extract_strided_slice %80 {offsets = [0, 64], sizes = [16, 32], strides = [1, 1]} : vector<16x96xf32> to vector<16x32xf32>
    %84 = tpu.transpose %82, [1, 0] : vector<16x32xf32> -> vector<32x16xf32>
    %85 = vector.extract_strided_slice %81 {offsets = [0, 0], sizes = [16, 8], strides = [1, 1]} : vector<16x32xf32> to vector<16x8xf32>
    %86 = vector.extract_strided_slice %84 {offsets = [0, 0], sizes = [8, 16], strides = [1, 1]} : vector<32x16xf32> to vector<8x16xf32>
    %cst_39 = arith.constant dense<0.000000e+00> : vector<16x16xf32>
    %87 = tpu.matmul %85, %86, %cst_39 {dimension_numbers = #tpu.dot_dimension_numbers<[1], [0], [0], [1], [0, 0, 1, 1], [], []>} : vector<16x8xf32>, vector<8x16xf32>, vector<16x16xf32> -> vector<16x16xf32>
    %cst_40 = arith.constant 0.353553385 : f32
    %88 = vector.broadcast %cst_40 : f32 to vector<16x16xf32>
    %89 = arith.mulf %87, %88 : vector<16x16xf32>
    %90 = arith.addf %89, %45 : vector<16x16xf32>
    %cst_41 = arith.constant dense<0xFF800000> : vector<16xf32>
    %91 = vector.multi_reduction <maximumf>, %90, %cst_41 [1] : vector<16x16xf32> to vector<16xf32>
    %92 = vector.shape_cast %91 : vector<16xf32> to vector<16x1xf32>
    %93 = vector.broadcast %92 : vector<16x1xf32> to vector<16x16xf32>
    %94 = arith.subf %90, %93 : vector<16x16xf32>
    %95 = math.exp %94 : vector<16x16xf32>
    %cst_42 = arith.constant dense<0.000000e+00> : vector<16xf32>
    %96 = vector.multi_reduction <add>, %95, %cst_42 [1] : vector<16x16xf32> to vector<16xf32>
    %97 = vector.shape_cast %96 : vector<16xf32> to vector<16x1xf32>
    %98 = tpu.reciprocal %97 {approx = true} : vector<16x1xf32> -> vector<16x1xf32>
    %99 = vector.broadcast %98 : vector<16x1xf32> to vector<16x16xf32>
    %100 = arith.mulf %95, %99 : vector<16x16xf32>
    %101 = vector.extract_strided_slice %83 {offsets = [0, 0], sizes = [16, 8], strides = [1, 1]} : vector<16x32xf32> to vector<16x8xf32>
    %cst_43 = arith.constant dense<0.000000e+00> : vector<16x8xf32>
    %102 = tpu.matmul %100, %101, %cst_43 {dimension_numbers = #tpu.dot_dimension_numbers<[1], [0], [0], [1], [0, 0, 1, 1], [], []>} : vector<16x16xf32>, vector<16x8xf32>, vector<16x8xf32> -> vector<16x8xf32>
    %103 = vector.extract_strided_slice %81 {offsets = [0, 8], sizes = [16, 8], strides = [1, 1]} : vector<16x32xf32> to vector<16x8xf32>
    %104 = vector.extract_strided_slice %84 {offsets = [8, 0], sizes = [8, 16], strides = [1, 1]} : vector<32x16xf32> to vector<8x16xf32>
    %cst_44 = arith.constant dense<0.000000e+00> : vector<16x16xf32>
    %105 = tpu.matmul %103, %104, %cst_44 {dimension_numbers = #tpu.dot_dimension_numbers<[1], [0], [0], [1], [0, 0, 1, 1], [], []>} : vector<16x8xf32>, vector<8x16xf32>, vector<16x16xf32> -> vector<16x16xf32>
    %cst_45 = arith.constant 0.353553385 : f32
    %106 = vector.broadcast %cst_45 : f32 to vector<16x16xf32>
    %107 = arith.mulf %105, %106 : vector<16x16xf32>
    %108 = arith.addf %107, %45 : vector<16x16xf32>
    %cst_46 = arith.constant dense<0xFF800000> : vector<16xf32>
    %109 = vector.multi_reduction <maximumf>, %108, %cst_46 [1] : vector<16x16xf32> to vector<16xf32>
    %110 = vector.shape_cast %109 : vector<16xf32> to vector<16x1xf32>
    %111 = vector.broadcast %110 : vector<16x1xf32> to vector<16x16xf32>
    %112 = arith.subf %108, %111 : vector<16x16xf32>
    %113 = math.exp %112 : vector<16x16xf32>
    %cst_47 = arith.constant dense<0.000000e+00> : vector<16xf32>
    %114 = vector.multi_reduction <add>, %113, %cst_47 [1] : vector<16x16xf32> to vector<16xf32>
    %115 = vector.shape_cast %114 : vector<16xf32> to vector<16x1xf32>
    %116 = tpu.reciprocal %115 {approx = true} : vector<16x1xf32> -> vector<16x1xf32>
    %117 = vector.broadcast %116 : vector<16x1xf32> to vector<16x16xf32>
    %118 = arith.mulf %113, %117 : vector<16x16xf32>
    %119 = vector.extract_strided_slice %83 {offsets = [0, 8], sizes = [16, 8], strides = [1, 1]} : vector<16x32xf32> to vector<16x8xf32>
    %cst_48 = arith.constant dense<0.000000e+00> : vector<16x8xf32>
    %120 = tpu.matmul %118, %119, %cst_48 {dimension_numbers = #tpu.dot_dimension_numbers<[1], [0], [0], [1], [0, 0, 1, 1], [], []>} : vector<16x16xf32>, vector<16x8xf32>, vector<16x8xf32> -> vector<16x8xf32>
    %121 = vector.extract_strided_slice %81 {offsets = [0, 16], sizes = [16, 8], strides = [1, 1]} : vector<16x32xf32> to vector<16x8xf32>
    %122 = vector.extract_strided_slice %84 {offsets = [16, 0], sizes = [8, 16], strides = [1, 1]} : vector<32x16xf32> to vector<8x16xf32>
    %cst_49 = arith.constant dense<0.000000e+00> : vector<16x16xf32>
    %123 = tpu.matmul %121, %122, %cst_49 {dimension_numbers = #tpu.dot_dimension_numbers<[1], [0], [0], [1], [0, 0, 1, 1], [], []>} : vector<16x8xf32>, vector<8x16xf32>, vector<16x16xf32> -> vector<16x16xf32>
    %cst_50 = arith.constant 0.353553385 : f32
    %124 = vector.broadcast %cst_50 : f32 to vector<16x16xf32>
    %125 = arith.mulf %123, %124 : vector<16x16xf32>
    %126 = arith.addf %125, %45 : vector<16x16xf32>
    %cst_51 = arith.constant dense<0xFF800000> : vector<16xf32>
    %127 = vector.multi_reduction <maximumf>, %126, %cst_51 [1] : vector<16x16xf32> to vector<16xf32>
    %128 = vector.shape_cast %127 : vector<16xf32> to vector<16x1xf32>
    %129 = vector.broadcast %128 : vector<16x1xf32> to vector<16x16xf32>
    %130 = arith.subf %126, %129 : vector<16x16xf32>
    %131 = math.exp %130 : vector<16x16xf32>
    %cst_52 = arith.constant dense<0.000000e+00> : vector<16xf32>
    %132 = vector.multi_reduction <add>, %131, %cst_52 [1] : vector<16x16xf32> to vector<16xf32>
    %133 = vector.shape_cast %132 : vector<16xf32> to vector<16x1xf32>
    %134 = tpu.reciprocal %133 {approx = true} : vector<16x1xf32> -> vector<16x1xf32>
    %135 = vector.broadcast %134 : vector<16x1xf32> to vector<16x16xf32>
    %136 = arith.mulf %131, %135 : vector<16x16xf32>
    %137 = vector.extract_strided_slice %83 {offsets = [0, 16], sizes = [16, 8], strides = [1, 1]} : vector<16x32xf32> to vector<16x8xf32>
    %cst_53 = arith.constant dense<0.000000e+00> : vector<16x8xf32>
    %138 = tpu.matmul %136, %137, %cst_53 {dimension_numbers = #tpu.dot_dimension_numbers<[1], [0], [0], [1], [0, 0, 1, 1], [], []>} : vector<16x16xf32>, vector<16x8xf32>, vector<16x8xf32> -> vector<16x8xf32>
    %139 = vector.extract_strided_slice %81 {offsets = [0, 24], sizes = [16, 8], strides = [1, 1]} : vector<16x32xf32> to vector<16x8xf32>
    %140 = vector.extract_strided_slice %84 {offsets = [24, 0], sizes = [8, 16], strides = [1, 1]} : vector<32x16xf32> to vector<8x16xf32>
    %cst_54 = arith.constant dense<0.000000e+00> : vector<16x16xf32>
    %141 = tpu.matmul %139, %140, %cst_54 {dimension_numbers = #tpu.dot_dimension_numbers<[1], [0], [0], [1], [0, 0, 1, 1], [], []>} : vector<16x8xf32>, vector<8x16xf32>, vector<16x16xf32> -> vector<16x16xf32>
    %cst_55 = arith.constant 0.353553385 : f32
    %142 = vector.broadcast %cst_55 : f32 to vector<16x16xf32>
    %143 = arith.mulf %141, %142 : vector<16x16xf32>
    %144 = arith.addf %143, %45 : vector<16x16xf32>
    %cst_56 = arith.constant dense<0xFF800000> : vector<16xf32>
    %145 = vector.multi_reduction <maximumf>, %144, %cst_56 [1] : vector<16x16xf32> to vector<16xf32>
    %146 = vector.shape_cast %145 : vector<16xf32> to vector<16x1xf32>
    %147 = vector.broadcast %146 : vector<16x1xf32> to vector<16x16xf32>
    %148 = arith.subf %144, %147 : vector<16x16xf32>
    %149 = math.exp %148 : vector<16x16xf32>
    %cst_57 = arith.constant dense<0.000000e+00> : vector<16xf32>
    %150 = vector.multi_reduction <add>, %149, %cst_57 [1] : vector<16x16xf32> to vector<16xf32>
    %151 = vector.shape_cast %150 : vector<16xf32> to vector<16x1xf32>
    %152 = tpu.reciprocal %151 {approx = true} : vector<16x1xf32> -> vector<16x1xf32>
    %153 = vector.broadcast %152 : vector<16x1xf32> to vector<16x16xf32>
    %154 = arith.mulf %149, %153 : vector<16x16xf32>
    %155 = vector.extract_strided_slice %83 {offsets = [0, 24], sizes = [16, 8], strides = [1, 1]} : vector<16x32xf32> to vector<16x8xf32>
    %cst_58 = arith.constant dense<0.000000e+00> : vector<16x8xf32>
    %156 = tpu.matmul %154, %155, %cst_58 {dimension_numbers = #tpu.dot_dimension_numbers<[1], [0], [0], [1], [0, 0, 1, 1], [], []>} : vector<16x16xf32>, vector<16x8xf32>, vector<16x8xf32> -> vector<16x8xf32>
    %157 = tpu.concatenate %102, %120, %138, %156 in 1 : vector<16x8xf32>, vector<16x8xf32>, vector<16x8xf32>, vector<16x8xf32> -> vector<16x32xf32>
    %cst_59 = arith.constant dense<0.000000e+00> : vector<16x32xf32>
    %158 = tpu.matmul %157, %47, %cst_59 {dimension_numbers = #tpu.dot_dimension_numbers<[1], [0], [0], [1], [0, 0, 1, 1], [], []>} : vector<16x32xf32>, vector<32x32xf32>, vector<16x32xf32> -> vector<16x32xf32>
    %159 = arith.addf %12, %158 : vector<16x32xf32>
    %160 = vector.broadcast %51 : vector<1x32xf32> to vector<16x32xf32>
    %161 = arith.addf %159, %160 : vector<16x32xf32>
    %cst_60 = arith.constant dense<0.000000e+00> : vector<16xf32>
    %162 = vector.multi_reduction <add>, %161, %cst_60 [1] : vector<16x32xf32> to vector<16xf32>
    %163 = vector.shape_cast %162 : vector<16xf32> to vector<16x1xf32>
    %cst_61 = arith.constant 3.200000e+01 : f32
    %164 = vector.broadcast %cst_61 : f32 to vector<16x1xf32>
    %165 = arith.divf %163, %164 : vector<16x1xf32>
    %166 = vector.broadcast %165 : vector<16x1xf32> to vector<16x32xf32>
    %167 = arith.subf %161, %166 : vector<16x32xf32>
    %168 = arith.mulf %167, %167 : vector<16x32xf32>
    %cst_62 = arith.constant dense<0.000000e+00> : vector<16xf32>
    %169 = vector.multi_reduction <add>, %168, %cst_62 [1] : vector<16x32xf32> to vector<16xf32>
    %170 = vector.shape_cast %169 : vector<16xf32> to vector<16x1xf32>
    %cst_63 = arith.constant 0.0322580636 : f32
    %171 = vector.broadcast %cst_63 : f32 to vector<16x1xf32>
    %172 = arith.mulf %170, %171 : vector<16x1xf32>
    %cst_64 = arith.constant 9.99999997E-7 : f32
    %173 = vector.broadcast %cst_64 : f32 to vector<16x1xf32>
    %174 = arith.addf %172, %173 : vector<16x1xf32>
    %175 = math.rsqrt %174 : vector<16x1xf32>
    %176 = vector.broadcast %54 : vector<1x32xf32> to vector<16x32xf32>
    %177 = arith.mulf %176, %167 : vector<16x32xf32>
    %178 = vector.broadcast %175 : vector<16x1xf32> to vector<16x32xf32>
    %179 = arith.mulf %177, %178 : vector<16x32xf32>
    %180 = vector.broadcast %55 : vector<1x32xf32> to vector<16x32xf32>
    %181 = arith.addf %179, %180 : vector<16x32xf32>
    %cst_65 = arith.constant dense<0.000000e+00> : vector<16x64xf32>
    %182 = tpu.matmul %181, %48, %cst_65 {dimension_numbers = #tpu.dot_dimension_numbers<[1], [0], [0], [1], [0, 0, 1, 1], [], []>} : vector<16x32xf32>, vector<32x64xf32>, vector<16x64xf32> -> vector<16x64xf32>
    %183 = vector.broadcast %56 : vector<1x64xf32> to vector<16x64xf32>
    %184 = arith.addf %182, %183 : vector<16x64xf32>
    %cst_66 = arith.constant 0.000000e+00 : f32
    %185 = vector.broadcast %cst_66 : f32 to vector<16x64xf32>
    %186 = arith.maximumf %184, %185 : vector<16x64xf32>
    %cst_67 = arith.constant dense<0.000000e+00> : vector<16x32xf32>
    %187 = tpu.matmul %186, %49, %cst_67 {dimension_numbers = #tpu.dot_dimension_numbers<[1], [0], [0], [1], [0, 0, 1, 1], [], []>} : vector<16x64xf32>, vector<64x32xf32>, vector<16x32xf32> -> vector<16x32xf32>
    %188 = arith.addf %161, %187 : vector<16x32xf32>
    %189 = vector.broadcast %57 : vector<1x32xf32> to vector<16x32xf32>
    %190 = arith.addf %188, %189 : vector<16x32xf32>
    %c104 = arith.constant 104 : index
    %c0_68 = arith.constant 0 : index
    %191 = vector.load %arg2[%c104, %c0_68] : memref<328x128xf32, #tpu.memory_space<vmem>>, vector<32x96xf32>
    %c104_69 = arith.constant 104 : index
    %c96_70 = arith.constant 96 : index
    %192 = vector.load %arg2[%c104_69, %c96_70] : memref<328x128xf32, #tpu.memory_space<vmem>>, vector<32x32xf32>
    %c136 = arith.constant 136 : index
    %c0_71 = arith.constant 0 : index
    %193 = vector.load %arg2[%c136, %c0_71] : memref<328x128xf32, #tpu.memory_space<vmem>>, vector<32x64xf32>
    %c136_72 = arith.constant 136 : index
    %c64_73 = arith.constant 64 : index
    %194 = vector.load %arg2[%c136_72, %c64_73] : memref<328x128xf32, #tpu.memory_space<vmem>>, vector<64x32xf32>
    %c200 = arith.constant 200 : index
    %c0_74 = arith.constant 0 : index
    %195 = vector.load %arg2[%c200, %c0_74] : memref<328x128xf32, #tpu.memory_space<vmem>>, vector<1x96xf32>
    %c200_75 = arith.constant 200 : index
    %c96_76 = arith.constant 96 : index
    %196 = vector.load %arg2[%c200_75, %c96_76] : memref<328x128xf32, #tpu.memory_space<vmem>>, vector<1x32xf32>
    %c201 = arith.constant 201 : index
    %c0_77 = arith.constant 0 : index
    %197 = vector.load %arg2[%c201, %c0_77] : memref<328x128xf32, #tpu.memory_space<vmem>>, vector<1x32xf32>
    %c201_78 = arith.constant 201 : index
    %c32_79 = arith.constant 32 : index
    %198 = vector.load %arg2[%c201_78, %c32_79] : memref<328x128xf32, #tpu.memory_space<vmem>>, vector<1x32xf32>
    %c201_80 = arith.constant 201 : index
    %c64_81 = arith.constant 64 : index
    %199 = vector.load %arg2[%c201_80, %c64_81] : memref<328x128xf32, #tpu.memory_space<vmem>>, vector<1x32xf32>
    %c201_82 = arith.constant 201 : index
    %c96_83 = arith.constant 96 : index
    %200 = vector.load %arg2[%c201_82, %c96_83] : memref<328x128xf32, #tpu.memory_space<vmem>>, vector<1x32xf32>
    %c202 = arith.constant 202 : index
    %c0_84 = arith.constant 0 : index
    %201 = vector.load %arg2[%c202, %c0_84] : memref<328x128xf32, #tpu.memory_space<vmem>>, vector<1x64xf32>
    %c202_85 = arith.constant 202 : index
    %c64_86 = arith.constant 64 : index
    %202 = vector.load %arg2[%c202_85, %c64_86] : memref<328x128xf32, #tpu.memory_space<vmem>>, vector<1x32xf32>
    %cst_87 = arith.constant dense<0.000000e+00> : vector<16xf32>
    %203 = vector.multi_reduction <add>, %190, %cst_87 [1] : vector<16x32xf32> to vector<16xf32>
    %204 = vector.shape_cast %203 : vector<16xf32> to vector<16x1xf32>
    %cst_88 = arith.constant 3.200000e+01 : f32
    %205 = vector.broadcast %cst_88 : f32 to vector<16x1xf32>
    %206 = arith.divf %204, %205 : vector<16x1xf32>
    %207 = vector.broadcast %206 : vector<16x1xf32> to vector<16x32xf32>
    %208 = arith.subf %190, %207 : vector<16x32xf32>
    %209 = arith.mulf %208, %208 : vector<16x32xf32>
    %cst_89 = arith.constant dense<0.000000e+00> : vector<16xf32>
    %210 = vector.multi_reduction <add>, %209, %cst_89 [1] : vector<16x32xf32> to vector<16xf32>
    %211 = vector.shape_cast %210 : vector<16xf32> to vector<16x1xf32>
    %cst_90 = arith.constant 0.0322580636 : f32
    %212 = vector.broadcast %cst_90 : f32 to vector<16x1xf32>
    %213 = arith.mulf %211, %212 : vector<16x1xf32>
    %cst_91 = arith.constant 9.99999997E-7 : f32
    %214 = vector.broadcast %cst_91 : f32 to vector<16x1xf32>
    %215 = arith.addf %213, %214 : vector<16x1xf32>
    %216 = math.rsqrt %215 : vector<16x1xf32>
    %217 = vector.broadcast %197 : vector<1x32xf32> to vector<16x32xf32>
    %218 = arith.mulf %217, %208 : vector<16x32xf32>
    %219 = vector.broadcast %216 : vector<16x1xf32> to vector<16x32xf32>
    %220 = arith.mulf %218, %219 : vector<16x32xf32>
    %221 = vector.broadcast %198 : vector<1x32xf32> to vector<16x32xf32>
    %222 = arith.addf %220, %221 : vector<16x32xf32>
    %cst_92 = arith.constant dense<0.000000e+00> : vector<16x96xf32>
    %223 = tpu.matmul %222, %191, %cst_92 {dimension_numbers = #tpu.dot_dimension_numbers<[1], [0], [0], [1], [0, 0, 1, 1], [], []>} : vector<16x32xf32>, vector<32x96xf32>, vector<16x96xf32> -> vector<16x96xf32>
    %224 = vector.broadcast %195 : vector<1x96xf32> to vector<16x96xf32>
    %225 = arith.addf %223, %224 : vector<16x96xf32>
    %226 = vector.extract_strided_slice %225 {offsets = [0, 0], sizes = [16, 32], strides = [1, 1]} : vector<16x96xf32> to vector<16x32xf32>
    %227 = vector.extract_strided_slice %225 {offsets = [0, 32], sizes = [16, 32], strides = [1, 1]} : vector<16x96xf32> to vector<16x32xf32>
    %228 = vector.extract_strided_slice %225 {offsets = [0, 64], sizes = [16, 32], strides = [1, 1]} : vector<16x96xf32> to vector<16x32xf32>
    %229 = tpu.transpose %227, [1, 0] : vector<16x32xf32> -> vector<32x16xf32>
    %230 = vector.extract_strided_slice %226 {offsets = [0, 0], sizes = [16, 8], strides = [1, 1]} : vector<16x32xf32> to vector<16x8xf32>
    %231 = vector.extract_strided_slice %229 {offsets = [0, 0], sizes = [8, 16], strides = [1, 1]} : vector<32x16xf32> to vector<8x16xf32>
    %cst_93 = arith.constant dense<0.000000e+00> : vector<16x16xf32>
    %232 = tpu.matmul %230, %231, %cst_93 {dimension_numbers = #tpu.dot_dimension_numbers<[1], [0], [0], [1], [0, 0, 1, 1], [], []>} : vector<16x8xf32>, vector<8x16xf32>, vector<16x16xf32> -> vector<16x16xf32>
    %cst_94 = arith.constant 0.353553385 : f32
    %233 = vector.broadcast %cst_94 : f32 to vector<16x16xf32>
    %234 = arith.mulf %232, %233 : vector<16x16xf32>
    %235 = arith.addf %234, %45 : vector<16x16xf32>
    %cst_95 = arith.constant dense<0xFF800000> : vector<16xf32>
    %236 = vector.multi_reduction <maximumf>, %235, %cst_95 [1] : vector<16x16xf32> to vector<16xf32>
    %237 = vector.shape_cast %236 : vector<16xf32> to vector<16x1xf32>
    %238 = vector.broadcast %237 : vector<16x1xf32> to vector<16x16xf32>
    %239 = arith.subf %235, %238 : vector<16x16xf32>
    %240 = math.exp %239 : vector<16x16xf32>
    %cst_96 = arith.constant dense<0.000000e+00> : vector<16xf32>
    %241 = vector.multi_reduction <add>, %240, %cst_96 [1] : vector<16x16xf32> to vector<16xf32>
    %242 = vector.shape_cast %241 : vector<16xf32> to vector<16x1xf32>
    %243 = tpu.reciprocal %242 {approx = true} : vector<16x1xf32> -> vector<16x1xf32>
    %244 = vector.broadcast %243 : vector<16x1xf32> to vector<16x16xf32>
    %245 = arith.mulf %240, %244 : vector<16x16xf32>
    %246 = vector.extract_strided_slice %228 {offsets = [0, 0], sizes = [16, 8], strides = [1, 1]} : vector<16x32xf32> to vector<16x8xf32>
    %cst_97 = arith.constant dense<0.000000e+00> : vector<16x8xf32>
    %247 = tpu.matmul %245, %246, %cst_97 {dimension_numbers = #tpu.dot_dimension_numbers<[1], [0], [0], [1], [0, 0, 1, 1], [], []>} : vector<16x16xf32>, vector<16x8xf32>, vector<16x8xf32> -> vector<16x8xf32>
    %248 = vector.extract_strided_slice %226 {offsets = [0, 8], sizes = [16, 8], strides = [1, 1]} : vector<16x32xf32> to vector<16x8xf32>
    %249 = vector.extract_strided_slice %229 {offsets = [8, 0], sizes = [8, 16], strides = [1, 1]} : vector<32x16xf32> to vector<8x16xf32>
    %cst_98 = arith.constant dense<0.000000e+00> : vector<16x16xf32>
    %250 = tpu.matmul %248, %249, %cst_98 {dimension_numbers = #tpu.dot_dimension_numbers<[1], [0], [0], [1], [0, 0, 1, 1], [], []>} : vector<16x8xf32>, vector<8x16xf32>, vector<16x16xf32> -> vector<16x16xf32>
    %cst_99 = arith.constant 0.353553385 : f32
    %251 = vector.broadcast %cst_99 : f32 to vector<16x16xf32>
    %252 = arith.mulf %250, %251 : vector<16x16xf32>
    %253 = arith.addf %252, %45 : vector<16x16xf32>
    %cst_100 = arith.constant dense<0xFF800000> : vector<16xf32>
    %254 = vector.multi_reduction <maximumf>, %253, %cst_100 [1] : vector<16x16xf32> to vector<16xf32>
    %255 = vector.shape_cast %254 : vector<16xf32> to vector<16x1xf32>
    %256 = vector.broadcast %255 : vector<16x1xf32> to vector<16x16xf32>
    %257 = arith.subf %253, %256 : vector<16x16xf32>
    %258 = math.exp %257 : vector<16x16xf32>
    %cst_101 = arith.constant dense<0.000000e+00> : vector<16xf32>
    %259 = vector.multi_reduction <add>, %258, %cst_101 [1] : vector<16x16xf32> to vector<16xf32>
    %260 = vector.shape_cast %259 : vector<16xf32> to vector<16x1xf32>
    %261 = tpu.reciprocal %260 {approx = true} : vector<16x1xf32> -> vector<16x1xf32>
    %262 = vector.broadcast %261 : vector<16x1xf32> to vector<16x16xf32>
    %263 = arith.mulf %258, %262 : vector<16x16xf32>
    %264 = vector.extract_strided_slice %228 {offsets = [0, 8], sizes = [16, 8], strides = [1, 1]} : vector<16x32xf32> to vector<16x8xf32>
    %cst_102 = arith.constant dense<0.000000e+00> : vector<16x8xf32>
    %265 = tpu.matmul %263, %264, %cst_102 {dimension_numbers = #tpu.dot_dimension_numbers<[1], [0], [0], [1], [0, 0, 1, 1], [], []>} : vector<16x16xf32>, vector<16x8xf32>, vector<16x8xf32> -> vector<16x8xf32>
    %266 = vector.extract_strided_slice %226 {offsets = [0, 16], sizes = [16, 8], strides = [1, 1]} : vector<16x32xf32> to vector<16x8xf32>
    %267 = vector.extract_strided_slice %229 {offsets = [16, 0], sizes = [8, 16], strides = [1, 1]} : vector<32x16xf32> to vector<8x16xf32>
    %cst_103 = arith.constant dense<0.000000e+00> : vector<16x16xf32>
    %268 = tpu.matmul %266, %267, %cst_103 {dimension_numbers = #tpu.dot_dimension_numbers<[1], [0], [0], [1], [0, 0, 1, 1], [], []>} : vector<16x8xf32>, vector<8x16xf32>, vector<16x16xf32> -> vector<16x16xf32>
    %cst_104 = arith.constant 0.353553385 : f32
    %269 = vector.broadcast %cst_104 : f32 to vector<16x16xf32>
    %270 = arith.mulf %268, %269 : vector<16x16xf32>
    %271 = arith.addf %270, %45 : vector<16x16xf32>
    %cst_105 = arith.constant dense<0xFF800000> : vector<16xf32>
    %272 = vector.multi_reduction <maximumf>, %271, %cst_105 [1] : vector<16x16xf32> to vector<16xf32>
    %273 = vector.shape_cast %272 : vector<16xf32> to vector<16x1xf32>
    %274 = vector.broadcast %273 : vector<16x1xf32> to vector<16x16xf32>
    %275 = arith.subf %271, %274 : vector<16x16xf32>
    %276 = math.exp %275 : vector<16x16xf32>
    %cst_106 = arith.constant dense<0.000000e+00> : vector<16xf32>
    %277 = vector.multi_reduction <add>, %276, %cst_106 [1] : vector<16x16xf32> to vector<16xf32>
    %278 = vector.shape_cast %277 : vector<16xf32> to vector<16x1xf32>
    %279 = tpu.reciprocal %278 {approx = true} : vector<16x1xf32> -> vector<16x1xf32>
    %280 = vector.broadcast %279 : vector<16x1xf32> to vector<16x16xf32>
    %281 = arith.mulf %276, %280 : vector<16x16xf32>
    %282 = vector.extract_strided_slice %228 {offsets = [0, 16], sizes = [16, 8], strides = [1, 1]} : vector<16x32xf32> to vector<16x8xf32>
    %cst_107 = arith.constant dense<0.000000e+00> : vector<16x8xf32>
    %283 = tpu.matmul %281, %282, %cst_107 {dimension_numbers = #tpu.dot_dimension_numbers<[1], [0], [0], [1], [0, 0, 1, 1], [], []>} : vector<16x16xf32>, vector<16x8xf32>, vector<16x8xf32> -> vector<16x8xf32>
    %284 = vector.extract_strided_slice %226 {offsets = [0, 24], sizes = [16, 8], strides = [1, 1]} : vector<16x32xf32> to vector<16x8xf32>
    %285 = vector.extract_strided_slice %229 {offsets = [24, 0], sizes = [8, 16], strides = [1, 1]} : vector<32x16xf32> to vector<8x16xf32>
    %cst_108 = arith.constant dense<0.000000e+00> : vector<16x16xf32>
    %286 = tpu.matmul %284, %285, %cst_108 {dimension_numbers = #tpu.dot_dimension_numbers<[1], [0], [0], [1], [0, 0, 1, 1], [], []>} : vector<16x8xf32>, vector<8x16xf32>, vector<16x16xf32> -> vector<16x16xf32>
    %cst_109 = arith.constant 0.353553385 : f32
    %287 = vector.broadcast %cst_109 : f32 to vector<16x16xf32>
    %288 = arith.mulf %286, %287 : vector<16x16xf32>
    %289 = arith.addf %288, %45 : vector<16x16xf32>
    %cst_110 = arith.constant dense<0xFF800000> : vector<16xf32>
    %290 = vector.multi_reduction <maximumf>, %289, %cst_110 [1] : vector<16x16xf32> to vector<16xf32>
    %291 = vector.shape_cast %290 : vector<16xf32> to vector<16x1xf32>
    %292 = vector.broadcast %291 : vector<16x1xf32> to vector<16x16xf32>
    %293 = arith.subf %289, %292 : vector<16x16xf32>
    %294 = math.exp %293 : vector<16x16xf32>
    %cst_111 = arith.constant dense<0.000000e+00> : vector<16xf32>
    %295 = vector.multi_reduction <add>, %294, %cst_111 [1] : vector<16x16xf32> to vector<16xf32>
    %296 = vector.shape_cast %295 : vector<16xf32> to vector<16x1xf32>
    %297 = tpu.reciprocal %296 {approx = true} : vector<16x1xf32> -> vector<16x1xf32>
    %298 = vector.broadcast %297 : vector<16x1xf32> to vector<16x16xf32>
    %299 = arith.mulf %294, %298 : vector<16x16xf32>
    %300 = vector.extract_strided_slice %228 {offsets = [0, 24], sizes = [16, 8], strides = [1, 1]} : vector<16x32xf32> to vector<16x8xf32>
    %cst_112 = arith.constant dense<0.000000e+00> : vector<16x8xf32>
    %301 = tpu.matmul %299, %300, %cst_112 {dimension_numbers = #tpu.dot_dimension_numbers<[1], [0], [0], [1], [0, 0, 1, 1], [], []>} : vector<16x16xf32>, vector<16x8xf32>, vector<16x8xf32> -> vector<16x8xf32>
    %302 = tpu.concatenate %247, %265, %283, %301 in 1 : vector<16x8xf32>, vector<16x8xf32>, vector<16x8xf32>, vector<16x8xf32> -> vector<16x32xf32>
    %cst_113 = arith.constant dense<0.000000e+00> : vector<16x32xf32>
    %303 = tpu.matmul %302, %192, %cst_113 {dimension_numbers = #tpu.dot_dimension_numbers<[1], [0], [0], [1], [0, 0, 1, 1], [], []>} : vector<16x32xf32>, vector<32x32xf32>, vector<16x32xf32> -> vector<16x32xf32>
    %304 = arith.addf %190, %303 : vector<16x32xf32>
    %305 = vector.broadcast %196 : vector<1x32xf32> to vector<16x32xf32>
    %306 = arith.addf %304, %305 : vector<16x32xf32>
    %cst_114 = arith.constant dense<0.000000e+00> : vector<16xf32>
    %307 = vector.multi_reduction <add>, %306, %cst_114 [1] : vector<16x32xf32> to vector<16xf32>
    %308 = vector.shape_cast %307 : vector<16xf32> to vector<16x1xf32>
    %cst_115 = arith.constant 3.200000e+01 : f32
    %309 = vector.broadcast %cst_115 : f32 to vector<16x1xf32>
    %310 = arith.divf %308, %309 : vector<16x1xf32>
    %311 = vector.broadcast %310 : vector<16x1xf32> to vector<16x32xf32>
    %312 = arith.subf %306, %311 : vector<16x32xf32>
    %313 = arith.mulf %312, %312 : vector<16x32xf32>
    %cst_116 = arith.constant dense<0.000000e+00> : vector<16xf32>
    %314 = vector.multi_reduction <add>, %313, %cst_116 [1] : vector<16x32xf32> to vector<16xf32>
    %315 = vector.shape_cast %314 : vector<16xf32> to vector<16x1xf32>
    %cst_117 = arith.constant 0.0322580636 : f32
    %316 = vector.broadcast %cst_117 : f32 to vector<16x1xf32>
    %317 = arith.mulf %315, %316 : vector<16x1xf32>
    %cst_118 = arith.constant 9.99999997E-7 : f32
    %318 = vector.broadcast %cst_118 : f32 to vector<16x1xf32>
    %319 = arith.addf %317, %318 : vector<16x1xf32>
    %320 = math.rsqrt %319 : vector<16x1xf32>
    %321 = vector.broadcast %199 : vector<1x32xf32> to vector<16x32xf32>
    %322 = arith.mulf %321, %312 : vector<16x32xf32>
    %323 = vector.broadcast %320 : vector<16x1xf32> to vector<16x32xf32>
    %324 = arith.mulf %322, %323 : vector<16x32xf32>
    %325 = vector.broadcast %200 : vector<1x32xf32> to vector<16x32xf32>
    %326 = arith.addf %324, %325 : vector<16x32xf32>
    %cst_119 = arith.constant dense<0.000000e+00> : vector<16x64xf32>
    %327 = tpu.matmul %326, %193, %cst_119 {dimension_numbers = #tpu.dot_dimension_numbers<[1], [0], [0], [1], [0, 0, 1, 1], [], []>} : vector<16x32xf32>, vector<32x64xf32>, vector<16x64xf32> -> vector<16x64xf32>
    %328 = vector.broadcast %201 : vector<1x64xf32> to vector<16x64xf32>
    %329 = arith.addf %327, %328 : vector<16x64xf32>
    %cst_120 = arith.constant 0.000000e+00 : f32
    %330 = vector.broadcast %cst_120 : f32 to vector<16x64xf32>
    %331 = arith.maximumf %329, %330 : vector<16x64xf32>
    %cst_121 = arith.constant dense<0.000000e+00> : vector<16x32xf32>
    %332 = tpu.matmul %331, %194, %cst_121 {dimension_numbers = #tpu.dot_dimension_numbers<[1], [0], [0], [1], [0, 0, 1, 1], [], []>} : vector<16x64xf32>, vector<64x32xf32>, vector<16x32xf32> -> vector<16x32xf32>
    %333 = arith.addf %306, %332 : vector<16x32xf32>
    %334 = vector.broadcast %202 : vector<1x32xf32> to vector<16x32xf32>
    %335 = arith.addf %333, %334 : vector<16x32xf32>
    %c241 = arith.constant 241 : index
    %c0_122 = arith.constant 0 : index
    %336 = vector.load %arg2[%c241, %c0_122] : memref<328x128xf32, #tpu.memory_space<vmem>>, vector<1x32xf32>
    %c241_123 = arith.constant 241 : index
    %c32_124 = arith.constant 32 : index
    %337 = vector.load %arg2[%c241_123, %c32_124] : memref<328x128xf32, #tpu.memory_space<vmem>>, vector<1x32xf32>
    %c208 = arith.constant 208 : index
    %c0_125 = arith.constant 0 : index
    %338 = vector.load %arg2[%c208, %c0_125] : memref<328x128xf32, #tpu.memory_space<vmem>>, vector<32x128xf32>
    %c240 = arith.constant 240 : index
    %c0_126 = arith.constant 0 : index
    %339 = vector.load %arg2[%c240, %c0_126] : memref<328x128xf32, #tpu.memory_space<vmem>>, vector<1x128xf32>
    %cst_127 = arith.constant dense<0.000000e+00> : vector<16xf32>
    %340 = vector.multi_reduction <add>, %335, %cst_127 [1] : vector<16x32xf32> to vector<16xf32>
    %341 = vector.shape_cast %340 : vector<16xf32> to vector<16x1xf32>
    %cst_128 = arith.constant 3.200000e+01 : f32
    %342 = vector.broadcast %cst_128 : f32 to vector<16x1xf32>
    %343 = arith.divf %341, %342 : vector<16x1xf32>
    %344 = vector.broadcast %343 : vector<16x1xf32> to vector<16x32xf32>
    %345 = arith.subf %335, %344 : vector<16x32xf32>
    %346 = arith.mulf %345, %345 : vector<16x32xf32>
    %cst_129 = arith.constant dense<0.000000e+00> : vector<16xf32>
    %347 = vector.multi_reduction <add>, %346, %cst_129 [1] : vector<16x32xf32> to vector<16xf32>
    %348 = vector.shape_cast %347 : vector<16xf32> to vector<16x1xf32>
    %cst_130 = arith.constant 0.0322580636 : f32
    %349 = vector.broadcast %cst_130 : f32 to vector<16x1xf32>
    %350 = arith.mulf %348, %349 : vector<16x1xf32>
    %cst_131 = arith.constant 9.99999997E-7 : f32
    %351 = vector.broadcast %cst_131 : f32 to vector<16x1xf32>
    %352 = arith.addf %350, %351 : vector<16x1xf32>
    %353 = math.rsqrt %352 : vector<16x1xf32>
    %354 = vector.broadcast %336 : vector<1x32xf32> to vector<16x32xf32>
    %355 = arith.mulf %354, %345 : vector<16x32xf32>
    %356 = vector.broadcast %353 : vector<16x1xf32> to vector<16x32xf32>
    %357 = arith.mulf %355, %356 : vector<16x32xf32>
    %358 = vector.broadcast %337 : vector<1x32xf32> to vector<16x32xf32>
    %359 = arith.addf %357, %358 : vector<16x32xf32>
    %cst_132 = arith.constant dense<0.000000e+00> : vector<16x128xf32>
    %360 = tpu.matmul %359, %338, %cst_132 {dimension_numbers = #tpu.dot_dimension_numbers<[1], [0], [0], [1], [0, 0, 1, 1], [], []>} : vector<16x32xf32>, vector<32x128xf32>, vector<16x128xf32> -> vector<16x128xf32>
    %361 = vector.broadcast %339 : vector<1x128xf32> to vector<16x128xf32>
    %362 = arith.addf %360, %361 : vector<16x128xf32>
    %cst_133 = arith.constant dense<0xFF800000> : vector<16xf32>
    %363 = vector.multi_reduction <maximumf>, %362, %cst_133 [1] : vector<16x128xf32> to vector<16xf32>
    %364 = vector.shape_cast %363 : vector<16xf32> to vector<16x1xf32>
    %365 = vector.broadcast %364 : vector<16x1xf32> to vector<16x128xf32>
    %366 = arith.subf %362, %365 : vector<16x128xf32>
    %367 = math.exp %366 : vector<16x128xf32>
    %cst_134 = arith.constant dense<0.000000e+00> : vector<16xf32>
    %368 = vector.multi_reduction <add>, %367, %cst_134 [1] : vector<16x128xf32> to vector<16xf32>
    %369 = vector.shape_cast %368 : vector<16xf32> to vector<16x1xf32>
    %370 = math.log %369 : vector<16x1xf32>
    %371 = vector.broadcast %370 : vector<16x1xf32> to vector<16x128xf32>
    %372 = arith.subf %366, %371 : vector<16x128xf32>
    %c0_135 = arith.constant 0 : index
    %c0_136 = arith.constant 0 : index
    %373 = vector.load %arg3[%c0_135, %c0_136] : memref<16x128xf32, #tpu.memory_space<vmem>>, vector<16x128xf32>
    tpu.vector_store %arg3[%c0_135, %c0_136], %372 {strides = array<i32>} : memref<16x128xf32, #tpu.memory_space<vmem>>, vector<16x128xf32>,
    return
  }
}

</mosaic_0001>

<llo_original>
// kernel: encoder_decoder_forward.1
$region0: #{encoder_decoder_forward.1}
  #allocation0 [shape = 'u32[]', space=smem, size = 0x4, offset = 0x4, fixed_abs, tag = 'smem constant byte address 0x4 - core index']
  #allocation1 [shape = 'u32[144,128]{1,0:T(1,128)}', space=vmem, size = 0x12000, scoped, tag = 'internal scratch']
  %s0 = inlined_call_operand.vmem [shape: s32[16,1], index: 0, kind: input, shape index: {}]
  %s1 = inlined_call_operand.vmem [shape: f32[1,16], index: 1, kind: input, shape index: {}]
  %s2 = inlined_call_operand.hbm [shape: f32[328,128], index: 2, kind: input, shape index: {}]
  %s3 = inlined_call_operand.vmem [shape: f32[16,128], index: 3, kind: output, shape index: {}]
  %s4 = sld [smem:[#allocation0]]
  $region26: #{encoder_decoder_forward.1} parent=0
    _
  %s6 = ssub.s32 1, %s4
  %s7 = scalar_select 0, %s6, %s4
  $region1: #{encoder_decoder_forward.1} parent=0
    #allocation2 [shape = 'u8[167936]{0}', space=vmem, size = 0x29000, scoped, tag = 'input window, operand 2, single buffered']
    #allocation3 [shape = 's32[1]{0}', space=sflag, size = 0x4, scoped, tag = 'scoped memory for encoder_decoder_forward.1']
    %8 = vsyncpa [#allocation3], 0
    // Predicated region
    $region2: #{encoder_decoder_forward.1} parent=1 // pred_check
      _
    $region3: #{encoder_decoder_forward.1} parent=1 // pred_check_branch
      %10 = sbr.rel (0) target = $region5
    $region4: #{encoder_decoder_forward.1} parent=1 // pred_region
      _
    $region5: #{encoder_decoder_forward.1} parent=1 // pred_fallthru
      _
    // Predicated region
    $region6: #{encoder_decoder_forward.1} parent=1 // pred_check
      _
    $region7: #{encoder_decoder_forward.1} parent=1 // pred_check_branch
      %12 = sbr.rel (0) target = $region9
    $region8: #{encoder_decoder_forward.1} parent=1 // pred_region
      _
    $region9: #{encoder_decoder_forward.1} parent=1 // pred_fallthru
      _
    // Predicated region
    $region10: #{encoder_decoder_forward.1} parent=1 // pred_check
      _
    $region11: #{encoder_decoder_forward.1} parent=1 // pred_check_branch
      %14 = sbr.rel (0) target = $region13
    $region12: #{encoder_decoder_forward.1} parent=1 // pred_region
      %s16 = ssub.s32 5248, 5248
      %17 = vsyncadd [#allocation3], %s16
      %s18 = sshll.u32 [#allocation2], 4
      %s19 = int_to_ptr.vmem [resolvable:$true] %s18
      %24 = dma.hbm_to_vmem [thread:$0]  %s2, 5248, %s19, [#allocation3], 128, 128, 8
    $region13: #{encoder_decoder_forward.1} parent=1 // pred_fallthru
      _
    // Predicated region
    $region14: #{encoder_decoder_forward.1} parent=1 // pred_check
      _
    $region15: #{encoder_decoder_forward.1} parent=1 // pred_check_branch
      %26 = sbr.rel (0) target = $region17
    $region16: #{encoder_decoder_forward.1} parent=1 // pred_region
      %27 = dma.done [#allocation3], 5248
    $region17: #{encoder_decoder_forward.1} parent=1 // pred_fallthru
      _
    %v28 = vld [vmem:[%s0] sm:$0xff]
    %v29 = vld [vmem:[%s0 + $0x8] sm:$0xff]
    %v30 = vlaneseq
    %v31 = vand.u32 %v30, 127
    %32 = vset.pattern.permute.xlu0 0
    %33 = vperm.xlu0 %32, %v28
    %v34 = vpop.permute.xlu0 %33
    %35 = vset.pattern.permute.xlu0 0
    %36 = vperm.xlu0 %35, %v29
    %v37 = vpop.permute.xlu0 %36
    %vm38 = vcmp.eq.s32.totalorder %v31, %v34
    %vm39 = vcmp.eq.s32.totalorder %v31, %v37
    %v40 = vsel %vm38, 1, 0
    %v41 = vsel %vm39, 1, 0
    %v42 = vcvt.s32.f32 %v40
    %v43 = vcvt.s32.f32 %v41
    %v44 = vld [vmem:[#allocation2 + $0xf8] sm:$0xff]
    %v45 = vld [vmem:[#allocation2 + $0x100] sm:$0xff]
    %vm46 = vcmask 130048
    %v48 = vsel %vm46, %v42, 0
    %v51 = vsel %vm46, %v43, 0
    %53 = vmatprep.subr.mxu0 0.0
    %54 = vmatpush1.msra.mxu0 0.0
    %55 = vmatprep.subr.mxu0 0.0
    %56 = vmatpush1.msra.mxu0 0.0
    %57 = vmatprep.subr.mxu0 0.0
    %58 = vmatpush1.msra.mxu0 0.0
    %59 = vmatprep.subr.mxu0 0.0
    %60 = vmatpush1.msra.mxu0 0.0
    %61 = vmatprep.subr.mxu0 0.0
    %62 = vmatpush1.msra.mxu0 0.0
    %63 = vmatprep.subr.mxu0 0.0
    %64 = vmatpush1.msra.mxu0 0.0
    %65 = vmatprep.subr.mxu0 0.0
    %66 = vmatpush1.msra.mxu0 0.0
    %67 = vmatprep.subr.mxu0 0.0
    %68 = vmatpush1.msra.mxu0 0.0
    %69 = vmatprep.subr.mxu0 0.0
    %70 = vmatpush1.msra.mxu0 0.0
    %71 = vmatprep.subr.mxu0 0.0
    %72 = vmatpush1.msra.mxu0 0.0
    %73 = vmatprep.subr.mxu0 0.0
    %74 = vmatpush1.msra.mxu0 0.0
    %75 = vmatprep.subr.mxu0 0.0
    %76 = vmatpush1.msra.mxu0 0.0
    %77 = vmatprep.subr.mxu0 0.0
    %78 = vmatpush1.msra.mxu0 0.0
    %79 = vmatprep.subr.mxu0 0.0
    %80 = vmatpush1.msra.mxu0 0.0
    %81 = vmatprep.subr.mxu0 0.0
    %82 = vmatpush1.msra.mxu0 %v45
    %83 = vmatprep.subr.mxu0 0.0
    %84 = vmatpush1.msra.mxu0 %v44
    %85 = vmatprep.subr.mxu0 0.0
    %86 = vmatpush2.msra.mxu0 0.0
    %87 = vmatprep.subr.mxu0 0.0
    %88 = vmatpush2.msra.mxu0 0.0
    %89 = vmatprep.subr.mxu0 0.0
    %90 = vmatpush2.msra.mxu0 0.0
    %91 = vmatprep.subr.mxu0 0.0
    %92 = vmatpush2.msra.mxu0 0.0
    %93 = vmatprep.subr.mxu0 0.0
    %94 = vmatpush2.msra.mxu0 0.0
    %95 = vmatprep.subr.mxu0 0.0
    %96 = vmatpush2.msra.mxu0 0.0
    %97 = vmatprep.subr.mxu0 0.0
    %98 = vmatpush2.msra.mxu0 0.0
    %99 = vmatprep.subr.mxu0 0.0
    %100 = vmatpush2.msra.mxu0 0.0
    %101 = vmatprep.subr.mxu0 0.0
    %102 = vmatpush2.msra.mxu0 0.0
    %103 = vmatprep.subr.mxu0 0.0
    %104 = vmatpush2.msra.mxu0 0.0
    %105 = vmatprep.subr.mxu0 0.0
    %106 = vmatpush2.msra.mxu0 0.0
    %107 = vmatprep.subr.mxu0 0.0
    %108 = vmatpush2.msra.mxu0 0.0
    %109 = vmatprep.subr.mxu0 0.0
    %110 = vmatpush2.msra.mxu0 0.0
    %111 = vmatprep.subr.mxu0 0.0
    %112 = vmatpush2.msra.mxu0 0.0
    %113 = vmatprep.subr.mxu0 0.0
    %114 = vmatpush2.msra.mxu0 0.0
    %115 = vmatprep.subr.mxu0 0.0
    %116 = vmatpush2.msra.mxu0 0.0
    %117 = vmatprep.mubr.f32.mxu0 0.0
    %118 = vmatmul.mubr.f32.gmra.mxu0 %v48
    %v119 = vpop.f32.mrf.mxu0
    %v120 = vadd.f32 0.0, %v119
    %v121 = vpop.f32.mrf.mxu0
    %122 = vmatprep.mubr.f32.mxu0 0.0
    %123 = vmatmul.mubr.f32.gmra.mxu0 %v51
    %v124 = vpop.f32.mrf.mxu0
    %v125 = vadd.f32 0.0, %v124
    %v126 = vpop.f32.mrf.mxu0
    %127 = vdwg.mxu0
    %v128 = vmul.f32 %v120, 5.656854
    %v129 = vmul.f32 %v125, 5.656854
    %v130 = vld [vmem:[#allocation2 + $0x108] sm:$0xff]
    %v131 = vadd.f32 %v128, %v130
    %v132 = vadd.f32 %v129, %v130
    %v133 = vlaneseq
    %v134 = vshrl.u32 %v133, 7
    %v135 = vadd.s32 %v134, 8
    %vm136 = vcmp.ge.s32.totalorder %v134, 0
    %vm137 = vcmp.ge.s32.totalorder %v135, 0
    %vm138 = vcmp.lt.s32.totalorder %v134, 8
    %vm139 = vcmp.lt.s32.totalorder %v135, 8
    %vm140 = vmand %vm136, %vm138
    %vm141 = vmand %vm137, %vm139
    %vm142 = vcmp.ge.s32.totalorder %v31, 0
    %vm143 = vcmp.lt.s32.totalorder %v31, 8
    %vm144 = vmand %vm142, %vm143
    %vm145 = vmand %vm140, %vm144
    %vm146 = vmand %vm141, %vm144
    %vm147 = vcmp.ge.s32.totalorder %v134, 8
    %vm148 = vcmp.ge.s32.totalorder %v135, 8
    %vm149 = vcmp.lt.s32.totalorder %v134, 16
    %vm150 = vcmp.lt.s32.totalorder %v135, 16
    %vm151 = vmand %vm147, %vm149
    %vm152 = vmand %vm148, %vm150
    %vm153 = vcmp.ge.s32.totalorder %v31, 8
    %vm154 = vcmp.lt.s32.totalorder %v31, 16
    %vm155 = vmand %vm153, %vm154
    %vm156 = vmand %vm151, %vm155
    %vm157 = vmand %vm152, %vm155
    %vm158 = vmor %vm145, %vm156
    %vm159 = vmor %vm146, %vm157
    %v160 = vld [vmem:[%s1] sm:$0x1]
    %vm161 = vcmp.gt.f32.partialorder %v160, 0.0
    %v162 = vsel %vm161, 1, 0
    %v163 = vlaneseq
    %v164 = vshrl.u32 %v163, 7
    %v165 = vsub.s32 0, %v164
    %v166 = vrot.slane %v162, %v165
    %vm167 = vcmp.eq.s32.totalorder %v166, 1
    %vm168 = vmand %vm158, %vm167
    %vm169 = vmand %vm159, %vm167
    %v170 = vsel %vm168, 0.0, -1e+09
    %v171 = vsel %vm169, 0.0, -1e+09
    %v172 = vld [vmem:[#allocation2] sm:$0xff]
    %v173 = vld [vmem:[#allocation2 + $0x8] sm:$0xff]
    %v174 = vld [vmem:[#allocation2 + $0x10] sm:$0xff]
    %v175 = vld [vmem:[#allocation2 + $0x18] sm:$0xff]
    %v176 = vld [vmem:[#allocation2 + $0x20] sm:$0xff]
    %v177 = vld [vmem:[#allocation2 + $0x28] sm:$0xff]
    %v178 = vld [vmem:[#allocation2 + $0x30] sm:$0xff]
    %v179 = vld [vmem:[#allocation2 + $0x38] sm:$0xff]
    %v180 = vld [vmem:[#allocation2 + $0x40] sm:$0xff]
    %v181 = vld [vmem:[#allocation2 + $0x48] sm:$0xff]
    %v182 = vld [vmem:[#allocation2 + $0x50] sm:$0xff]
    %v183 = vld [vmem:[#allocation2 + $0x58] sm:$0xff]
    %v184 = vld [vmem:[#allocation2 + $0x60] sm:$0x1]
    %v185 = vld [vmem:[#allocation2 + $0x61] sm:$0x1]
    %v186 = vld [vmem:[#allocation2 + $0x62] sm:$0x1]
    %vm187 = vcmask 261120
    %v188 = vsel %vm187, %v131, 0.0
    %189 = vadd.xlane.f32.xlu0 %v188
    %v190 = vpop.xlane.xlu0 %189
    %v191 = vsel %vm187, %v132, 0.0
    %192 = vadd.xlane.f32.xlu0 %v191
    %v193 = vpop.xlane.xlu0 %192
    %v194 = vrcp.pop 32.0
    %v195 = vmul.f32 %v190, %v194
    %v196 = vmul.f32 %v193, %v194
    %v197 = vsub.f32 %v131, %v195
    %v198 = vsub.f32 %v132, %v196
    %v199 = vmul.f32 %v197, %v197
    %v200 = vmul.f32 %v198, %v198
    %v201 = vsel %vm187, %v199, 0.0
    %202 = vadd.xlane.f32.xlu0 %v201
    %v203 = vpop.xlane.xlu0 %202
    %v204 = vsel %vm187, %v200, 0.0
    %205 = vadd.xlane.f32.xlu0 %v204
    %v206 = vpop.xlane.xlu0 %205
    %v207 = vmul.f32 %v203, 0.032258064
    %v208 = vmul.f32 %v206, 0.032258064
    %v209 = vadd.f32 %v207, 1e-06
    %v210 = vadd.f32 %v208, 1e-06
    %v211 = vrsqrt.pop %v209
    %v212 = vrsqrt.pop %v210
    %v213 = vlaneseq
    %v214 = vshrl.u32 %v213, 7
    %v215 = vsub.s32 0, %v214
    %v216 = vrot.slane %v185, %v215
    %v217 = vmul.f32 %v216, %v197
    %v218 = vmul.f32 %v216, %v198
    %v219 = vmul.f32 %v217, %v211
    %v220 = vmul.f32 %v218, %v212
    %222 = vrot.lane.b32.xlu0 %v216, 96
    %v223 = vpop.permute.xlu0 %222
    %v225 = vadd.f32 %v219, %v223
    %v226 = vadd.f32 %v220, %v223
    %v227 = vlaneseq
    %v228 = vshrl.u32 %v227, 7
    %v229 = vsub.s32 0, %v228
    %v230 = vrot.slane %v184, %v229
    %v232 = vsel %vm187, %v225, 0
    %v235 = vsel %vm187, %v226, 0
    %237 = vmatprep.subr.mxu0 0.0
    %238 = vmatpush1.msra.mxu0 0.0
    %239 = vmatprep.subr.mxu0 0.0
    %240 = vmatpush1.msra.mxu0 0.0
    %241 = vmatprep.subr.mxu0 0.0
    %242 = vmatpush1.msra.mxu0 0.0
    %243 = vmatprep.subr.mxu0 0.0
    %244 = vmatpush1.msra.mxu0 0.0
    %245 = vmatprep.subr.mxu0 0.0
    %246 = vmatpush1.msra.mxu0 0.0
    %247 = vmatprep.subr.mxu0 0.0
    %248 = vmatpush1.msra.mxu0 0.0
    %249 = vmatprep.subr.mxu0 0.0
    %250 = vmatpush1.msra.mxu0 0.0
    %251 = vmatprep.subr.mxu0 0.0
    %252 = vmatpush1.msra.mxu0 0.0
    %253 = vmatprep.subr.mxu0 0.0
    %254 = vmatpush1.msra.mxu0 0.0
    %255 = vmatprep.subr.mxu0 0.0
    %256 = vmatpush1.msra.mxu0 0.0
    %257 = vmatprep.subr.mxu0 0.0
    %258 = vmatpush1.msra.mxu0 0.0
    %259 = vmatprep.subr.mxu0 0.0
    %260 = vmatpush1.msra.mxu0 0.0
    %261 = vmatprep.subr.mxu0 0.0
    %262 = vmatpush1.msra.mxu0 %v175
    %263 = vmatprep.subr.mxu0 0.0
    %264 = vmatpush1.msra.mxu0 %v174
    %265 = vmatprep.subr.mxu0 0.0
    %266 = vmatpush1.msra.mxu0 %v173
    %267 = vmatprep.subr.mxu0 0.0
    %268 = vmatpush1.msra.mxu0 %v172
    %269 = vmatprep.subr.mxu0 0.0
    %270 = vmatpush2.msra.mxu0 0.0
    %271 = vmatprep.subr.mxu0 0.0
    %272 = vmatpush2.msra.mxu0 0.0
    %273 = vmatprep.subr.mxu0 0.0
    %274 = vmatpush2.msra.mxu0 0.0
    %275 = vmatprep.subr.mxu0 0.0
    %276 = vmatpush2.msra.mxu0 0.0
    %277 = vmatprep.subr.mxu0 0.0
    %278 = vmatpush2.msra.mxu0 0.0
    %279 = vmatprep.subr.mxu0 0.0
    %280 = vmatpush2.msra.mxu0 0.0
    %281 = vmatprep.subr.mxu0 0.0
    %282 = vmatpush2.msra.mxu0 0.0
    %283 = vmatprep.subr.mxu0 0.0
    %284 = vmatpush2.msra.mxu0 0.0
    %285 = vmatprep.subr.mxu0 0.0
    %286 = vmatpush2.msra.mxu0 0.0
    %287 = vmatprep.subr.mxu0 0.0
    %288 = vmatpush2.msra.mxu0 0.0
    %289 = vmatprep.subr.mxu0 0.0
    %290 = vmatpush2.msra.mxu0 0.0
    %291 = vmatprep.subr.mxu0 0.0
    %292 = vmatpush2.msra.mxu0 0.0
    %293 = vmatprep.subr.mxu0 0.0
    %294 = vmatpush2.msra.mxu0 0.0
    %295 = vmatprep.subr.mxu0 0.0
    %296 = vmatpush2.msra.mxu0 0.0
    %297 = vmatprep.subr.mxu0 0.0
    %298 = vmatpush2.msra.mxu0 0.0
    %299 = vmatprep.subr.mxu0 0.0
    %300 = vmatpush2.msra.mxu0 0.0
    %301 = vmatprep.mubr.f32.mxu0 0.0
    %302 = vmatmul.mubr.f32.gmra.mxu0 %v232
    %v303 = vpop.f32.mrf.mxu0
    %v304 = vadd.f32 %v230, %v303
    %v305 = vpop.f32.mrf.mxu0
    %306 = vmatprep.mubr.f32.mxu0 0.0
    %307 = vmatmul.mubr.f32.gmra.mxu0 %v235
    %v308 = vpop.f32.mrf.mxu0
    %v309 = vadd.f32 %v230, %v308
    %v310 = vpop.f32.mrf.mxu0
    %311 = vdwg.mxu0
    %314 = vrot.lane.b32.xlu0 %v304, 96
    %v315 = vpop.permute.xlu0 %314
    %316 = vrot.lane.b32.xlu0 %v309, 96
    %v317 = vpop.permute.xlu0 %316
    %vm318 = vcmask 64512
    %v319 = vsel %vm318, %v304, 0
    %v321 = vsel %vm318, %v309, 0
    %v323 = vsel %vm318, %v315, 0
    %v325 = vsel %vm318, %v317, 0
    %327 = vmatprep.subr.mxu0 0.0
    %328 = vmatpush1.xpose.msra.mxu0 0.0
    %329 = vmatprep.subr.mxu0 0.0
    %330 = vmatpush1.xpose.msra.mxu0 0.0
    %331 = vmatprep.subr.mxu0 0.0
    %332 = vmatpush1.xpose.msra.mxu0 0.0
    %333 = vmatprep.subr.mxu0 0.0
    %334 = vmatpush1.xpose.msra.mxu0 0.0
    %335 = vmatprep.subr.mxu0 0.0
    %336 = vmatpush1.xpose.msra.mxu0 0.0
    %337 = vmatprep.subr.mxu0 0.0
    %338 = vmatpush1.xpose.msra.mxu0 0.0
    %339 = vmatprep.subr.mxu0 0.0
    %340 = vmatpush1.xpose.msra.mxu0 0.0
    %341 = vmatprep.subr.mxu0 0.0
    %342 = vmatpush1.xpose.msra.mxu0 0.0
    %343 = vmatprep.subr.mxu0 0.0
    %344 = vmatpush1.xpose.msra.mxu0 0.0
    %345 = vmatprep.subr.mxu0 0.0
    %346 = vmatpush1.xpose.msra.mxu0 0.0
    %347 = vmatprep.subr.mxu0 0.0
    %348 = vmatpush1.xpose.msra.mxu0 0.0
    %349 = vmatprep.subr.mxu0 0.0
    %350 = vmatpush1.xpose.msra.mxu0 0.0
    %351 = vmatprep.subr.mxu0 0.0
    %352 = vmatpush1.xpose.msra.mxu0 0.0
    %353 = vmatprep.subr.mxu0 0.0
    %354 = vmatpush1.xpose.msra.mxu0 0.0
    %355 = vmatprep.subr.mxu0 0.0
    %356 = vmatpush1.xpose.msra.mxu0 %v325
    %357 = vmatprep.subr.mxu0 0.0
    %358 = vmatpush1.xpose.msra.mxu0 %v323
    %359 = vmatprep.subr.mxu0 0.0
    %360 = vmatpush2.xpose.msra.mxu0 0.0
    %361 = vmatprep.subr.mxu0 0.0
    %362 = vmatpush2.xpose.msra.mxu0 0.0
    %363 = vmatprep.subr.mxu0 0.0
    %364 = vmatpush2.xpose.msra.mxu0 0.0
    %365 = vmatprep.subr.mxu0 0.0
    %366 = vmatpush2.xpose.msra.mxu0 0.0
    %367 = vmatprep.subr.mxu0 0.0
    %368 = vmatpush2.xpose.msra.mxu0 0.0
    %369 = vmatprep.subr.mxu0 0.0
    %370 = vmatpush2.xpose.msra.mxu0 0.0
    %371 = vmatprep.subr.mxu0 0.0
    %372 = vmatpush2.xpose.msra.mxu0 0.0
    %373 = vmatprep.subr.mxu0 0.0
    %374 = vmatpush2.xpose.msra.mxu0 0.0
    %375 = vmatprep.subr.mxu0 0.0
    %376 = vmatpush2.xpose.msra.mxu0 0.0
    %377 = vmatprep.subr.mxu0 0.0
    %378 = vmatpush2.xpose.msra.mxu0 0.0
    %379 = vmatprep.subr.mxu0 0.0
    %380 = vmatpush2.xpose.msra.mxu0 0.0
    %381 = vmatprep.subr.mxu0 0.0
    %382 = vmatpush2.xpose.msra.mxu0 0.0
    %383 = vmatprep.subr.mxu0 0.0
    %384 = vmatpush2.xpose.msra.mxu0 0.0
    %385 = vmatprep.subr.mxu0 0.0
    %386 = vmatpush2.xpose.msra.mxu0 0.0
    %387 = vmatprep.subr.mxu0 0.0
    %388 = vmatpush2.xpose.msra.mxu0 0.0
    %389 = vmatprep.subr.mxu0 0.0
    %390 = vmatpush2.xpose.msra.mxu0 0.0
    %391 = vmatprep.mubr.f32.mxu0 0.0
    %392 = vmatmul.mubr.f32.gmra.mxu0 %v319
    %v393 = vpop.f32.mrf.mxu0
    %v394 = vadd.f32 0.0, %v393
    %v395 = vpop.f32.mrf.mxu0
    %396 = vmatprep.mubr.f32.mxu0 0.0
    %397 = vmatmul.mubr.f32.gmra.mxu0 %v321
    %v398 = vpop.f32.mrf.mxu0
    %v399 = vadd.f32 0.0, %v398
    %v400 = vpop.f32.mrf.mxu0
    %401 = vdwg.mxu0
    %v402 = vmul.f32 %v394, 0.35355338
    %v403 = vmul.f32 %v399, 0.35355338
    %v404 = vadd.f32 %v402, %v170
    %v405 = vadd.f32 %v403, %v171
    %v406 = vsel %vm46, %v404, -inf
    %407 = vmax.xlane.f32.xlu0 %v406
    %v408 = vpop.xlane.xlu0 %407
    %v409 = vsel %vm46, %v405, -inf
    %410 = vmax.xlane.f32.xlu0 %v409
    %v411 = vpop.xlane.xlu0 %410
    %v412 = vsub.f32 %v404, %v408
    %v413 = vsub.f32 %v405, %v411
    %v414 = vmul.f32 %v412, 1.442695
    %v415 = vpow.pop %v414
    %v416 = vmul.f32 %v413, 1.442695
    %v417 = vpow.pop %v416
    %v418 = vsel %vm46, %v415, 0.0
    %419 = vadd.xlane.f32.xlu0 %v418
    %v420 = vpop.xlane.xlu0 %419
    %v421 = vsel %vm46, %v417, 0.0
    %422 = vadd.xlane.f32.xlu0 %v421
    %v423 = vpop.xlane.xlu0 %422
    %v424 = vrcp.pop %v420
    %v425 = vrcp.pop %v423
    %v426 = vmul.f32 %v415, %v424
    %v427 = vmul.f32 %v417, %v425
    %428 = vrot.lane.b32.xlu0 %v304, 64
    %v429 = vpop.permute.xlu0 %428
    %430 = vrot.lane.b32.xlu0 %v309, 64
    %v431 = vpop.permute.xlu0 %430
    %v435 = vsel %vm46, %v426, 0
    %v438 = vsel %vm46, %v427, 0
    %440 = vmatprep.subr.mxu0 0.0
    %441 = vmatpush1.msra.mxu0 0.0
    %442 = vmatprep.subr.mxu0 0.0
    %443 = vmatpush1.msra.mxu0 0.0
    %444 = vmatprep.subr.mxu0 0.0
    %445 = vmatpush1.msra.mxu0 0.0
    %446 = vmatprep.subr.mxu0 0.0
    %447 = vmatpush1.msra.mxu0 0.0
    %448 = vmatprep.subr.mxu0 0.0
    %449 = vmatpush1.msra.mxu0 0.0
    %450 = vmatprep.subr.mxu0 0.0
    %451 = vmatpush1.msra.mxu0 0.0
    %452 = vmatprep.subr.mxu0 0.0
    %453 = vmatpush1.msra.mxu0 0.0
    %454 = vmatprep.subr.mxu0 0.0
    %455 = vmatpush1.msra.mxu0 0.0
    %456 = vmatprep.subr.mxu0 0.0
    %457 = vmatpush1.msra.mxu0 0.0
    %458 = vmatprep.subr.mxu0 0.0
    %459 = vmatpush1.msra.mxu0 0.0
    %460 = vmatprep.subr.mxu0 0.0
    %461 = vmatpush1.msra.mxu0 0.0
    %462 = vmatprep.subr.mxu0 0.0
    %463 = vmatpush1.msra.mxu0 0.0
    %464 = vmatprep.subr.mxu0 0.0
    %465 = vmatpush1.msra.mxu0 0.0
    %466 = vmatprep.subr.mxu0 0.0
    %467 = vmatpush1.msra.mxu0 0.0
    %468 = vmatprep.subr.mxu0 0.0
    %469 = vmatpush1.msra.mxu0 %v431
    %470 = vmatprep.subr.mxu0 0.0
    %471 = vmatpush1.msra.mxu0 %v429
    %472 = vmatprep.subr.mxu0 0.0
    %473 = vmatpush2.msra.mxu0 0.0
    %474 = vmatprep.subr.mxu0 0.0
    %475 = vmatpush2.msra.mxu0 0.0
    %476 = vmatprep.subr.mxu0 0.0
    %477 = vmatpush2.msra.mxu0 0.0
    %478 = vmatprep.subr.mxu0 0.0
    %479 = vmatpush2.msra.mxu0 0.0
    %480 = vmatprep.subr.mxu0 0.0
    %481 = vmatpush2.msra.mxu0 0.0
    %482 = vmatprep.subr.mxu0 0.0
    %483 = vmatpush2.msra.mxu0 0.0
    %484 = vmatprep.subr.mxu0 0.0
    %485 = vmatpush2.msra.mxu0 0.0
    %486 = vmatprep.subr.mxu0 0.0
    %487 = vmatpush2.msra.mxu0 0.0
    %488 = vmatprep.subr.mxu0 0.0
    %489 = vmatpush2.msra.mxu0 0.0
    %490 = vmatprep.subr.mxu0 0.0
    %491 = vmatpush2.msra.mxu0 0.0
    %492 = vmatprep.subr.mxu0 0.0
    %493 = vmatpush2.msra.mxu0 0.0
    %494 = vmatprep.subr.mxu0 0.0
    %495 = vmatpush2.msra.mxu0 0.0
    %496 = vmatprep.subr.mxu0 0.0
    %497 = vmatpush2.msra.mxu0 0.0
    %498 = vmatprep.subr.mxu0 0.0
    %499 = vmatpush2.msra.mxu0 0.0
    %500 = vmatprep.subr.mxu0 0.0
    %501 = vmatpush2.msra.mxu0 0.0
    %502 = vmatprep.subr.mxu0 0.0
    %503 = vmatpush2.msra.mxu0 0.0
    %504 = vmatprep.mubr.f32.mxu0 0.0
    %505 = vmatmul.mubr.f32.gmra.mxu0 %v435
    %v506 = vpop.f32.mrf.mxu0
    %v507 = vadd.f32 0.0, %v506
    %v508 = vpop.f32.mrf.mxu0
    %509 = vmatprep.mubr.f32.mxu0 0.0
    %510 = vmatmul.mubr.f32.gmra.mxu0 %v438
    %v511 = vpop.f32.mrf.mxu0
    %v512 = vadd.f32 0.0, %v511
    %v513 = vpop.f32.mrf.mxu0
    %514 = vdwg.mxu0
    %515 = vrot.lane.b32.xlu0 %v304, 120
    %v516 = vpop.permute.xlu0 %515
    %517 = vrot.lane.b32.xlu0 %v309, 120
    %v518 = vpop.permute.xlu0 %517
    %519 = vrot.lane.b32.xlu0 %v304, 88
    %v520 = vpop.permute.xlu0 %519
    %521 = vrot.lane.b32.xlu0 %v309, 88
    %v522 = vpop.permute.xlu0 %521
    %v523 = vsel %vm318, %v516, 0
    %v525 = vsel %vm318, %v518, 0
    %v527 = vsel %vm318, %v520, 0
    %v529 = vsel %vm318, %v522, 0
    %531 = vmatprep.subr.mxu0 0.0
    %532 = vmatpush1.xpose.msra.mxu0 0.0
    %533 = vmatprep.subr.mxu0 0.0
    %534 = vmatpush1.xpose.msra.mxu0 0.0
    %535 = vmatprep.subr.mxu0 0.0
    %536 = vmatpush1.xpose.msra.mxu0 0.0
    %537 = vmatprep.subr.mxu0 0.0
    %538 = vmatpush1.xpose.msra.mxu0 0.0
    %539 = vmatprep.subr.mxu0 0.0
    %540 = vmatpush1.xpose.msra.mxu0 0.0
    %541 = vmatprep.subr.mxu0 0.0
    %542 = vmatpush1.xpose.msra.mxu0 0.0
    %543 = vmatprep.subr.mxu0 0.0
    %544 = vmatpush1.xpose.msra.mxu0 0.0
    %545 = vmatprep.subr.mxu0 0.0
    %546 = vmatpush1.xpose.msra.mxu0 0.0
    %547 = vmatprep.subr.mxu0 0.0
    %548 = vmatpush1.xpose.msra.mxu0 0.0
    %549 = vmatprep.subr.mxu0 0.0
    %550 = vmatpush1.xpose.msra.mxu0 0.0
    %551 = vmatprep.subr.mxu0 0.0
    %552 = vmatpush1.xpose.msra.mxu0 0.0
    %553 = vmatprep.subr.mxu0 0.0
    %554 = vmatpush1.xpose.msra.mxu0 0.0
    %555 = vmatprep.subr.mxu0 0.0
    %556 = vmatpush1.xpose.msra.mxu0 0.0
    %557 = vmatprep.subr.mxu0 0.0
    %558 = vmatpush1.xpose.msra.mxu0 0.0
    %559 = vmatprep.subr.mxu0 0.0
    %560 = vmatpush1.xpose.msra.mxu0 %v529
    %561 = vmatprep.subr.mxu0 0.0
    %562 = vmatpush1.xpose.msra.mxu0 %v527
    %563 = vmatprep.subr.mxu0 0.0
    %564 = vmatpush2.xpose.msra.mxu0 0.0
    %565 = vmatprep.subr.mxu0 0.0
    %566 = vmatpush2.xpose.msra.mxu0 0.0
    %567 = vmatprep.subr.mxu0 0.0
    %568 = vmatpush2.xpose.msra.mxu0 0.0
    %569 = vmatprep.subr.mxu0 0.0
    %570 = vmatpush2.xpose.msra.mxu0 0.0
    %571 = vmatprep.subr.mxu0 0.0
    %572 = vmatpush2.xpose.msra.mxu0 0.0
    %573 = vmatprep.subr.mxu0 0.0
    %574 = vmatpush2.xpose.msra.mxu0 0.0
    %575 = vmatprep.subr.mxu0 0.0
    %576 = vmatpush2.xpose.msra.mxu0 0.0
    %577 = vmatprep.subr.mxu0 0.0
    %578 = vmatpush2.xpose.msra.mxu0 0.0
    %579 = vmatprep.subr.mxu0 0.0
    %580 = vmatpush2.xpose.msra.mxu0 0.0
    %581 = vmatprep.subr.mxu0 0.0
    %582 = vmatpush2.xpose.msra.mxu0 0.0
    %583 = vmatprep.subr.mxu0 0.0
    %584 = vmatpush2.xpose.msra.mxu0 0.0
    %585 = vmatprep.subr.mxu0 0.0
    %586 = vmatpush2.xpose.msra.mxu0 0.0
    %587 = vmatprep.subr.mxu0 0.0
    %588 = vmatpush2.xpose.msra.mxu0 0.0
    %589 = vmatprep.subr.mxu0 0.0
    %590 = vmatpush2.xpose.msra.mxu0 0.0
    %591 = vmatprep.subr.mxu0 0.0
    %592 = vmatpush2.xpose.msra.mxu0 0.0
    %593 = vmatprep.subr.mxu0 0.0
    %594 = vmatpush2.xpose.msra.mxu0 0.0
    %595 = vmatprep.mubr.f32.mxu0 0.0
    %596 = vmatmul.mubr.f32.gmra.mxu0 %v523
    %v597 = vpop.f32.mrf.mxu0
    %v598 = vadd.f32 0.0, %v597
    %v599 = vpop.f32.mrf.mxu0
    %600 = vmatprep.mubr.f32.mxu0 0.0
    %601 = vmatmul.mubr.f32.gmra.mxu0 %v525
    %v602 = vpop.f32.mrf.mxu0
    %v603 = vadd.f32 0.0, %v602
    %v604 = vpop.f32.mrf.mxu0
    %605 = vdwg.mxu0
    %v606 = vmul.f32 %v598, 0.35355338
    %v607 = vmul.f32 %v603, 0.35355338
    %v608 = vadd.f32 %v606, %v170
    %v609 = vadd.f32 %v607, %v171
    %v610 = vsel %vm46, %v608, -inf
    %611 = vmax.xlane.f32.xlu0 %v610
    %v612 = vpop.xlane.xlu0 %611
    %v613 = vsel %vm46, %v609, -inf
    %614 = vmax.xlane.f32.xlu0 %v613
    %v615 = vpop.xlane.xlu0 %614
    %v616 = vsub.f32 %v608, %v612
    %v617 = vsub.f32 %v609, %v615
    %v618 = vmul.f32 %v616, 1.442695
    %v619 = vpow.pop %v618
    %v620 = vmul.f32 %v617, 1.442695
    %v621 = vpow.pop %v620
    %v622 = vsel %vm46, %v619, 0.0
    %623 = vadd.xlane.f32.xlu0 %v622
    %v624 = vpop.xlane.xlu0 %623
    %v625 = vsel %vm46, %v621, 0.0
    %626 = vadd.xlane.f32.xlu0 %v625
    %v627 = vpop.xlane.xlu0 %626
    %v628 = vrcp.pop %v624
    %v629 = vrcp.pop %v627
    %v630 = vmul.f32 %v619, %v628
    %v631 = vmul.f32 %v621, %v629
    %632 = vrot.lane.b32.xlu0 %v304, 56
    %v633 = vpop.permute.xlu0 %632
    %634 = vrot.lane.b32.xlu0 %v309, 56
    %v635 = vpop.permute.xlu0 %634
    %v639 = vsel %vm46, %v630, 0
    %v642 = vsel %vm46, %v631, 0
    %644 = vmatprep.subr.mxu0 0.0
    %645 = vmatpush1.msra.mxu0 0.0
    %646 = vmatprep.subr.mxu0 0.0
    %647 = vmatpush1.msra.mxu0 0.0
    %648 = vmatprep.subr.mxu0 0.0
    %649 = vmatpush1.msra.mxu0 0.0
    %650 = vmatprep.subr.mxu0 0.0
    %651 = vmatpush1.msra.mxu0 0.0
    %652 = vmatprep.subr.mxu0 0.0
    %653 = vmatpush1.msra.mxu0 0.0
    %654 = vmatprep.subr.mxu0 0.0
    %655 = vmatpush1.msra.mxu0 0.0
    %656 = vmatprep.subr.mxu0 0.0
    %657 = vmatpush1.msra.mxu0 0.0
    %658 = vmatprep.subr.mxu0 0.0
    %659 = vmatpush1.msra.mxu0 0.0
    %660 = vmatprep.subr.mxu0 0.0
    %661 = vmatpush1.msra.mxu0 0.0
    %662 = vmatprep.subr.mxu0 0.0
    %663 = vmatpush1.msra.mxu0 0.0
    %664 = vmatprep.subr.mxu0 0.0
    %665 = vmatpush1.msra.mxu0 0.0
    %666 = vmatprep.subr.mxu0 0.0
    %667 = vmatpush1.msra.mxu0 0.0
    %668 = vmatprep.subr.mxu0 0.0
    %669 = vmatpush1.msra.mxu0 0.0
    %670 = vmatprep.subr.mxu0 0.0
    %671 = vmatpush1.msra.mxu0 0.0
    %672 = vmatprep.subr.mxu0 0.0
    %673 = vmatpush1.msra.mxu0 %v635
    %674 = vmatprep.subr.mxu0 0.0
    %675 = vmatpush1.msra.mxu0 %v633
    %676 = vmatprep.subr.mxu0 0.0
    %677 = vmatpush2.msra.mxu0 0.0
    %678 = vmatprep.subr.mxu0 0.0
    %679 = vmatpush2.msra.mxu0 0.0
    %680 = vmatprep.subr.mxu0 0.0
    %681 = vmatpush2.msra.mxu0 0.0
    %682 = vmatprep.subr.mxu0 0.0
    %683 = vmatpush2.msra.mxu0 0.0
    %684 = vmatprep.subr.mxu0 0.0
    %685 = vmatpush2.msra.mxu0 0.0
    %686 = vmatprep.subr.mxu0 0.0
    %687 = vmatpush2.msra.mxu0 0.0
    %688 = vmatprep.subr.mxu0 0.0
    %689 = vmatpush2.msra.mxu0 0.0
    %690 = vmatprep.subr.mxu0 0.0
    %691 = vmatpush2.msra.mxu0 0.0
    %692 = vmatprep.subr.mxu0 0.0
    %693 = vmatpush2.msra.mxu0 0.0
    %694 = vmatprep.subr.mxu0 0.0
    %695 = vmatpush2.msra.mxu0 0.0
    %696 = vmatprep.subr.mxu0 0.0
    %697 = vmatpush2.msra.mxu0 0.0
    %698 = vmatprep.subr.mxu0 0.0
    %699 = vmatpush2.msra.mxu0 0.0
    %700 = vmatprep.subr.mxu0 0.0
    %701 = vmatpush2.msra.mxu0 0.0
    %702 = vmatprep.subr.mxu0 0.0
    %703 = vmatpush2.msra.mxu0 0.0
    %704 = vmatprep.subr.mxu0 0.0
    %705 = vmatpush2.msra.mxu0 0.0
    %706 = vmatprep.subr.mxu0 0.0
    %707 = vmatpush2.msra.mxu0 0.0
    %708 = vmatprep.mubr.f32.mxu0 0.0
    %709 = vmatmul.mubr.f32.gmra.mxu0 %v639
    %v710 = vpop.f32.mrf.mxu0
    %v711 = vadd.f32 0.0, %v710
    %v712 = vpop.f32.mrf.mxu0
    %713 = vmatprep.mubr.f32.mxu0 0.0
    %714 = vmatmul.mubr.f32.gmra.mxu0 %v642
    %v715 = vpop.f32.mrf.mxu0
    %v716 = vadd.f32 0.0, %v715
    %v717 = vpop.f32.mrf.mxu0
    %718 = vdwg.mxu0
    %719 = vrot.lane.b32.xlu0 %v304, 112
    %v720 = vpop.permute.xlu0 %719
    %721 = vrot.lane.b32.xlu0 %v309, 112
    %v722 = vpop.permute.xlu0 %721
    %723 = vrot.lane.b32.xlu0 %v304, 80
    %v724 = vpop.permute.xlu0 %723
    %725 = vrot.lane.b32.xlu0 %v309, 80
    %v726 = vpop.permute.xlu0 %725
    %v727 = vsel %vm318, %v720, 0
    %v729 = vsel %vm318, %v722, 0
    %v731 = vsel %vm318, %v724, 0
    %v733 = vsel %vm318, %v726, 0
    %735 = vmatprep.subr.mxu0 0.0
    %736 = vmatpush1.xpose.msra.mxu0 0.0
    %737 = vmatprep.subr.mxu0 0.0
    %738 = vmatpush1.xpose.msra.mxu0 0.0
    %739 = vmatprep.subr.mxu0 0.0
    %740 = vmatpush1.xpose.msra.mxu0 0.0
    %741 = vmatprep.subr.mxu0 0.0
    %742 = vmatpush1.xpose.msra.mxu0 0.0
    %743 = vmatprep.subr.mxu0 0.0
    %744 = vmatpush1.xpose.msra.mxu0 0.0
    %745 = vmatprep.subr.mxu0 0.0
    %746 = vmatpush1.xpose.msra.mxu0 0.0
    %747 = vmatprep.subr.mxu0 0.0
    %748 = vmatpush1.xpose.msra.mxu0 0.0
    %749 = vmatprep.subr.mxu0 0.0
    %750 = vmatpush1.xpose.msra.mxu0 0.0
    %751 = vmatprep.subr.mxu0 0.0
    %752 = vmatpush1.xpose.msra.mxu0 0.0
    %753 = vmatprep.subr.mxu0 0.0
    %754 = vmatpush1.xpose.msra.mxu0 0.0
    %755 = vmatprep.subr.mxu0 0.0
    %756 = vmatpush1.xpose.msra.mxu0 0.0
    %757 = vmatprep.subr.mxu0 0.0
    %758 = vmatpush1.xpose.msra.mxu0 0.0
    %759 = vmatprep.subr.mxu0 0.0
    %760 = vmatpush1.xpose.msra.mxu0 0.0
    %761 = vmatprep.subr.mxu0 0.0
    %762 = vmatpush1.xpose.msra.mxu0 0.0
    %763 = vmatprep.subr.mxu0 0.0
    %764 = vmatpush1.xpose.msra.mxu0 %v733
    %765 = vmatprep.subr.mxu0 0.0
    %766 = vmatpush1.xpose.msra.mxu0 %v731
    %767 = vmatprep.subr.mxu0 0.0
    %768 = vmatpush2.xpose.msra.mxu0 0.0
    %769 = vmatprep.subr.mxu0 0.0
    %770 = vmatpush2.xpose.msra.mxu0 0.0
    %771 = vmatprep.subr.mxu0 0.0
    %772 = vmatpush2.xpose.msra.mxu0 0.0
    %773 = vmatprep.subr.mxu0 0.0
    %774 = vmatpush2.xpose.msra.mxu0 0.0
    %775 = vmatprep.subr.mxu0 0.0
    %776 = vmatpush2.xpose.msra.mxu0 0.0
    %777 = vmatprep.subr.mxu0 0.0
    %778 = vmatpush2.xpose.msra.mxu0 0.0
    %779 = vmatprep.subr.mxu0 0.0
    %780 = vmatpush2.xpose.msra.mxu0 0.0
    %781 = vmatprep.subr.mxu0 0.0
    %782 = vmatpush2.xpose.msra.mxu0 0.0
    %783 = vmatprep.subr.mxu0 0.0
    %784 = vmatpush2.xpose.msra.mxu0 0.0
    %785 = vmatprep.subr.mxu0 0.0
    %786 = vmatpush2.xpose.msra.mxu0 0.0
    %787 = vmatprep.subr.mxu0 0.0
    %788 = vmatpush2.xpose.msra.mxu0 0.0
    %789 = vmatprep.subr.mxu0 0.0
    %790 = vmatpush2.xpose.msra.mxu0 0.0
    %791 = vmatprep.subr.mxu0 0.0
    %792 = vmatpush2.xpose.msra.mxu0 0.0
    %793 = vmatprep.subr.mxu0 0.0
    %794 = vmatpush2.xpose.msra.mxu0 0.0
    %795 = vmatprep.subr.mxu0 0.0
    %796 = vmatpush2.xpose.msra.mxu0 0.0
    %797 = vmatprep.subr.mxu0 0.0
    %798 = vmatpush2.xpose.msra.mxu0 0.0
    %799 = vmatprep.mubr.f32.mxu0 0.0
    %800 = vmatmul.mubr.f32.gmra.mxu0 %v727
    %v801 = vpop.f32.mrf.mxu0
    %v802 = vadd.f32 0.0, %v801
    %v803 = vpop.f32.mrf.mxu0
    %804 = vmatprep.mubr.f32.mxu0 0.0
    %805 = vmatmul.mubr.f32.gmra.mxu0 %v729
    %v806 = vpop.f32.mrf.mxu0
    %v807 = vadd.f32 0.0, %v806
    %v808 = vpop.f32.mrf.mxu0
    %809 = vdwg.mxu0
    %v810 = vmul.f32 %v802, 0.35355338
    %v811 = vmul.f32 %v807, 0.35355338
    %v812 = vadd.f32 %v810, %v170
    %v813 = vadd.f32 %v811, %v171
    %v814 = vsel %vm46, %v812, -inf
    %815 = vmax.xlane.f32.xlu0 %v814
    %v816 = vpop.xlane.xlu0 %815
    %v817 = vsel %vm46, %v813, -inf
    %818 = vmax.xlane.f32.xlu0 %v817
    %v819 = vpop.xlane.xlu0 %818
    %v820 = vsub.f32 %v812, %v816
    %v821 = vsub.f32 %v813, %v819
    %v822 = vmul.f32 %v820, 1.442695
    %v823 = vpow.pop %v822
    %v824 = vmul.f32 %v821, 1.442695
    %v825 = vpow.pop %v824
    %v826 = vsel %vm46, %v823, 0.0
    %827 = vadd.xlane.f32.xlu0 %v826
    %v828 = vpop.xlane.xlu0 %827
    %v829 = vsel %vm46, %v825, 0.0
    %830 = vadd.xlane.f32.xlu0 %v829
    %v831 = vpop.xlane.xlu0 %830
    %v832 = vrcp.pop %v828
    %v833 = vrcp.pop %v831
    %v834 = vmul.f32 %v823, %v832
    %v835 = vmul.f32 %v825, %v833
    %836 = vrot.lane.b32.xlu0 %v304, 48
    %v837 = vpop.permute.xlu0 %836
    %838 = vrot.lane.b32.xlu0 %v309, 48
    %v839 = vpop.permute.xlu0 %838
    %v843 = vsel %vm46, %v834, 0
    %v846 = vsel %vm46, %v835, 0
    %848 = vmatprep.subr.mxu0 0.0
    %849 = vmatpush1.msra.mxu0 0.0
    %850 = vmatprep.subr.mxu0 0.0
    %851 = vmatpush1.msra.mxu0 0.0
    %852 = vmatprep.subr.mxu0 0.0
    %853 = vmatpush1.msra.mxu0 0.0
    %854 = vmatprep.subr.mxu0 0.0
    %855 = vmatpush1.msra.mxu0 0.0
    %856 = vmatprep.subr.mxu0 0.0
    %857 = vmatpush1.msra.mxu0 0.0
    %858 = vmatprep.subr.mxu0 0.0
    %859 = vmatpush1.msra.mxu0 0.0
    %860 = vmatprep.subr.mxu0 0.0
    %861 = vmatpush1.msra.mxu0 0.0
    %862 = vmatprep.subr.mxu0 0.0
    %863 = vmatpush1.msra.mxu0 0.0
    %864 = vmatprep.subr.mxu0 0.0
    %865 = vmatpush1.msra.mxu0 0.0
    %866 = vmatprep.subr.mxu0 0.0
    %867 = vmatpush1.msra.mxu0 0.0
    %868 = vmatprep.subr.mxu0 0.0
    %869 = vmatpush1.msra.mxu0 0.0
    %870 = vmatprep.subr.mxu0 0.0
    %871 = vmatpush1.msra.mxu0 0.0
    %872 = vmatprep.subr.mxu0 0.0
    %873 = vmatpush1.msra.mxu0 0.0
    %874 = vmatprep.subr.mxu0 0.0
    %875 = vmatpush1.msra.mxu0 0.0
    %876 = vmatprep.subr.mxu0 0.0
    %877 = vmatpush1.msra.mxu0 %v839
    %878 = vmatprep.subr.mxu0 0.0
    %879 = vmatpush1.msra.mxu0 %v837
    %880 = vmatprep.subr.mxu0 0.0
    %881 = vmatpush2.msra.mxu0 0.0
    %882 = vmatprep.subr.mxu0 0.0
    %883 = vmatpush2.msra.mxu0 0.0
    %884 = vmatprep.subr.mxu0 0.0
    %885 = vmatpush2.msra.mxu0 0.0
    %886 = vmatprep.subr.mxu0 0.0
    %887 = vmatpush2.msra.mxu0 0.0
    %888 = vmatprep.subr.mxu0 0.0
    %889 = vmatpush2.msra.mxu0 0.0
    %890 = vmatprep.subr.mxu0 0.0
    %891 = vmatpush2.msra.mxu0 0.0
    %892 = vmatprep.subr.mxu0 0.0
    %893 = vmatpush2.msra.mxu0 0.0
    %894 = vmatprep.subr.mxu0 0.0
    %895 = vmatpush2.msra.mxu0 0.0
    %896 = vmatprep.subr.mxu0 0.0
    %897 = vmatpush2.msra.mxu0 0.0
    %898 = vmatprep.subr.mxu0 0.0
    %899 = vmatpush2.msra.mxu0 0.0
    %900 = vmatprep.subr.mxu0 0.0
    %901 = vmatpush2.msra.mxu0 0.0
    %902 = vmatprep.subr.mxu0 0.0
    %903 = vmatpush2.msra.mxu0 0.0
    %904 = vmatprep.subr.mxu0 0.0
    %905 = vmatpush2.msra.mxu0 0.0
    %906 = vmatprep.subr.mxu0 0.0
    %907 = vmatpush2.msra.mxu0 0.0
    %908 = vmatprep.subr.mxu0 0.0
    %909 = vmatpush2.msra.mxu0 0.0
    %910 = vmatprep.subr.mxu0 0.0
    %911 = vmatpush2.msra.mxu0 0.0
    %912 = vmatprep.mubr.f32.mxu0 0.0
    %913 = vmatmul.mubr.f32.gmra.mxu0 %v843
    %v914 = vpop.f32.mrf.mxu0
    %v915 = vadd.f32 0.0, %v914
    %v916 = vpop.f32.mrf.mxu0
    %917 = vmatprep.mubr.f32.mxu0 0.0
    %918 = vmatmul.mubr.f32.gmra.mxu0 %v846
    %v919 = vpop.f32.mrf.mxu0
    %v920 = vadd.f32 0.0, %v919
    %v921 = vpop.f32.mrf.mxu0
    %922 = vdwg.mxu0
    %923 = vrot.lane.b32.xlu0 %v304, 104
    %v924 = vpop.permute.xlu0 %923
    %925 = vrot.lane.b32.xlu0 %v309, 104
    %v926 = vpop.permute.xlu0 %925
    %927 = vrot.lane.b32.xlu0 %v304, 72
    %v928 = vpop.permute.xlu0 %927
    %929 = vrot.lane.b32.xlu0 %v309, 72
    %v930 = vpop.permute.xlu0 %929
    %v931 = vsel %vm318, %v924, 0
    %v933 = vsel %vm318, %v926, 0
    %v935 = vsel %vm318, %v928, 0
    %v937 = vsel %vm318, %v930, 0
    %939 = vmatprep.subr.mxu0 0.0
    %940 = vmatpush1.xpose.msra.mxu0 0.0
    %941 = vmatprep.subr.mxu0 0.0
    %942 = vmatpush1.xpose.msra.mxu0 0.0
    %943 = vmatprep.subr.mxu0 0.0
    %944 = vmatpush1.xpose.msra.mxu0 0.0
    %945 = vmatprep.subr.mxu0 0.0
    %946 = vmatpush1.xpose.msra.mxu0 0.0
    %947 = vmatprep.subr.mxu0 0.0
    %948 = vmatpush1.xpose.msra.mxu0 0.0
    %949 = vmatprep.subr.mxu0 0.0
    %950 = vmatpush1.xpose.msra.mxu0 0.0
    %951 = vmatprep.subr.mxu0 0.0
    %952 = vmatpush1.xpose.msra.mxu0 0.0
    %953 = vmatprep.subr.mxu0 0.0
    %954 = vmatpush1.xpose.msra.mxu0 0.0
    %955 = vmatprep.subr.mxu0 0.0
    %956 = vmatpush1.xpose.msra.mxu0 0.0
    %957 = vmatprep.subr.mxu0 0.0
    %958 = vmatpush1.xpose.msra.mxu0 0.0
    %959 = vmatprep.subr.mxu0 0.0
    %960 = vmatpush1.xpose.msra.mxu0 0.0
    %961 = vmatprep.subr.mxu0 0.0
    %962 = vmatpush1.xpose.msra.mxu0 0.0
    %963 = vmatprep.subr.mxu0 0.0
    %964 = vmatpush1.xpose.msra.mxu0 0.0
    %965 = vmatprep.subr.mxu0 0.0
    %966 = vmatpush1.xpose.msra.mxu0 0.0
    %967 = vmatprep.subr.mxu0 0.0
    %968 = vmatpush1.xpose.msra.mxu0 %v937
    %969 = vmatprep.subr.mxu0 0.0
    %970 = vmatpush1.xpose.msra.mxu0 %v935
    %971 = vmatprep.subr.mxu0 0.0
    %972 = vmatpush2.xpose.msra.mxu0 0.0
    %973 = vmatprep.subr.mxu0 0.0
    %974 = vmatpush2.xpose.msra.mxu0 0.0
    %975 = vmatprep.subr.mxu0 0.0
    %976 = vmatpush2.xpose.msra.mxu0 0.0
    %977 = vmatprep.subr.mxu0 0.0
    %978 = vmatpush2.xpose.msra.mxu0 0.0
    %979 = vmatprep.subr.mxu0 0.0
    %980 = vmatpush2.xpose.msra.mxu0 0.0
    %981 = vmatprep.subr.mxu0 0.0
    %982 = vmatpush2.xpose.msra.mxu0 0.0
    %983 = vmatprep.subr.mxu0 0.0
    %984 = vmatpush2.xpose.msra.mxu0 0.0
    %985 = vmatprep.subr.mxu0 0.0
    %986 = vmatpush2.xpose.msra.mxu0 0.0
    %987 = vmatprep.subr.mxu0 0.0
    %988 = vmatpush2.xpose.msra.mxu0 0.0
    %989 = vmatprep.subr.mxu0 0.0
    %990 = vmatpush2.xpose.msra.mxu0 0.0
    %991 = vmatprep.subr.mxu0 0.0
    %992 = vmatpush2.xpose.msra.mxu0 0.0
    %993 = vmatprep.subr.mxu0 0.0
    %994 = vmatpush2.xpose.msra.mxu0 0.0
    %995 = vmatprep.subr.mxu0 0.0
    %996 = vmatpush2.xpose.msra.mxu0 0.0
    %997 = vmatprep.subr.mxu0 0.0
    %998 = vmatpush2.xpose.msra.mxu0 0.0
    %999 = vmatprep.subr.mxu0 0.0
    %1000 = vmatpush2.xpose.msra.mxu0 0.0
    %1001 = vmatprep.subr.mxu0 0.0
    %1002 = vmatpush2.xpose.msra.mxu0 0.0
    %1003 = vmatprep.mubr.f32.mxu0 0.0
    %1004 = vmatmul.mubr.f32.gmra.mxu0 %v931
    %v1005 = vpop.f32.mrf.mxu0
    %v1006 = vadd.f32 0.0, %v1005
    %v1007 = vpop.f32.mrf.mxu0
    %1008 = vmatprep.mubr.f32.mxu0 0.0
    %1009 = vmatmul.mubr.f32.gmra.mxu0 %v933
    %v1010 = vpop.f32.mrf.mxu0
    %v1011 = vadd.f32 0.0, %v1010
    %v1012 = vpop.f32.mrf.mxu0
    %1013 = vdwg.mxu0
    %v1014 = vmul.f32 %v1006, 0.35355338
    %v1015 = vmul.f32 %v1011, 0.35355338
    %v1016 = vadd.f32 %v1014, %v170
    %v1017 = vadd.f32 %v1015, %v171
    %v1018 = vsel %vm46, %v1016, -inf
    %1019 = vmax.xlane.f32.xlu0 %v1018
    %v1020 = vpop.xlane.xlu0 %1019
    %v1021 = vsel %vm46, %v1017, -inf
    %1022 = vmax.xlane.f32.xlu0 %v1021
    %v1023 = vpop.xlane.xlu0 %1022
    %v1024 = vsub.f32 %v1016, %v1020
    %v1025 = vsub.f32 %v1017, %v1023
    %v1026 = vmul.f32 %v1024, 1.442695
    %v1027 = vpow.pop %v1026
    %v1028 = vmul.f32 %v1025, 1.442695
    %v1029 = vpow.pop %v1028
    %v1030 = vsel %vm46, %v1027, 0.0
    %1031 = vadd.xlane.f32.xlu0 %v1030
    %v1032 = vpop.xlane.xlu0 %1031
    %v1033 = vsel %vm46, %v1029, 0.0
    %1034 = vadd.xlane.f32.xlu0 %v1033
    %v1035 = vpop.xlane.xlu0 %1034
    %v1036 = vrcp.pop %v1032
    %v1037 = vrcp.pop %v1035
    %v1038 = vmul.f32 %v1027, %v1036
    %v1039 = vmul.f32 %v1029, %v1037
    %1040 = vrot.lane.b32.xlu0 %v304, 40
    %v1041 = vpop.permute.xlu0 %1040
    %1042 = vrot.lane.b32.xlu0 %v309, 40
    %v1043 = vpop.permute.xlu0 %1042
    %v1047 = vsel %vm46, %v1038, 0
    %v1050 = vsel %vm46, %v1039, 0
    %1052 = vmatprep.subr.mxu0 0.0
    %1053 = vmatpush1.msra.mxu0 0.0
    %1054 = vmatprep.subr.mxu0 0.0
    %1055 = vmatpush1.msra.mxu0 0.0
    %1056 = vmatprep.subr.mxu0 0.0
    %1057 = vmatpush1.msra.mxu0 0.0
    %1058 = vmatprep.subr.mxu0 0.0
    %1059 = vmatpush1.msra.mxu0 0.0
    %1060 = vmatprep.subr.mxu0 0.0
    %1061 = vmatpush1.msra.mxu0 0.0
    %1062 = vmatprep.subr.mxu0 0.0
    %1063 = vmatpush1.msra.mxu0 0.0
    %1064 = vmatprep.subr.mxu0 0.0
    %1065 = vmatpush1.msra.mxu0 0.0
    %1066 = vmatprep.subr.mxu0 0.0
    %1067 = vmatpush1.msra.mxu0 0.0
    %1068 = vmatprep.subr.mxu0 0.0
    %1069 = vmatpush1.msra.mxu0 0.0
    %1070 = vmatprep.subr.mxu0 0.0
    %1071 = vmatpush1.msra.mxu0 0.0
    %1072 = vmatprep.subr.mxu0 0.0
    %1073 = vmatpush1.msra.mxu0 0.0
    %1074 = vmatprep.subr.mxu0 0.0
    %1075 = vmatpush1.msra.mxu0 0.0
    %1076 = vmatprep.subr.mxu0 0.0
    %1077 = vmatpush1.msra.mxu0 0.0
    %1078 = vmatprep.subr.mxu0 0.0
    %1079 = vmatpush1.msra.mxu0 0.0
    %1080 = vmatprep.subr.mxu0 0.0
    %1081 = vmatpush1.msra.mxu0 %v1043
    %1082 = vmatprep.subr.mxu0 0.0
    %1083 = vmatpush1.msra.mxu0 %v1041
    %1084 = vmatprep.subr.mxu0 0.0
    %1085 = vmatpush2.msra.mxu0 0.0
    %1086 = vmatprep.subr.mxu0 0.0
    %1087 = vmatpush2.msra.mxu0 0.0
    %1088 = vmatprep.subr.mxu0 0.0
    %1089 = vmatpush2.msra.mxu0 0.0
    %1090 = vmatprep.subr.mxu0 0.0
    %1091 = vmatpush2.msra.mxu0 0.0
    %1092 = vmatprep.subr.mxu0 0.0
    %1093 = vmatpush2.msra.mxu0 0.0
    %1094 = vmatprep.subr.mxu0 0.0
    %1095 = vmatpush2.msra.mxu0 0.0
    %1096 = vmatprep.subr.mxu0 0.0
    %1097 = vmatpush2.msra.mxu0 0.0
    %1098 = vmatprep.subr.mxu0 0.0
    %1099 = vmatpush2.msra.mxu0 0.0
    %1100 = vmatprep.subr.mxu0 0.0
    %1101 = vmatpush2.msra.mxu0 0.0
    %1102 = vmatprep.subr.mxu0 0.0
    %1103 = vmatpush2.msra.mxu0 0.0
    %1104 = vmatprep.subr.mxu0 0.0
    %1105 = vmatpush2.msra.mxu0 0.0
    %1106 = vmatprep.subr.mxu0 0.0
    %1107 = vmatpush2.msra.mxu0 0.0
    %1108 = vmatprep.subr.mxu0 0.0
    %1109 = vmatpush2.msra.mxu0 0.0
    %1110 = vmatprep.subr.mxu0 0.0
    %1111 = vmatpush2.msra.mxu0 0.0
    %1112 = vmatprep.subr.mxu0 0.0
    %1113 = vmatpush2.msra.mxu0 0.0
    %1114 = vmatprep.subr.mxu0 0.0
    %1115 = vmatpush2.msra.mxu0 0.0
    %1116 = vmatprep.mubr.f32.mxu0 0.0
    %1117 = vmatmul.mubr.f32.gmra.mxu0 %v1047
    %v1118 = vpop.f32.mrf.mxu0
    %v1119 = vadd.f32 0.0, %v1118
    %v1120 = vpop.f32.mrf.mxu0
    %1121 = vmatprep.mubr.f32.mxu0 0.0
    %1122 = vmatmul.mubr.f32.gmra.mxu0 %v1050
    %v1123 = vpop.f32.mrf.mxu0
    %v1124 = vadd.f32 0.0, %v1123
    %v1125 = vpop.f32.mrf.mxu0
    %1126 = vdwg.mxu0
    %1129 = vrot.lane.b32.xlu0 %v711, 8
    %v1130 = vpop.permute.xlu0 %1129
    %1131 = vrot.lane.b32.xlu0 %v716, 8
    %v1132 = vpop.permute.xlu0 %1131
    %1137 = vrot.lane.b32.xlu0 %v915, 16
    %v1138 = vpop.permute.xlu0 %1137
    %1139 = vrot.lane.b32.xlu0 %v920, 16
    %v1140 = vpop.permute.xlu0 %1139
    %1145 = vrot.lane.b32.xlu0 %v1119, 24
    %v1146 = vpop.permute.xlu0 %1145
    %1147 = vrot.lane.b32.xlu0 %v1124, 24
    %v1148 = vpop.permute.xlu0 %1147
    %v1151 = vsel %vm318, %v507, %v1130
    %v1152 = vsel %vm318, %v512, %v1132
    %v1153 = vsel %vm46, %v1151, %v1138
    %v1154 = vsel %vm46, %v1152, %v1140
    %vm1155 = vcmask 195584
    %v1156 = vsel %vm1155, %v1153, %v1146
    %v1157 = vsel %vm1155, %v1154, %v1148
    %1162 = vrot.lane.b32.xlu0 %v172, 32
    %v1163 = vpop.permute.xlu0 %1162
    %1164 = vrot.lane.b32.xlu0 %v173, 32
    %v1165 = vpop.permute.xlu0 %1164
    %1166 = vrot.lane.b32.xlu0 %v174, 32
    %v1167 = vpop.permute.xlu0 %1166
    %1168 = vrot.lane.b32.xlu0 %v175, 32
    %v1169 = vpop.permute.xlu0 %1168
    %v1175 = vsel %vm187, %v1156, 0
    %v1178 = vsel %vm187, %v1157, 0
    %1180 = vmatprep.subr.mxu0 0.0
    %1181 = vmatpush1.msra.mxu0 0.0
    %1182 = vmatprep.subr.mxu0 0.0
    %1183 = vmatpush1.msra.mxu0 0.0
    %1184 = vmatprep.subr.mxu0 0.0
    %1185 = vmatpush1.msra.mxu0 0.0
    %1186 = vmatprep.subr.mxu0 0.0
    %1187 = vmatpush1.msra.mxu0 0.0
    %1188 = vmatprep.subr.mxu0 0.0
    %1189 = vmatpush1.msra.mxu0 0.0
    %1190 = vmatprep.subr.mxu0 0.0
    %1191 = vmatpush1.msra.mxu0 0.0
    %1192 = vmatprep.subr.mxu0 0.0
    %1193 = vmatpush1.msra.mxu0 0.0
    %1194 = vmatprep.subr.mxu0 0.0
    %1195 = vmatpush1.msra.mxu0 0.0
    %1196 = vmatprep.subr.mxu0 0.0
    %1197 = vmatpush1.msra.mxu0 0.0
    %1198 = vmatprep.subr.mxu0 0.0
    %1199 = vmatpush1.msra.mxu0 0.0
    %1200 = vmatprep.subr.mxu0 0.0
    %1201 = vmatpush1.msra.mxu0 0.0
    %1202 = vmatprep.subr.mxu0 0.0
    %1203 = vmatpush1.msra.mxu0 0.0
    %1204 = vmatprep.subr.mxu0 0.0
    %1205 = vmatpush1.msra.mxu0 %v1169
    %1206 = vmatprep.subr.mxu0 0.0
    %1207 = vmatpush1.msra.mxu0 %v1167
    %1208 = vmatprep.subr.mxu0 0.0
    %1209 = vmatpush1.msra.mxu0 %v1165
    %1210 = vmatprep.subr.mxu0 0.0
    %1211 = vmatpush1.msra.mxu0 %v1163
    %1212 = vmatprep.subr.mxu0 0.0
    %1213 = vmatpush2.msra.mxu0 0.0
    %1214 = vmatprep.subr.mxu0 0.0
    %1215 = vmatpush2.msra.mxu0 0.0
    %1216 = vmatprep.subr.mxu0 0.0
    %1217 = vmatpush2.msra.mxu0 0.0
    %1218 = vmatprep.subr.mxu0 0.0
    %1219 = vmatpush2.msra.mxu0 0.0
    %1220 = vmatprep.subr.mxu0 0.0
    %1221 = vmatpush2.msra.mxu0 0.0
    %1222 = vmatprep.subr.mxu0 0.0
    %1223 = vmatpush2.msra.mxu0 0.0
    %1224 = vmatprep.subr.mxu0 0.0
    %1225 = vmatpush2.msra.mxu0 0.0
    %1226 = vmatprep.subr.mxu0 0.0
    %1227 = vmatpush2.msra.mxu0 0.0
    %1228 = vmatprep.subr.mxu0 0.0
    %1229 = vmatpush2.msra.mxu0 0.0
    %1230 = vmatprep.subr.mxu0 0.0
    %1231 = vmatpush2.msra.mxu0 0.0
    %1232 = vmatprep.subr.mxu0 0.0
    %1233 = vmatpush2.msra.mxu0 0.0
    %1234 = vmatprep.subr.mxu0 0.0
    %1235 = vmatpush2.msra.mxu0 0.0
    %1236 = vmatprep.subr.mxu0 0.0
    %1237 = vmatpush2.msra.mxu0 0.0
    %1238 = vmatprep.subr.mxu0 0.0
    %1239 = vmatpush2.msra.mxu0 0.0
    %1240 = vmatprep.subr.mxu0 0.0
    %1241 = vmatpush2.msra.mxu0 0.0
    %1242 = vmatprep.subr.mxu0 0.0
    %1243 = vmatpush2.msra.mxu0 0.0
    %1244 = vmatprep.mubr.f32.mxu0 0.0
    %1245 = vmatmul.mubr.f32.gmra.mxu0 %v1175
    %v1246 = vpop.f32.mrf.mxu0
    %v1247 = vadd.f32 0.0, %v1246
    %v1248 = vpop.f32.mrf.mxu0
    %1249 = vmatprep.mubr.f32.mxu0 0.0
    %1250 = vmatmul.mubr.f32.gmra.mxu0 %v1178
    %v1251 = vpop.f32.mrf.mxu0
    %v1252 = vadd.f32 0.0, %v1251
    %v1253 = vpop.f32.mrf.mxu0
    %1254 = vdwg.mxu0
    %v1255 = vadd.f32 %v131, %v1247
    %v1256 = vadd.f32 %v132, %v1252
    %1258 = vrot.lane.b32.xlu0 %v230, 32
    %v1259 = vpop.permute.xlu0 %1258
    %v1261 = vadd.f32 %v1255, %v1259
    %v1262 = vadd.f32 %v1256, %v1259
    %v1263 = vsel %vm187, %v1261, 0.0
    %1264 = vadd.xlane.f32.xlu0 %v1263
    %v1265 = vpop.xlane.xlu0 %1264
    %v1266 = vsel %vm187, %v1262, 0.0
    %1267 = vadd.xlane.f32.xlu0 %v1266
    %v1268 = vpop.xlane.xlu0 %1267
    %v1269 = vmul.f32 %v1265, %v194
    %v1270 = vmul.f32 %v1268, %v194
    %v1271 = vsub.f32 %v1261, %v1269
    %v1272 = vsub.f32 %v1262, %v1270
    %v1273 = vmul.f32 %v1271, %v1271
    %v1274 = vmul.f32 %v1272, %v1272
    %v1275 = vsel %vm187, %v1273, 0.0
    %1276 = vadd.xlane.f32.xlu0 %v1275
    %v1277 = vpop.xlane.xlu0 %1276
    %v1278 = vsel %vm187, %v1274, 0.0
    %1279 = vadd.xlane.f32.xlu0 %v1278
    %v1280 = vpop.xlane.xlu0 %1279
    %v1281 = vmul.f32 %v1277, 0.032258064
    %v1282 = vmul.f32 %v1280, 0.032258064
    %v1283 = vadd.f32 %v1281, 1e-06
    %v1284 = vadd.f32 %v1282, 1e-06
    %v1285 = vrsqrt.pop %v1283
    %v1286 = vrsqrt.pop %v1284
    %1289 = vrot.lane.b32.xlu0 %v1271, 64
    %v1290 = vpop.permute.xlu0 %1289
    %1291 = vrot.lane.b32.xlu0 %v1272, 64
    %v1292 = vpop.permute.xlu0 %1291
    %v1295 = vmul.f32 %v216, %v1290
    %v1296 = vmul.f32 %v216, %v1292
    %v1297 = vmul.f32 %v1295, %v1285
    %v1298 = vmul.f32 %v1296, %v1286
    %v1299 = vadd.f32 %v1297, %v223
    %v1300 = vadd.f32 %v1298, %v223
    %v1301 = vlaneseq
    %v1302 = vshrl.u32 %v1301, 7
    %v1303 = vsub.s32 0, %v1302
    %v1304 = vrot.slane %v186, %v1303
    %1307 = vrot.lane.b32.xlu0 %v1299, 64
    %v1308 = vpop.permute.xlu0 %1307
    %1309 = vrot.lane.b32.xlu0 %v1300, 64
    %v1310 = vpop.permute.xlu0 %1309
    %v1311 = vsel %vm187, %v1308, 0
    %v1313 = vsel %vm187, %v1310, 0
    %1315 = vmatprep.subr.mxu0 0.0
    %1316 = vmatpush1.msra.mxu0 0.0
    %1317 = vmatprep.subr.mxu0 0.0
    %1318 = vmatpush1.msra.mxu0 0.0
    %1319 = vmatprep.subr.mxu0 0.0
    %1320 = vmatpush1.msra.mxu0 0.0
    %1321 = vmatprep.subr.mxu0 0.0
    %1322 = vmatpush1.msra.mxu0 0.0
    %1323 = vmatprep.subr.mxu0 0.0
    %1324 = vmatpush1.msra.mxu0 0.0
    %1325 = vmatprep.subr.mxu0 0.0
    %1326 = vmatpush1.msra.mxu0 0.0
    %1327 = vmatprep.subr.mxu0 0.0
    %1328 = vmatpush1.msra.mxu0 0.0
    %1329 = vmatprep.subr.mxu0 0.0
    %1330 = vmatpush1.msra.mxu0 0.0
    %1331 = vmatprep.subr.mxu0 0.0
    %1332 = vmatpush1.msra.mxu0 0.0
    %1333 = vmatprep.subr.mxu0 0.0
    %1334 = vmatpush1.msra.mxu0 0.0
    %1335 = vmatprep.subr.mxu0 0.0
    %1336 = vmatpush1.msra.mxu0 0.0
    %1337 = vmatprep.subr.mxu0 0.0
    %1338 = vmatpush1.msra.mxu0 0.0
    %1339 = vmatprep.subr.mxu0 0.0
    %1340 = vmatpush1.msra.mxu0 %v179
    %1341 = vmatprep.subr.mxu0 0.0
    %1342 = vmatpush1.msra.mxu0 %v178
    %1343 = vmatprep.subr.mxu0 0.0
    %1344 = vmatpush1.msra.mxu0 %v177
    %1345 = vmatprep.subr.mxu0 0.0
    %1346 = vmatpush1.msra.mxu0 %v176
    %1347 = vmatprep.subr.mxu0 0.0
    %1348 = vmatpush2.msra.mxu0 0.0
    %1349 = vmatprep.subr.mxu0 0.0
    %1350 = vmatpush2.msra.mxu0 0.0
    %1351 = vmatprep.subr.mxu0 0.0
    %1352 = vmatpush2.msra.mxu0 0.0
    %1353 = vmatprep.subr.mxu0 0.0
    %1354 = vmatpush2.msra.mxu0 0.0
    %1355 = vmatprep.subr.mxu0 0.0
    %1356 = vmatpush2.msra.mxu0 0.0
    %1357 = vmatprep.subr.mxu0 0.0
    %1358 = vmatpush2.msra.mxu0 0.0
    %1359 = vmatprep.subr.mxu0 0.0
    %1360 = vmatpush2.msra.mxu0 0.0
    %1361 = vmatprep.subr.mxu0 0.0
    %1362 = vmatpush2.msra.mxu0 0.0
    %1363 = vmatprep.subr.mxu0 0.0
    %1364 = vmatpush2.msra.mxu0 0.0
    %1365 = vmatprep.subr.mxu0 0.0
    %1366 = vmatpush2.msra.mxu0 0.0
    %1367 = vmatprep.subr.mxu0 0.0
    %1368 = vmatpush2.msra.mxu0 0.0
    %1369 = vmatprep.subr.mxu0 0.0
    %1370 = vmatpush2.msra.mxu0 0.0
    %1371 = vmatprep.subr.mxu0 0.0
    %1372 = vmatpush2.msra.mxu0 0.0
    %1373 = vmatprep.subr.mxu0 0.0
    %1374 = vmatpush2.msra.mxu0 0.0
    %1375 = vmatprep.subr.mxu0 0.0
    %1376 = vmatpush2.msra.mxu0 0.0
    %1377 = vmatprep.subr.mxu0 0.0
    %1378 = vmatpush2.msra.mxu0 0.0
    %1379 = vmatprep.mubr.f32.mxu0 0.0
    %1380 = vmatmul.mubr.f32.gmra.mxu0 %v1311
    %v1381 = vpop.f32.mrf.mxu0
    %v1382 = vadd.f32 %v1304, %v1381
    %v1383 = vpop.f32.mrf.mxu0
    %1384 = vmatprep.mubr.f32.mxu0 0.0
    %1385 = vmatmul.mubr.f32.gmra.mxu0 %v1313
    %v1386 = vpop.f32.mrf.mxu0
    %v1387 = vadd.f32 %v1304, %v1386
    %v1388 = vpop.f32.mrf.mxu0
    %1389 = vdwg.mxu0
    %v1390 = vmax.f32 %v1382, 0.0
    %v1391 = vmax.f32 %v1387, 0.0
    %1400 = vrot.lane.b32.xlu0 %v176, 64
    %v1401 = vpop.permute.xlu0 %1400
    %1402 = vrot.lane.b32.xlu0 %v177, 64
    %v1403 = vpop.permute.xlu0 %1402
    %1404 = vrot.lane.b32.xlu0 %v178, 64
    %v1405 = vpop.permute.xlu0 %1404
    %1406 = vrot.lane.b32.xlu0 %v179, 64
    %v1407 = vpop.permute.xlu0 %1406
    %1408 = vrot.lane.b32.xlu0 %v180, 64
    %v1409 = vpop.permute.xlu0 %1408
    %1410 = vrot.lane.b32.xlu0 %v181, 64
    %v1411 = vpop.permute.xlu0 %1410
    %1412 = vrot.lane.b32.xlu0 %v182, 64
    %v1413 = vpop.permute.xlu0 %1412
    %1414 = vrot.lane.b32.xlu0 %v183, 64
    %v1415 = vpop.permute.xlu0 %1414
    %vm1424 = vcmask 523264
    %v1426 = vsel %vm1424, %v1390, 0
    %v1429 = vsel %vm1424, %v1391, 0
    %1431 = vmatprep.subr.mxu0 0.0
    %1432 = vmatpush1.msra.mxu0 0.0
    %1433 = vmatprep.subr.mxu0 0.0
    %1434 = vmatpush1.msra.mxu0 0.0
    %1435 = vmatprep.subr.mxu0 0.0
    %1436 = vmatpush1.msra.mxu0 0.0
    %1437 = vmatprep.subr.mxu0 0.0
    %1438 = vmatpush1.msra.mxu0 0.0
    %1439 = vmatprep.subr.mxu0 0.0
    %1440 = vmatpush1.msra.mxu0 0.0
    %1441 = vmatprep.subr.mxu0 0.0
    %1442 = vmatpush1.msra.mxu0 0.0
    %1443 = vmatprep.subr.mxu0 0.0
    %1444 = vmatpush1.msra.mxu0 0.0
    %1445 = vmatprep.subr.mxu0 0.0
    %1446 = vmatpush1.msra.mxu0 0.0
    %1447 = vmatprep.subr.mxu0 0.0
    %1448 = vmatpush1.msra.mxu0 %v1415
    %1449 = vmatprep.subr.mxu0 0.0
    %1450 = vmatpush1.msra.mxu0 %v1413
    %1451 = vmatprep.subr.mxu0 0.0
    %1452 = vmatpush1.msra.mxu0 %v1411
    %1453 = vmatprep.subr.mxu0 0.0
    %1454 = vmatpush1.msra.mxu0 %v1409
    %1455 = vmatprep.subr.mxu0 0.0
    %1456 = vmatpush1.msra.mxu0 %v1407
    %1457 = vmatprep.subr.mxu0 0.0
    %1458 = vmatpush1.msra.mxu0 %v1405
    %1459 = vmatprep.subr.mxu0 0.0
    %1460 = vmatpush1.msra.mxu0 %v1403
    %1461 = vmatprep.subr.mxu0 0.0
    %1462 = vmatpush1.msra.mxu0 %v1401
    %1463 = vmatprep.subr.mxu0 0.0
    %1464 = vmatpush2.msra.mxu0 0.0
    %1465 = vmatprep.subr.mxu0 0.0
    %1466 = vmatpush2.msra.mxu0 0.0
    %1467 = vmatprep.subr.mxu0 0.0
    %1468 = vmatpush2.msra.mxu0 0.0
    %1469 = vmatprep.subr.mxu0 0.0
    %1470 = vmatpush2.msra.mxu0 0.0
    %1471 = vmatprep.subr.mxu0 0.0
    %1472 = vmatpush2.msra.mxu0 0.0
    %1473 = vmatprep.subr.mxu0 0.0
    %1474 = vmatpush2.msra.mxu0 0.0
    %1475 = vmatprep.subr.mxu0 0.0
    %1476 = vmatpush2.msra.mxu0 0.0
    %1477 = vmatprep.subr.mxu0 0.0
    %1478 = vmatpush2.msra.mxu0 0.0
    %1479 = vmatprep.subr.mxu0 0.0
    %1480 = vmatpush2.msra.mxu0 0.0
    %1481 = vmatprep.subr.mxu0 0.0
    %1482 = vmatpush2.msra.mxu0 0.0
    %1483 = vmatprep.subr.mxu0 0.0
    %1484 = vmatpush2.msra.mxu0 0.0
    %1485 = vmatprep.subr.mxu0 0.0
    %1486 = vmatpush2.msra.mxu0 0.0
    %1487 = vmatprep.subr.mxu0 0.0
    %1488 = vmatpush2.msra.mxu0 0.0
    %1489 = vmatprep.subr.mxu0 0.0
    %1490 = vmatpush2.msra.mxu0 0.0
    %1491 = vmatprep.subr.mxu0 0.0
    %1492 = vmatpush2.msra.mxu0 0.0
    %1493 = vmatprep.subr.mxu0 0.0
    %1494 = vmatpush2.msra.mxu0 0.0
    %1495 = vmatprep.mubr.f32.mxu0 0.0
    %1496 = vmatmul.mubr.f32.gmra.mxu0 %v1426
    %v1497 = vpop.f32.mrf.mxu0
    %v1498 = vadd.f32 0.0, %v1497
    %v1499 = vpop.f32.mrf.mxu0
    %1500 = vmatprep.mubr.f32.mxu0 0.0
    %1501 = vmatmul.mubr.f32.gmra.mxu0 %v1429
    %v1502 = vpop.f32.mrf.mxu0
    %v1503 = vadd.f32 0.0, %v1502
    %v1504 = vpop.f32.mrf.mxu0
    %1505 = vdwg.mxu0
    %v1506 = vadd.f32 %v1261, %v1498
    %v1507 = vadd.f32 %v1262, %v1503
    %1509 = vrot.lane.b32.xlu0 %v1304, 64
    %v1510 = vpop.permute.xlu0 %1509
    %v1512 = vadd.f32 %v1506, %v1510
    %v1513 = vadd.f32 %v1507, %v1510
    %v1514 = vld [vmem:[#allocation2 + $0x68] sm:$0xff]
    %v1515 = vld [vmem:[#allocation2 + $0x70] sm:$0xff]
    %v1516 = vld [vmem:[#allocation2 + $0x78] sm:$0xff]
    %v1517 = vld [vmem:[#allocation2 + $0x80] sm:$0xff]
    %v1518 = vld [vmem:[#allocation2 + $0x88] sm:$0xff]
    %v1519 = vld [vmem:[#allocation2 + $0x90] sm:$0xff]
    %v1520 = vld [vmem:[#allocation2 + $0x98] sm:$0xff]
    %v1521 = vld [vmem:[#allocation2 + $0xa0] sm:$0xff]
    %v1522 = vld [vmem:[#allocation2 + $0xa8] sm:$0xff]
    %v1523 = vld [vmem:[#allocation2 + $0xb0] sm:$0xff]
    %v1524 = vld [vmem:[#allocation2 + $0xb8] sm:$0xff]
    %v1525 = vld [vmem:[#allocation2 + $0xc0] sm:$0xff]
    %v1526 = vld [vmem:[#allocation2 + $0xc8] sm:$0x1]
    %v1527 = vld [vmem:[#allocation2 + $0xc9] sm:$0x1]
    %v1528 = vld [vmem:[#allocation2 + $0xca] sm:$0x1]
    %v1529 = vsel %vm187, %v1512, 0.0
    %1530 = vadd.xlane.f32.xlu0 %v1529
    %v1531 = vpop.xlane.xlu0 %1530
    %v1532 = vsel %vm187, %v1513, 0.0
    %1533 = vadd.xlane.f32.xlu0 %v1532
    %v1534 = vpop.xlane.xlu0 %1533
    %v1535 = vmul.f32 %v1531, %v194
    %v1536 = vmul.f32 %v1534, %v194
    %v1537 = vsub.f32 %v1512, %v1535
    %v1538 = vsub.f32 %v1513, %v1536
    %v1539 = vmul.f32 %v1537, %v1537
    %v1540 = vmul.f32 %v1538, %v1538
    %v1541 = vsel %vm187, %v1539, 0.0
    %1542 = vadd.xlane.f32.xlu0 %v1541
    %v1543 = vpop.xlane.xlu0 %1542
    %v1544 = vsel %vm187, %v1540, 0.0
    %1545 = vadd.xlane.f32.xlu0 %v1544
    %v1546 = vpop.xlane.xlu0 %1545
    %v1547 = vmul.f32 %v1543, 0.032258064
    %v1548 = vmul.f32 %v1546, 0.032258064
    %v1549 = vadd.f32 %v1547, 1e-06
    %v1550 = vadd.f32 %v1548, 1e-06
    %v1551 = vrsqrt.pop %v1549
    %v1552 = vrsqrt.pop %v1550
    %v1553 = vlaneseq
    %v1554 = vshrl.u32 %v1553, 7
    %v1555 = vsub.s32 0, %v1554
    %v1556 = vrot.slane %v1527, %v1555
    %v1557 = vmul.f32 %v1556, %v1537
    %v1558 = vmul.f32 %v1556, %v1538
    %v1559 = vmul.f32 %v1557, %v1551
    %v1560 = vmul.f32 %v1558, %v1552
    %1562 = vrot.lane.b32.xlu0 %v1556, 96
    %v1563 = vpop.permute.xlu0 %1562
    %v1565 = vadd.f32 %v1559, %v1563
    %v1566 = vadd.f32 %v1560, %v1563
    %v1567 = vlaneseq
    %v1568 = vshrl.u32 %v1567, 7
    %v1569 = vsub.s32 0, %v1568
    %v1570 = vrot.slane %v1526, %v1569
    %v1572 = vsel %vm187, %v1565, 0
    %v1575 = vsel %vm187, %v1566, 0
    %1577 = vmatprep.subr.mxu0 0.0
    %1578 = vmatpush1.msra.mxu0 0.0
    %1579 = vmatprep.subr.mxu0 0.0
    %1580 = vmatpush1.msra.mxu0 0.0
    %1581 = vmatprep.subr.mxu0 0.0
    %1582 = vmatpush1.msra.mxu0 0.0
    %1583 = vmatprep.subr.mxu0 0.0
    %1584 = vmatpush1.msra.mxu0 0.0
    %1585 = vmatprep.subr.mxu0 0.0
    %1586 = vmatpush1.msra.mxu0 0.0
    %1587 = vmatprep.subr.mxu0 0.0
    %1588 = vmatpush1.msra.mxu0 0.0
    %1589 = vmatprep.subr.mxu0 0.0
    %1590 = vmatpush1.msra.mxu0 0.0
    %1591 = vmatprep.subr.mxu0 0.0
    %1592 = vmatpush1.msra.mxu0 0.0
    %1593 = vmatprep.subr.mxu0 0.0
    %1594 = vmatpush1.msra.mxu0 0.0
    %1595 = vmatprep.subr.mxu0 0.0
    %1596 = vmatpush1.msra.mxu0 0.0
    %1597 = vmatprep.subr.mxu0 0.0
    %1598 = vmatpush1.msra.mxu0 0.0
    %1599 = vmatprep.subr.mxu0 0.0
    %1600 = vmatpush1.msra.mxu0 0.0
    %1601 = vmatprep.subr.mxu0 0.0
    %1602 = vmatpush1.msra.mxu0 %v1517
    %1603 = vmatprep.subr.mxu0 0.0
    %1604 = vmatpush1.msra.mxu0 %v1516
    %1605 = vmatprep.subr.mxu0 0.0
    %1606 = vmatpush1.msra.mxu0 %v1515
    %1607 = vmatprep.subr.mxu0 0.0
    %1608 = vmatpush1.msra.mxu0 %v1514
    %1609 = vmatprep.subr.mxu0 0.0
    %1610 = vmatpush2.msra.mxu0 0.0
    %1611 = vmatprep.subr.mxu0 0.0
    %1612 = vmatpush2.msra.mxu0 0.0
    %1613 = vmatprep.subr.mxu0 0.0
    %1614 = vmatpush2.msra.mxu0 0.0
    %1615 = vmatprep.subr.mxu0 0.0
    %1616 = vmatpush2.msra.mxu0 0.0
    %1617 = vmatprep.subr.mxu0 0.0
    %1618 = vmatpush2.msra.mxu0 0.0
    %1619 = vmatprep.subr.mxu0 0.0
    %1620 = vmatpush2.msra.mxu0 0.0
    %1621 = vmatprep.subr.mxu0 0.0
    %1622 = vmatpush2.msra.mxu0 0.0
    %1623 = vmatprep.subr.mxu0 0.0
    %1624 = vmatpush2.msra.mxu0 0.0
    %1625 = vmatprep.subr.mxu0 0.0
    %1626 = vmatpush2.msra.mxu0 0.0
    %1627 = vmatprep.subr.mxu0 0.0
    %1628 = vmatpush2.msra.mxu0 0.0
    %1629 = vmatprep.subr.mxu0 0.0
    %1630 = vmatpush2.msra.mxu0 0.0
    %1631 = vmatprep.subr.mxu0 0.0
    %1632 = vmatpush2.msra.mxu0 0.0
    %1633 = vmatprep.subr.mxu0 0.0
    %1634 = vmatpush2.msra.mxu0 0.0
    %1635 = vmatprep.subr.mxu0 0.0
    %1636 = vmatpush2.msra.mxu0 0.0
    %1637 = vmatprep.subr.mxu0 0.0
    %1638 = vmatpush2.msra.mxu0 0.0
    %1639 = vmatprep.subr.mxu0 0.0
    %1640 = vmatpush2.msra.mxu0 0.0
    %1641 = vmatprep.mubr.f32.mxu0 0.0
    %1642 = vmatmul.mubr.f32.gmra.mxu0 %v1572
    %v1643 = vpop.f32.mrf.mxu0
    %v1644 = vadd.f32 %v1570, %v1643
    %v1645 = vpop.f32.mrf.mxu0
    %1646 = vmatprep.mubr.f32.mxu0 0.0
    %1647 = vmatmul.mubr.f32.gmra.mxu0 %v1575
    %v1648 = vpop.f32.mrf.mxu0
    %v1649 = vadd.f32 %v1570, %v1648
    %v1650 = vpop.f32.mrf.mxu0
    %1651 = vdwg.mxu0
    %1654 = vrot.lane.b32.xlu0 %v1644, 96
    %v1655 = vpop.permute.xlu0 %1654
    %1656 = vrot.lane.b32.xlu0 %v1649, 96
    %v1657 = vpop.permute.xlu0 %1656
    %v1658 = vsel %vm318, %v1644, 0
    %v1660 = vsel %vm318, %v1649, 0
    %v1662 = vsel %vm318, %v1655, 0
    %v1664 = vsel %vm318, %v1657, 0
    %1666 = vmatprep.subr.mxu0 0.0
    %1667 = vmatpush1.xpose.msra.mxu0 0.0
    %1668 = vmatprep.subr.mxu0 0.0
    %1669 = vmatpush1.xpose.msra.mxu0 0.0
    %1670 = vmatprep.subr.mxu0 0.0
    %1671 = vmatpush1.xpose.msra.mxu0 0.0
    %1672 = vmatprep.subr.mxu0 0.0
    %1673 = vmatpush1.xpose.msra.mxu0 0.0
    %1674 = vmatprep.subr.mxu0 0.0
    %1675 = vmatpush1.xpose.msra.mxu0 0.0
    %1676 = vmatprep.subr.mxu0 0.0
    %1677 = vmatpush1.xpose.msra.mxu0 0.0
    %1678 = vmatprep.subr.mxu0 0.0
    %1679 = vmatpush1.xpose.msra.mxu0 0.0
    %1680 = vmatprep.subr.mxu0 0.0
    %1681 = vmatpush1.xpose.msra.mxu0 0.0
    %1682 = vmatprep.subr.mxu0 0.0
    %1683 = vmatpush1.xpose.msra.mxu0 0.0
    %1684 = vmatprep.subr.mxu0 0.0
    %1685 = vmatpush1.xpose.msra.mxu0 0.0
    %1686 = vmatprep.subr.mxu0 0.0
    %1687 = vmatpush1.xpose.msra.mxu0 0.0
    %1688 = vmatprep.subr.mxu0 0.0
    %1689 = vmatpush1.xpose.msra.mxu0 0.0
    %1690 = vmatprep.subr.mxu0 0.0
    %1691 = vmatpush1.xpose.msra.mxu0 0.0
    %1692 = vmatprep.subr.mxu0 0.0
    %1693 = vmatpush1.xpose.msra.mxu0 0.0
    %1694 = vmatprep.subr.mxu0 0.0
    %1695 = vmatpush1.xpose.msra.mxu0 %v1664
    %1696 = vmatprep.subr.mxu0 0.0
    %1697 = vmatpush1.xpose.msra.mxu0 %v1662
    %1698 = vmatprep.subr.mxu0 0.0
    %1699 = vmatpush2.xpose.msra.mxu0 0.0
    %1700 = vmatprep.subr.mxu0 0.0
    %1701 = vmatpush2.xpose.msra.mxu0 0.0
    %1702 = vmatprep.subr.mxu0 0.0
    %1703 = vmatpush2.xpose.msra.mxu0 0.0
    %1704 = vmatprep.subr.mxu0 0.0
    %1705 = vmatpush2.xpose.msra.mxu0 0.0
    %1706 = vmatprep.subr.mxu0 0.0
    %1707 = vmatpush2.xpose.msra.mxu0 0.0
    %1708 = vmatprep.subr.mxu0 0.0
    %1709 = vmatpush2.xpose.msra.mxu0 0.0
    %1710 = vmatprep.subr.mxu0 0.0
    %1711 = vmatpush2.xpose.msra.mxu0 0.0
    %1712 = vmatprep.subr.mxu0 0.0
    %1713 = vmatpush2.xpose.msra.mxu0 0.0
    %1714 = vmatprep.subr.mxu0 0.0
    %1715 = vmatpush2.xpose.msra.mxu0 0.0
    %1716 = vmatprep.subr.mxu0 0.0
    %1717 = vmatpush2.xpose.msra.mxu0 0.0
    %1718 = vmatprep.subr.mxu0 0.0
    %1719 = vmatpush2.xpose.msra.mxu0 0.0
    %1720 = vmatprep.subr.mxu0 0.0
    %1721 = vmatpush2.xpose.msra.mxu0 0.0
    %1722 = vmatprep.subr.mxu0 0.0
    %1723 = vmatpush2.xpose.msra.mxu0 0.0
    %1724 = vmatprep.subr.mxu0 0.0
    %1725 = vmatpush2.xpose.msra.mxu0 0.0
    %1726 = vmatprep.subr.mxu0 0.0
    %1727 = vmatpush2.xpose.msra.mxu0 0.0
    %1728 = vmatprep.subr.mxu0 0.0
    %1729 = vmatpush2.xpose.msra.mxu0 0.0
    %1730 = vmatprep.mubr.f32.mxu0 0.0
    %1731 = vmatmul.mubr.f32.gmra.mxu0 %v1658
    %v1732 = vpop.f32.mrf.mxu0
    %v1733 = vadd.f32 0.0, %v1732
    %v1734 = vpop.f32.mrf.mxu0
    %1735 = vmatprep.mubr.f32.mxu0 0.0
    %1736 = vmatmul.mubr.f32.gmra.mxu0 %v1660
    %v1737 = vpop.f32.mrf.mxu0
    %v1738 = vadd.f32 0.0, %v1737
    %v1739 = vpop.f32.mrf.mxu0
    %1740 = vdwg.mxu0
    %v1741 = vmul.f32 %v1733, 0.35355338
    %v1742 = vmul.f32 %v1738, 0.35355338
    %v1743 = vadd.f32 %v1741, %v170
    %v1744 = vadd.f32 %v1742, %v171
    %v1745 = vsel %vm46, %v1743, -inf
    %1746 = vmax.xlane.f32.xlu0 %v1745
    %v1747 = vpop.xlane.xlu0 %1746
    %v1748 = vsel %vm46, %v1744, -inf
    %1749 = vmax.xlane.f32.xlu0 %v1748
    %v1750 = vpop.xlane.xlu0 %1749
    %v1751 = vsub.f32 %v1743, %v1747
    %v1752 = vsub.f32 %v1744, %v1750
    %v1753 = vmul.f32 %v1751, 1.442695
    %v1754 = vpow.pop %v1753
    %v1755 = vmul.f32 %v1752, 1.442695
    %v1756 = vpow.pop %v1755
    %v1757 = vsel %vm46, %v1754, 0.0
    %1758 = vadd.xlane.f32.xlu0 %v1757
    %v1759 = vpop.xlane.xlu0 %1758
    %v1760 = vsel %vm46, %v1756, 0.0
    %1761 = vadd.xlane.f32.xlu0 %v1760
    %v1762 = vpop.xlane.xlu0 %1761
    %v1763 = vrcp.pop %v1759
    %v1764 = vrcp.pop %v1762
    %v1765 = vmul.f32 %v1754, %v1763
    %v1766 = vmul.f32 %v1756, %v1764
    %1767 = vrot.lane.b32.xlu0 %v1644, 64
    %v1768 = vpop.permute.xlu0 %1767
    %1769 = vrot.lane.b32.xlu0 %v1649, 64
    %v1770 = vpop.permute.xlu0 %1769
    %v1774 = vsel %vm46, %v1765, 0
    %v1777 = vsel %vm46, %v1766, 0
    %1779 = vmatprep.subr.mxu0 0.0
    %1780 = vmatpush1.msra.mxu0 0.0
    %1781 = vmatprep.subr.mxu0 0.0
    %1782 = vmatpush1.msra.mxu0 0.0
    %1783 = vmatprep.subr.mxu0 0.0
    %1784 = vmatpush1.msra.mxu0 0.0
    %1785 = vmatprep.subr.mxu0 0.0
    %1786 = vmatpush1.msra.mxu0 0.0
    %1787 = vmatprep.subr.mxu0 0.0
    %1788 = vmatpush1.msra.mxu0 0.0
    %1789 = vmatprep.subr.mxu0 0.0
    %1790 = vmatpush1.msra.mxu0 0.0
    %1791 = vmatprep.subr.mxu0 0.0
    %1792 = vmatpush1.msra.mxu0 0.0
    %1793 = vmatprep.subr.mxu0 0.0
    %1794 = vmatpush1.msra.mxu0 0.0
    %1795 = vmatprep.subr.mxu0 0.0
    %1796 = vmatpush1.msra.mxu0 0.0
    %1797 = vmatprep.subr.mxu0 0.0
    %1798 = vmatpush1.msra.mxu0 0.0
    %1799 = vmatprep.subr.mxu0 0.0
    %1800 = vmatpush1.msra.mxu0 0.0
    %1801 = vmatprep.subr.mxu0 0.0
    %1802 = vmatpush1.msra.mxu0 0.0
    %1803 = vmatprep.subr.mxu0 0.0
    %1804 = vmatpush1.msra.mxu0 0.0
    %1805 = vmatprep.subr.mxu0 0.0
    %1806 = vmatpush1.msra.mxu0 0.0
    %1807 = vmatprep.subr.mxu0 0.0
    %1808 = vmatpush1.msra.mxu0 %v1770
    %1809 = vmatprep.subr.mxu0 0.0
    %1810 = vmatpush1.msra.mxu0 %v1768
    %1811 = vmatprep.subr.mxu0 0.0
    %1812 = vmatpush2.msra.mxu0 0.0
    %1813 = vmatprep.subr.mxu0 0.0
    %1814 = vmatpush2.msra.mxu0 0.0
    %1815 = vmatprep.subr.mxu0 0.0
    %1816 = vmatpush2.msra.mxu0 0.0
    %1817 = vmatprep.subr.mxu0 0.0
    %1818 = vmatpush2.msra.mxu0 0.0
    %1819 = vmatprep.subr.mxu0 0.0
    %1820 = vmatpush2.msra.mxu0 0.0
    %1821 = vmatprep.subr.mxu0 0.0
    %1822 = vmatpush2.msra.mxu0 0.0
    %1823 = vmatprep.subr.mxu0 0.0
    %1824 = vmatpush2.msra.mxu0 0.0
    %1825 = vmatprep.subr.mxu0 0.0
    %1826 = vmatpush2.msra.mxu0 0.0
    %1827 = vmatprep.subr.mxu0 0.0
    %1828 = vmatpush2.msra.mxu0 0.0
    %1829 = vmatprep.subr.mxu0 0.0
    %1830 = vmatpush2.msra.mxu0 0.0
    %1831 = vmatprep.subr.mxu0 0.0
    %1832 = vmatpush2.msra.mxu0 0.0
    %1833 = vmatprep.subr.mxu0 0.0
    %1834 = vmatpush2.msra.mxu0 0.0
    %1835 = vmatprep.subr.mxu0 0.0
    %1836 = vmatpush2.msra.mxu0 0.0
    %1837 = vmatprep.subr.mxu0 0.0
    %1838 = vmatpush2.msra.mxu0 0.0
    %1839 = vmatprep.subr.mxu0 0.0
    %1840 = vmatpush2.msra.mxu0 0.0
    %1841 = vmatprep.subr.mxu0 0.0
    %1842 = vmatpush2.msra.mxu0 0.0
    %1843 = vmatprep.mubr.f32.mxu0 0.0
    %1844 = vmatmul.mubr.f32.gmra.mxu0 %v1774
    %v1845 = vpop.f32.mrf.mxu0
    %v1846 = vadd.f32 0.0, %v1845
    %v1847 = vpop.f32.mrf.mxu0
    %1848 = vmatprep.mubr.f32.mxu0 0.0
    %1849 = vmatmul.mubr.f32.gmra.mxu0 %v1777
    %v1850 = vpop.f32.mrf.mxu0
    %v1851 = vadd.f32 0.0, %v1850
    %v1852 = vpop.f32.mrf.mxu0
    %1853 = vdwg.mxu0
    %1854 = vrot.lane.b32.xlu0 %v1644, 120
    %v1855 = vpop.permute.xlu0 %1854
    %1856 = vrot.lane.b32.xlu0 %v1649, 120
    %v1857 = vpop.permute.xlu0 %1856
    %1858 = vrot.lane.b32.xlu0 %v1644, 88
    %v1859 = vpop.permute.xlu0 %1858
    %1860 = vrot.lane.b32.xlu0 %v1649, 88
    %v1861 = vpop.permute.xlu0 %1860
    %v1862 = vsel %vm318, %v1855, 0
    %v1864 = vsel %vm318, %v1857, 0
    %v1866 = vsel %vm318, %v1859, 0
    %v1868 = vsel %vm318, %v1861, 0
    %1870 = vmatprep.subr.mxu0 0.0
    %1871 = vmatpush1.xpose.msra.mxu0 0.0
    %1872 = vmatprep.subr.mxu0 0.0
    %1873 = vmatpush1.xpose.msra.mxu0 0.0
    %1874 = vmatprep.subr.mxu0 0.0
    %1875 = vmatpush1.xpose.msra.mxu0 0.0
    %1876 = vmatprep.subr.mxu0 0.0
    %1877 = vmatpush1.xpose.msra.mxu0 0.0
    %1878 = vmatprep.subr.mxu0 0.0
    %1879 = vmatpush1.xpose.msra.mxu0 0.0
    %1880 = vmatprep.subr.mxu0 0.0
    %1881 = vmatpush1.xpose.msra.mxu0 0.0
    %1882 = vmatprep.subr.mxu0 0.0
    %1883 = vmatpush1.xpose.msra.mxu0 0.0
    %1884 = vmatprep.subr.mxu0 0.0
    %1885 = vmatpush1.xpose.msra.mxu0 0.0
    %1886 = vmatprep.subr.mxu0 0.0
    %1887 = vmatpush1.xpose.msra.mxu0 0.0
    %1888 = vmatprep.subr.mxu0 0.0
    %1889 = vmatpush1.xpose.msra.mxu0 0.0
    %1890 = vmatprep.subr.mxu0 0.0
    %1891 = vmatpush1.xpose.msra.mxu0 0.0
    %1892 = vmatprep.subr.mxu0 0.0
    %1893 = vmatpush1.xpose.msra.mxu0 0.0
    %1894 = vmatprep.subr.mxu0 0.0
    %1895 = vmatpush1.xpose.msra.mxu0 0.0
    %1896 = vmatprep.subr.mxu0 0.0
    %1897 = vmatpush1.xpose.msra.mxu0 0.0
    %1898 = vmatprep.subr.mxu0 0.0
    %1899 = vmatpush1.xpose.msra.mxu0 %v1868
    %1900 = vmatprep.subr.mxu0 0.0
    %1901 = vmatpush1.xpose.msra.mxu0 %v1866
    %1902 = vmatprep.subr.mxu0 0.0
    %1903 = vmatpush2.xpose.msra.mxu0 0.0
    %1904 = vmatprep.subr.mxu0 0.0
    %1905 = vmatpush2.xpose.msra.mxu0 0.0
    %1906 = vmatprep.subr.mxu0 0.0
    %1907 = vmatpush2.xpose.msra.mxu0 0.0
    %1908 = vmatprep.subr.mxu0 0.0
    %1909 = vmatpush2.xpose.msra.mxu0 0.0
    %1910 = vmatprep.subr.mxu0 0.0
    %1911 = vmatpush2.xpose.msra.mxu0 0.0
    %1912 = vmatprep.subr.mxu0 0.0
    %1913 = vmatpush2.xpose.msra.mxu0 0.0
    %1914 = vmatprep.subr.mxu0 0.0
    %1915 = vmatpush2.xpose.msra.mxu0 0.0
    %1916 = vmatprep.subr.mxu0 0.0
    %1917 = vmatpush2.xpose.msra.mxu0 0.0
    %1918 = vmatprep.subr.mxu0 0.0
    %1919 = vmatpush2.xpose.msra.mxu0 0.0
    %1920 = vmatprep.subr.mxu0 0.0
    %1921 = vmatpush2.xpose.msra.mxu0 0.0
    %1922 = vmatprep.subr.mxu0 0.0
    %1923 = vmatpush2.xpose.msra.mxu0 0.0
    %1924 = vmatprep.subr.mxu0 0.0
    %1925 = vmatpush2.xpose.msra.mxu0 0.0
    %1926 = vmatprep.subr.mxu0 0.0
    %1927 = vmatpush2.xpose.msra.mxu0 0.0
    %1928 = vmatprep.subr.mxu0 0.0
    %1929 = vmatpush2.xpose.msra.mxu0 0.0
    %1930 = vmatprep.subr.mxu0 0.0
    %1931 = vmatpush2.xpose.msra.mxu0 0.0
    %1932 = vmatprep.subr.mxu0 0.0
    %1933 = vmatpush2.xpose.msra.mxu0 0.0
    %1934 = vmatprep.mubr.f32.mxu0 0.0
    %1935 = vmatmul.mubr.f32.gmra.mxu0 %v1862
    %v1936 = vpop.f32.mrf.mxu0
    %v1937 = vadd.f32 0.0, %v1936
    %v1938 = vpop.f32.mrf.mxu0
    %1939 = vmatprep.mubr.f32.mxu0 0.0
    %1940 = vmatmul.mubr.f32.gmra.mxu0 %v1864
    %v1941 = vpop.f32.mrf.mxu0
    %v1942 = vadd.f32 0.0, %v1941
    %v1943 = vpop.f32.mrf.mxu0
    %1944 = vdwg.mxu0
    %v1945 = vmul.f32 %v1937, 0.35355338
    %v1946 = vmul.f32 %v1942, 0.35355338
    %v1947 = vadd.f32 %v1945, %v170
    %v1948 = vadd.f32 %v1946, %v171
    %v1949 = vsel %vm46, %v1947, -inf
    %1950 = vmax.xlane.f32.xlu0 %v1949
    %v1951 = vpop.xlane.xlu0 %1950
    %v1952 = vsel %vm46, %v1948, -inf
    %1953 = vmax.xlane.f32.xlu0 %v1952
    %v1954 = vpop.xlane.xlu0 %1953
    %v1955 = vsub.f32 %v1947, %v1951
    %v1956 = vsub.f32 %v1948, %v1954
    %v1957 = vmul.f32 %v1955, 1.442695
    %v1958 = vpow.pop %v1957
    %v1959 = vmul.f32 %v1956, 1.442695
    %v1960 = vpow.pop %v1959
    %v1961 = vsel %vm46, %v1958, 0.0
    %1962 = vadd.xlane.f32.xlu0 %v1961
    %v1963 = vpop.xlane.xlu0 %1962
    %v1964 = vsel %vm46, %v1960, 0.0
    %1965 = vadd.xlane.f32.xlu0 %v1964
    %v1966 = vpop.xlane.xlu0 %1965
    %v1967 = vrcp.pop %v1963
    %v1968 = vrcp.pop %v1966
    %v1969 = vmul.f32 %v1958, %v1967
    %v1970 = vmul.f32 %v1960, %v1968
    %1971 = vrot.lane.b32.xlu0 %v1644, 56
    %v1972 = vpop.permute.xlu0 %1971
    %1973 = vrot.lane.b32.xlu0 %v1649, 56
    %v1974 = vpop.permute.xlu0 %1973
    %v1978 = vsel %vm46, %v1969, 0
    %v1981 = vsel %vm46, %v1970, 0
    %1983 = vmatprep.subr.mxu0 0.0
    %1984 = vmatpush1.msra.mxu0 0.0
    %1985 = vmatprep.subr.mxu0 0.0
    %1986 = vmatpush1.msra.mxu0 0.0
    %1987 = vmatprep.subr.mxu0 0.0
    %1988 = vmatpush1.msra.mxu0 0.0
    %1989 = vmatprep.subr.mxu0 0.0
    %1990 = vmatpush1.msra.mxu0 0.0
    %1991 = vmatprep.subr.mxu0 0.0
    %1992 = vmatpush1.msra.mxu0 0.0
    %1993 = vmatprep.subr.mxu0 0.0
    %1994 = vmatpush1.msra.mxu0 0.0
    %1995 = vmatprep.subr.mxu0 0.0
    %1996 = vmatpush1.msra.mxu0 0.0
    %1997 = vmatprep.subr.mxu0 0.0
    %1998 = vmatpush1.msra.mxu0 0.0
    %1999 = vmatprep.subr.mxu0 0.0
    %2000 = vmatpush1.msra.mxu0 0.0
    %2001 = vmatprep.subr.mxu0 0.0
    %2002 = vmatpush1.msra.mxu0 0.0
    %2003 = vmatprep.subr.mxu0 0.0
    %2004 = vmatpush1.msra.mxu0 0.0
    %2005 = vmatprep.subr.mxu0 0.0
    %2006 = vmatpush1.msra.mxu0 0.0
    %2007 = vmatprep.subr.mxu0 0.0
    %2008 = vmatpush1.msra.mxu0 0.0
    %2009 = vmatprep.subr.mxu0 0.0
    %2010 = vmatpush1.msra.mxu0 0.0
    %2011 = vmatprep.subr.mxu0 0.0
    %2012 = vmatpush1.msra.mxu0 %v1974
    %2013 = vmatprep.subr.mxu0 0.0
    %2014 = vmatpush1.msra.mxu0 %v1972
    %2015 = vmatprep.subr.mxu0 0.0
    %2016 = vmatpush2.msra.mxu0 0.0
    %2017 = vmatprep.subr.mxu0 0.0
    %2018 = vmatpush2.msra.mxu0 0.0
    %2019 = vmatprep.subr.mxu0 0.0
    %2020 = vmatpush2.msra.mxu0 0.0
    %2021 = vmatprep.subr.mxu0 0.0
    %2022 = vmatpush2.msra.mxu0 0.0
    %2023 = vmatprep.subr.mxu0 0.0
    %2024 = vmatpush2.msra.mxu0 0.0
    %2025 = vmatprep.subr.mxu0 0.0
    %2026 = vmatpush2.msra.mxu0 0.0
    %2027 = vmatprep.subr.mxu0 0.0
    %2028 = vmatpush2.msra.mxu0 0.0
    %2029 = vmatprep.subr.mxu0 0.0
    %2030 = vmatpush2.msra.mxu0 0.0
    %2031 = vmatprep.subr.mxu0 0.0
    %2032 = vmatpush2.msra.mxu0 0.0
    %2033 = vmatprep.subr.mxu0 0.0
    %2034 = vmatpush2.msra.mxu0 0.0
    %2035 = vmatprep.subr.mxu0 0.0
    %2036 = vmatpush2.msra.mxu0 0.0
    %2037 = vmatprep.subr.mxu0 0.0
    %2038 = vmatpush2.msra.mxu0 0.0
    %2039 = vmatprep.subr.mxu0 0.0
    %2040 = vmatpush2.msra.mxu0 0.0
    %2041 = vmatprep.subr.mxu0 0.0
    %2042 = vmatpush2.msra.mxu0 0.0
    %2043 = vmatprep.subr.mxu0 0.0
    %2044 = vmatpush2.msra.mxu0 0.0
    %2045 = vmatprep.subr.mxu0 0.0
    %2046 = vmatpush2.msra.mxu0 0.0
    %2047 = vmatprep.mubr.f32.mxu0 0.0
    %2048 = vmatmul.mubr.f32.gmra.mxu0 %v1978
    %v2049 = vpop.f32.mrf.mxu0
    %v2050 = vadd.f32 0.0, %v2049
    %v2051 = vpop.f32.mrf.mxu0
    %2052 = vmatprep.mubr.f32.mxu0 0.0
    %2053 = vmatmul.mubr.f32.gmra.mxu0 %v1981
    %v2054 = vpop.f32.mrf.mxu0
    %v2055 = vadd.f32 0.0, %v2054
    %v2056 = vpop.f32.mrf.mxu0
    %2057 = vdwg.mxu0
    %2058 = vrot.lane.b32.xlu0 %v1644, 112
    %v2059 = vpop.permute.xlu0 %2058
    %2060 = vrot.lane.b32.xlu0 %v1649, 112
    %v2061 = vpop.permute.xlu0 %2060
    %2062 = vrot.lane.b32.xlu0 %v1644, 80
    %v2063 = vpop.permute.xlu0 %2062
    %2064 = vrot.lane.b32.xlu0 %v1649, 80
    %v2065 = vpop.permute.xlu0 %2064
    %v2066 = vsel %vm318, %v2059, 0
    %v2068 = vsel %vm318, %v2061, 0
    %v2070 = vsel %vm318, %v2063, 0
    %v2072 = vsel %vm318, %v2065, 0
    %2074 = vmatprep.subr.mxu0 0.0
    %2075 = vmatpush1.xpose.msra.mxu0 0.0
    %2076 = vmatprep.subr.mxu0 0.0
    %2077 = vmatpush1.xpose.msra.mxu0 0.0
    %2078 = vmatprep.subr.mxu0 0.0
    %2079 = vmatpush1.xpose.msra.mxu0 0.0
    %2080 = vmatprep.subr.mxu0 0.0
    %2081 = vmatpush1.xpose.msra.mxu0 0.0
    %2082 = vmatprep.subr.mxu0 0.0
    %2083 = vmatpush1.xpose.msra.mxu0 0.0
    %2084 = vmatprep.subr.mxu0 0.0
    %2085 = vmatpush1.xpose.msra.mxu0 0.0
    %2086 = vmatprep.subr.mxu0 0.0
    %2087 = vmatpush1.xpose.msra.mxu0 0.0
    %2088 = vmatprep.subr.mxu0 0.0
    %2089 = vmatpush1.xpose.msra.mxu0 0.0
    %2090 = vmatprep.subr.mxu0 0.0
    %2091 = vmatpush1.xpose.msra.mxu0 0.0
    %2092 = vmatprep.subr.mxu0 0.0
    %2093 = vmatpush1.xpose.msra.mxu0 0.0
    %2094 = vmatprep.subr.mxu0 0.0
    %2095 = vmatpush1.xpose.msra.mxu0 0.0
    %2096 = vmatprep.subr.mxu0 0.0
    %2097 = vmatpush1.xpose.msra.mxu0 0.0
    %2098 = vmatprep.subr.mxu0 0.0
    %2099 = vmatpush1.xpose.msra.mxu0 0.0
    %2100 = vmatprep.subr.mxu0 0.0
    %2101 = vmatpush1.xpose.msra.mxu0 0.0
    %2102 = vmatprep.subr.mxu0 0.0
    %2103 = vmatpush1.xpose.msra.mxu0 %v2072
    %2104 = vmatprep.subr.mxu0 0.0
    %2105 = vmatpush1.xpose.msra.mxu0 %v2070
    %2106 = vmatprep.subr.mxu0 0.0
    %2107 = vmatpush2.xpose.msra.mxu0 0.0
    %2108 = vmatprep.subr.mxu0 0.0
    %2109 = vmatpush2.xpose.msra.mxu0 0.0
    %2110 = vmatprep.subr.mxu0 0.0
    %2111 = vmatpush2.xpose.msra.mxu0 0.0
    %2112 = vmatprep.subr.mxu0 0.0
    %2113 = vmatpush2.xpose.msra.mxu0 0.0
    %2114 = vmatprep.subr.mxu0 0.0
    %2115 = vmatpush2.xpose.msra.mxu0 0.0
    %2116 = vmatprep.subr.mxu0 0.0
    %2117 = vmatpush2.xpose.msra.mxu0 0.0
    %2118 = vmatprep.subr.mxu0 0.0
    %2119 = vmatpush2.xpose.msra.mxu0 0.0
    %2120 = vmatprep.subr.mxu0 0.0
    %2121 = vmatpush2.xpose.msra.mxu0 0.0
    %2122 = vmatprep.subr.mxu0 0.0
    %2123 = vmatpush2.xpose.msra.mxu0 0.0
    %2124 = vmatprep.subr.mxu0 0.0
    %2125 = vmatpush2.xpose.msra.mxu0 0.0
    %2126 = vmatprep.subr.mxu0 0.0
    %2127 = vmatpush2.xpose.msra.mxu0 0.0
    %2128 = vmatprep.subr.mxu0 0.0
    %2129 = vmatpush2.xpose.msra.mxu0 0.0
    %2130 = vmatprep.subr.mxu0 0.0
    %2131 = vmatpush2.xpose.msra.mxu0 0.0
    %2132 = vmatprep.subr.mxu0 0.0
    %2133 = vmatpush2.xpose.msra.mxu0 0.0
    %2134 = vmatprep.subr.mxu0 0.0
    %2135 = vmatpush2.xpose.msra.mxu0 0.0
    %2136 = vmatprep.subr.mxu0 0.0
    %2137 = vmatpush2.xpose.msra.mxu0 0.0
    %2138 = vmatprep.mubr.f32.mxu0 0.0
    %2139 = vmatmul.mubr.f32.gmra.mxu0 %v2066
    %v2140 = vpop.f32.mrf.mxu0
    %v2141 = vadd.f32 0.0, %v2140
    %v2142 = vpop.f32.mrf.mxu0
    %2143 = vmatprep.mubr.f32.mxu0 0.0
    %2144 = vmatmul.mubr.f32.gmra.mxu0 %v2068
    %v2145 = vpop.f32.mrf.mxu0
    %v2146 = vadd.f32 0.0, %v2145
    %v2147 = vpop.f32.mrf.mxu0
    %2148 = vdwg.mxu0
    %v2149 = vmul.f32 %v2141, 0.35355338
    %v2150 = vmul.f32 %v2146, 0.35355338
    %v2151 = vadd.f32 %v2149, %v170
    %v2152 = vadd.f32 %v2150, %v171
    %v2153 = vsel %vm46, %v2151, -inf
    %2154 = vmax.xlane.f32.xlu0 %v2153
    %v2155 = vpop.xlane.xlu0 %2154
    %v2156 = vsel %vm46, %v2152, -inf
    %2157 = vmax.xlane.f32.xlu0 %v2156
    %v2158 = vpop.xlane.xlu0 %2157
    %v2159 = vsub.f32 %v2151, %v2155
    %v2160 = vsub.f32 %v2152, %v2158
    %v2161 = vmul.f32 %v2159, 1.442695
    %v2162 = vpow.pop %v2161
    %v2163 = vmul.f32 %v2160, 1.442695
    %v2164 = vpow.pop %v2163
    %v2165 = vsel %vm46, %v2162, 0.0
    %2166 = vadd.xlane.f32.xlu0 %v2165
    %v2167 = vpop.xlane.xlu0 %2166
    %v2168 = vsel %vm46, %v2164, 0.0
    %2169 = vadd.xlane.f32.xlu0 %v2168
    %v2170 = vpop.xlane.xlu0 %2169
    %v2171 = vrcp.pop %v2167
    %v2172 = vrcp.pop %v2170
    %v2173 = vmul.f32 %v2162, %v2171
    %v2174 = vmul.f32 %v2164, %v2172
    %2175 = vrot.lane.b32.xlu0 %v1644, 48
    %v2176 = vpop.permute.xlu0 %2175
    %2177 = vrot.lane.b32.xlu0 %v1649, 48
    %v2178 = vpop.permute.xlu0 %2177
    %v2182 = vsel %vm46, %v2173, 0
    %v2185 = vsel %vm46, %v2174, 0
    %2187 = vmatprep.subr.mxu0 0.0
    %2188 = vmatpush1.msra.mxu0 0.0
    %2189 = vmatprep.subr.mxu0 0.0
    %2190 = vmatpush1.msra.mxu0 0.0
    %2191 = vmatprep.subr.mxu0 0.0
    %2192 = vmatpush1.msra.mxu0 0.0
    %2193 = vmatprep.subr.mxu0 0.0
    %2194 = vmatpush1.msra.mxu0 0.0
    %2195 = vmatprep.subr.mxu0 0.0
    %2196 = vmatpush1.msra.mxu0 0.0
    %2197 = vmatprep.subr.mxu0 0.0
    %2198 = vmatpush1.msra.mxu0 0.0
    %2199 = vmatprep.subr.mxu0 0.0
    %2200 = vmatpush1.msra.mxu0 0.0
    %2201 = vmatprep.subr.mxu0 0.0
    %2202 = vmatpush1.msra.mxu0 0.0
    %2203 = vmatprep.subr.mxu0 0.0
    %2204 = vmatpush1.msra.mxu0 0.0
    %2205 = vmatprep.subr.mxu0 0.0
    %2206 = vmatpush1.msra.mxu0 0.0
    %2207 = vmatprep.subr.mxu0 0.0
    %2208 = vmatpush1.msra.mxu0 0.0
    %2209 = vmatprep.subr.mxu0 0.0
    %2210 = vmatpush1.msra.mxu0 0.0
    %2211 = vmatprep.subr.mxu0 0.0
    %2212 = vmatpush1.msra.mxu0 0.0
    %2213 = vmatprep.subr.mxu0 0.0
    %2214 = vmatpush1.msra.mxu0 0.0
    %2215 = vmatprep.subr.mxu0 0.0
    %2216 = vmatpush1.msra.mxu0 %v2178
    %2217 = vmatprep.subr.mxu0 0.0
    %2218 = vmatpush1.msra.mxu0 %v2176
    %2219 = vmatprep.subr.mxu0 0.0
    %2220 = vmatpush2.msra.mxu0 0.0
    %2221 = vmatprep.subr.mxu0 0.0
    %2222 = vmatpush2.msra.mxu0 0.0
    %2223 = vmatprep.subr.mxu0 0.0
    %2224 = vmatpush2.msra.mxu0 0.0
    %2225 = vmatprep.subr.mxu0 0.0
    %2226 = vmatpush2.msra.mxu0 0.0
    %2227 = vmatprep.subr.mxu0 0.0
    %2228 = vmatpush2.msra.mxu0 0.0
    %2229 = vmatprep.subr.mxu0 0.0
    %2230 = vmatpush2.msra.mxu0 0.0
    %2231 = vmatprep.subr.mxu0 0.0
    %2232 = vmatpush2.msra.mxu0 0.0
    %2233 = vmatprep.subr.mxu0 0.0
    %2234 = vmatpush2.msra.mxu0 0.0
    %2235 = vmatprep.subr.mxu0 0.0
    %2236 = vmatpush2.msra.mxu0 0.0
    %2237 = vmatprep.subr.mxu0 0.0
    %2238 = vmatpush2.msra.mxu0 0.0
    %2239 = vmatprep.subr.mxu0 0.0
    %2240 = vmatpush2.msra.mxu0 0.0
    %2241 = vmatprep.subr.mxu0 0.0
    %2242 = vmatpush2.msra.mxu0 0.0
    %2243 = vmatprep.subr.mxu0 0.0
    %2244 = vmatpush2.msra.mxu0 0.0
    %2245 = vmatprep.subr.mxu0 0.0
    %2246 = vmatpush2.msra.mxu0 0.0
    %2247 = vmatprep.subr.mxu0 0.0
    %2248 = vmatpush2.msra.mxu0 0.0
    %2249 = vmatprep.subr.mxu0 0.0
    %2250 = vmatpush2.msra.mxu0 0.0
    %2251 = vmatprep.mubr.f32.mxu0 0.0
    %2252 = vmatmul.mubr.f32.gmra.mxu0 %v2182
    %v2253 = vpop.f32.mrf.mxu0
    %v2254 = vadd.f32 0.0, %v2253
    %v2255 = vpop.f32.mrf.mxu0
    %2256 = vmatprep.mubr.f32.mxu0 0.0
    %2257 = vmatmul.mubr.f32.gmra.mxu0 %v2185
    %v2258 = vpop.f32.mrf.mxu0
    %v2259 = vadd.f32 0.0, %v2258
    %v2260 = vpop.f32.mrf.mxu0
    %2261 = vdwg.mxu0
    %2262 = vrot.lane.b32.xlu0 %v1644, 104
    %v2263 = vpop.permute.xlu0 %2262
    %2264 = vrot.lane.b32.xlu0 %v1649, 104
    %v2265 = vpop.permute.xlu0 %2264
    %2266 = vrot.lane.b32.xlu0 %v1644, 72
    %v2267 = vpop.permute.xlu0 %2266
    %2268 = vrot.lane.b32.xlu0 %v1649, 72
    %v2269 = vpop.permute.xlu0 %2268
    %v2270 = vsel %vm318, %v2263, 0
    %v2272 = vsel %vm318, %v2265, 0
    %v2274 = vsel %vm318, %v2267, 0
    %v2276 = vsel %vm318, %v2269, 0
    %2278 = vmatprep.subr.mxu0 0.0
    %2279 = vmatpush1.xpose.msra.mxu0 0.0
    %2280 = vmatprep.subr.mxu0 0.0
    %2281 = vmatpush1.xpose.msra.mxu0 0.0
    %2282 = vmatprep.subr.mxu0 0.0
    %2283 = vmatpush1.xpose.msra.mxu0 0.0
    %2284 = vmatprep.subr.mxu0 0.0
    %2285 = vmatpush1.xpose.msra.mxu0 0.0
    %2286 = vmatprep.subr.mxu0 0.0
    %2287 = vmatpush1.xpose.msra.mxu0 0.0
    %2288 = vmatprep.subr.mxu0 0.0
    %2289 = vmatpush1.xpose.msra.mxu0 0.0
    %2290 = vmatprep.subr.mxu0 0.0
    %2291 = vmatpush1.xpose.msra.mxu0 0.0
    %2292 = vmatprep.subr.mxu0 0.0
    %2293 = vmatpush1.xpose.msra.mxu0 0.0
    %2294 = vmatprep.subr.mxu0 0.0
    %2295 = vmatpush1.xpose.msra.mxu0 0.0
    %2296 = vmatprep.subr.mxu0 0.0
    %2297 = vmatpush1.xpose.msra.mxu0 0.0
    %2298 = vmatprep.subr.mxu0 0.0
    %2299 = vmatpush1.xpose.msra.mxu0 0.0
    %2300 = vmatprep.subr.mxu0 0.0
    %2301 = vmatpush1.xpose.msra.mxu0 0.0
    %2302 = vmatprep.subr.mxu0 0.0
    %2303 = vmatpush1.xpose.msra.mxu0 0.0
    %2304 = vmatprep.subr.mxu0 0.0
    %2305 = vmatpush1.xpose.msra.mxu0 0.0
    %2306 = vmatprep.subr.mxu0 0.0
    %2307 = vmatpush1.xpose.msra.mxu0 %v2276
    %2308 = vmatprep.subr.mxu0 0.0
    %2309 = vmatpush1.xpose.msra.mxu0 %v2274
    %2310 = vmatprep.subr.mxu0 0.0
    %2311 = vmatpush2.xpose.msra.mxu0 0.0
    %2312 = vmatprep.subr.mxu0 0.0
    %2313 = vmatpush2.xpose.msra.mxu0 0.0
    %2314 = vmatprep.subr.mxu0 0.0
    %2315 = vmatpush2.xpose.msra.mxu0 0.0
    %2316 = vmatprep.subr.mxu0 0.0
    %2317 = vmatpush2.xpose.msra.mxu0 0.0
    %2318 = vmatprep.subr.mxu0 0.0
    %2319 = vmatpush2.xpose.msra.mxu0 0.0
    %2320 = vmatprep.subr.mxu0 0.0
    %2321 = vmatpush2.xpose.msra.mxu0 0.0
    %2322 = vmatprep.subr.mxu0 0.0
    %2323 = vmatpush2.xpose.msra.mxu0 0.0
    %2324 = vmatprep.subr.mxu0 0.0
    %2325 = vmatpush2.xpose.msra.mxu0 0.0
    %2326 = vmatprep.subr.mxu0 0.0
    %2327 = vmatpush2.xpose.msra.mxu0 0.0
    %2328 = vmatprep.subr.mxu0 0.0
    %2329 = vmatpush2.xpose.msra.mxu0 0.0
    %2330 = vmatprep.subr.mxu0 0.0
    %2331 = vmatpush2.xpose.msra.mxu0 0.0
    %2332 = vmatprep.subr.mxu0 0.0
    %2333 = vmatpush2.xpose.msra.mxu0 0.0
    %2334 = vmatprep.subr.mxu0 0.0
    %2335 = vmatpush2.xpose.msra.mxu0 0.0
    %2336 = vmatprep.subr.mxu0 0.0
    %2337 = vmatpush2.xpose.msra.mxu0 0.0
    %2338 = vmatprep.subr.mxu0 0.0
    %2339 = vmatpush2.xpose.msra.mxu0 0.0
    %2340 = vmatprep.subr.mxu0 0.0
    %2341 = vmatpush2.xpose.msra.mxu0 0.0
    %2342 = vmatprep.mubr.f32.mxu0 0.0
    %2343 = vmatmul.mubr.f32.gmra.mxu0 %v2270
    %v2344 = vpop.f32.mrf.mxu0
    %v2345 = vadd.f32 0.0, %v2344
    %v2346 = vpop.f32.mrf.mxu0
    %2347 = vmatprep.mubr.f32.mxu0 0.0
    %2348 = vmatmul.mubr.f32.gmra.mxu0 %v2272
    %v2349 = vpop.f32.mrf.mxu0
    %v2350 = vadd.f32 0.0, %v2349
    %v2351 = vpop.f32.mrf.mxu0
    %2352 = vdwg.mxu0
    %v2353 = vmul.f32 %v2345, 0.35355338
    %v2354 = vmul.f32 %v2350, 0.35355338
    %v2355 = vadd.f32 %v2353, %v170
    %v2356 = vadd.f32 %v2354, %v171
    %v2357 = vsel %vm46, %v2355, -inf
    %2358 = vmax.xlane.f32.xlu0 %v2357
    %v2359 = vpop.xlane.xlu0 %2358
    %v2360 = vsel %vm46, %v2356, -inf
    %2361 = vmax.xlane.f32.xlu0 %v2360
    %v2362 = vpop.xlane.xlu0 %2361
    %v2363 = vsub.f32 %v2355, %v2359
    %v2364 = vsub.f32 %v2356, %v2362
    %v2365 = vmul.f32 %v2363, 1.442695
    %v2366 = vpow.pop %v2365
    %v2367 = vmul.f32 %v2364, 1.442695
    %v2368 = vpow.pop %v2367
    %v2369 = vsel %vm46, %v2366, 0.0
    %2370 = vadd.xlane.f32.xlu0 %v2369
    %v2371 = vpop.xlane.xlu0 %2370
    %v2372 = vsel %vm46, %v2368, 0.0
    %2373 = vadd.xlane.f32.xlu0 %v2372
    %v2374 = vpop.xlane.xlu0 %2373
    %v2375 = vrcp.pop %v2371
    %v2376 = vrcp.pop %v2374
    %v2377 = vmul.f32 %v2366, %v2375
    %v2378 = vmul.f32 %v2368, %v2376
    %2379 = vrot.lane.b32.xlu0 %v1644, 40
    %v2380 = vpop.permute.xlu0 %2379
    %2381 = vrot.lane.b32.xlu0 %v1649, 40
    %v2382 = vpop.permute.xlu0 %2381
    %v2386 = vsel %vm46, %v2377, 0
    %v2389 = vsel %vm46, %v2378, 0
    %2391 = vmatprep.subr.mxu0 0.0
    %2392 = vmatpush1.msra.mxu0 0.0
    %2393 = vmatprep.subr.mxu0 0.0
    %2394 = vmatpush1.msra.mxu0 0.0
    %2395 = vmatprep.subr.mxu0 0.0
    %2396 = vmatpush1.msra.mxu0 0.0
    %2397 = vmatprep.subr.mxu0 0.0
    %2398 = vmatpush1.msra.mxu0 0.0
    %2399 = vmatprep.subr.mxu0 0.0
    %2400 = vmatpush1.msra.mxu0 0.0
    %2401 = vmatprep.subr.mxu0 0.0
    %2402 = vmatpush1.msra.mxu0 0.0
    %2403 = vmatprep.subr.mxu0 0.0
    %2404 = vmatpush1.msra.mxu0 0.0
    %2405 = vmatprep.subr.mxu0 0.0
    %2406 = vmatpush1.msra.mxu0 0.0
    %2407 = vmatprep.subr.mxu0 0.0
    %2408 = vmatpush1.msra.mxu0 0.0
    %2409 = vmatprep.subr.mxu0 0.0
    %2410 = vmatpush1.msra.mxu0 0.0
    %2411 = vmatprep.subr.mxu0 0.0
    %2412 = vmatpush1.msra.mxu0 0.0
    %2413 = vmatprep.subr.mxu0 0.0
    %2414 = vmatpush1.msra.mxu0 0.0
    %2415 = vmatprep.subr.mxu0 0.0
    %2416 = vmatpush1.msra.mxu0 0.0
    %2417 = vmatprep.subr.mxu0 0.0
    %2418 = vmatpush1.msra.mxu0 0.0
    %2419 = vmatprep.subr.mxu0 0.0
    %2420 = vmatpush1.msra.mxu0 %v2382
    %2421 = vmatprep.subr.mxu0 0.0
    %2422 = vmatpush1.msra.mxu0 %v2380
    %2423 = vmatprep.subr.mxu0 0.0
    %2424 = vmatpush2.msra.mxu0 0.0
    %2425 = vmatprep.subr.mxu0 0.0
    %2426 = vmatpush2.msra.mxu0 0.0
    %2427 = vmatprep.subr.mxu0 0.0
    %2428 = vmatpush2.msra.mxu0 0.0
    %2429 = vmatprep.subr.mxu0 0.0
    %2430 = vmatpush2.msra.mxu0 0.0
    %2431 = vmatprep.subr.mxu0 0.0
    %2432 = vmatpush2.msra.mxu0 0.0
    %2433 = vmatprep.subr.mxu0 0.0
    %2434 = vmatpush2.msra.mxu0 0.0
    %2435 = vmatprep.subr.mxu0 0.0
    %2436 = vmatpush2.msra.mxu0 0.0
    %2437 = vmatprep.subr.mxu0 0.0
    %2438 = vmatpush2.msra.mxu0 0.0
    %2439 = vmatprep.subr.mxu0 0.0
    %2440 = vmatpush2.msra.mxu0 0.0
    %2441 = vmatprep.subr.mxu0 0.0
    %2442 = vmatpush2.msra.mxu0 0.0
    %2443 = vmatprep.subr.mxu0 0.0
    %2444 = vmatpush2.msra.mxu0 0.0
    %2445 = vmatprep.subr.mxu0 0.0
    %2446 = vmatpush2.msra.mxu0 0.0
    %2447 = vmatprep.subr.mxu0 0.0
    %2448 = vmatpush2.msra.mxu0 0.0
    %2449 = vmatprep.subr.mxu0 0.0
    %2450 = vmatpush2.msra.mxu0 0.0
    %2451 = vmatprep.subr.mxu0 0.0
    %2452 = vmatpush2.msra.mxu0 0.0
    %2453 = vmatprep.subr.mxu0 0.0
    %2454 = vmatpush2.msra.mxu0 0.0
    %2455 = vmatprep.mubr.f32.mxu0 0.0
    %2456 = vmatmul.mubr.f32.gmra.mxu0 %v2386
    %v2457 = vpop.f32.mrf.mxu0
    %v2458 = vadd.f32 0.0, %v2457
    %v2459 = vpop.f32.mrf.mxu0
    %2460 = vmatprep.mubr.f32.mxu0 0.0
    %2461 = vmatmul.mubr.f32.gmra.mxu0 %v2389
    %v2462 = vpop.f32.mrf.mxu0
    %v2463 = vadd.f32 0.0, %v2462
    %v2464 = vpop.f32.mrf.mxu0
    %2465 = vdwg.mxu0
    %2468 = vrot.lane.b32.xlu0 %v2050, 8
    %v2469 = vpop.permute.xlu0 %2468
    %2470 = vrot.lane.b32.xlu0 %v2055, 8
    %v2471 = vpop.permute.xlu0 %2470
    %2476 = vrot.lane.b32.xlu0 %v2254, 16
    %v2477 = vpop.permute.xlu0 %2476
    %2478 = vrot.lane.b32.xlu0 %v2259, 16
    %v2479 = vpop.permute.xlu0 %2478
    %2484 = vrot.lane.b32.xlu0 %v2458, 24
    %v2485 = vpop.permute.xlu0 %2484
    %2486 = vrot.lane.b32.xlu0 %v2463, 24
    %v2487 = vpop.permute.xlu0 %2486
    %v2490 = vsel %vm318, %v1846, %v2469
    %v2491 = vsel %vm318, %v1851, %v2471
    %v2492 = vsel %vm46, %v2490, %v2477
    %v2493 = vsel %vm46, %v2491, %v2479
    %v2494 = vsel %vm1155, %v2492, %v2485
    %v2495 = vsel %vm1155, %v2493, %v2487
    %2500 = vrot.lane.b32.xlu0 %v1514, 32
    %v2501 = vpop.permute.xlu0 %2500
    %2502 = vrot.lane.b32.xlu0 %v1515, 32
    %v2503 = vpop.permute.xlu0 %2502
    %2504 = vrot.lane.b32.xlu0 %v1516, 32
    %v2505 = vpop.permute.xlu0 %2504
    %2506 = vrot.lane.b32.xlu0 %v1517, 32
    %v2507 = vpop.permute.xlu0 %2506
    %v2513 = vsel %vm187, %v2494, 0
    %v2516 = vsel %vm187, %v2495, 0
    %2518 = vmatprep.subr.mxu0 0.0
    %2519 = vmatpush1.msra.mxu0 0.0
    %2520 = vmatprep.subr.mxu0 0.0
    %2521 = vmatpush1.msra.mxu0 0.0
    %2522 = vmatprep.subr.mxu0 0.0
    %2523 = vmatpush1.msra.mxu0 0.0
    %2524 = vmatprep.subr.mxu0 0.0
    %2525 = vmatpush1.msra.mxu0 0.0
    %2526 = vmatprep.subr.mxu0 0.0
    %2527 = vmatpush1.msra.mxu0 0.0
    %2528 = vmatprep.subr.mxu0 0.0
    %2529 = vmatpush1.msra.mxu0 0.0
    %2530 = vmatprep.subr.mxu0 0.0
    %2531 = vmatpush1.msra.mxu0 0.0
    %2532 = vmatprep.subr.mxu0 0.0
    %2533 = vmatpush1.msra.mxu0 0.0
    %2534 = vmatprep.subr.mxu0 0.0
    %2535 = vmatpush1.msra.mxu0 0.0
    %2536 = vmatprep.subr.mxu0 0.0
    %2537 = vmatpush1.msra.mxu0 0.0
    %2538 = vmatprep.subr.mxu0 0.0
    %2539 = vmatpush1.msra.mxu0 0.0
    %2540 = vmatprep.subr.mxu0 0.0
    %2541 = vmatpush1.msra.mxu0 0.0
    %2542 = vmatprep.subr.mxu0 0.0
    %2543 = vmatpush1.msra.mxu0 %v2507
    %2544 = vmatprep.subr.mxu0 0.0
    %2545 = vmatpush1.msra.mxu0 %v2505
    %2546 = vmatprep.subr.mxu0 0.0
    %2547 = vmatpush1.msra.mxu0 %v2503
    %2548 = vmatprep.subr.mxu0 0.0
    %2549 = vmatpush1.msra.mxu0 %v2501
    %2550 = vmatprep.subr.mxu0 0.0
    %2551 = vmatpush2.msra.mxu0 0.0
    %2552 = vmatprep.subr.mxu0 0.0
    %2553 = vmatpush2.msra.mxu0 0.0
    %2554 = vmatprep.subr.mxu0 0.0
    %2555 = vmatpush2.msra.mxu0 0.0
    %2556 = vmatprep.subr.mxu0 0.0
    %2557 = vmatpush2.msra.mxu0 0.0
    %2558 = vmatprep.subr.mxu0 0.0
    %2559 = vmatpush2.msra.mxu0 0.0
    %2560 = vmatprep.subr.mxu0 0.0
    %2561 = vmatpush2.msra.mxu0 0.0
    %2562 = vmatprep.subr.mxu0 0.0
    %2563 = vmatpush2.msra.mxu0 0.0
    %2564 = vmatprep.subr.mxu0 0.0
    %2565 = vmatpush2.msra.mxu0 0.0
    %2566 = vmatprep.subr.mxu0 0.0
    %2567 = vmatpush2.msra.mxu0 0.0
    %2568 = vmatprep.subr.mxu0 0.0
    %2569 = vmatpush2.msra.mxu0 0.0
    %2570 = vmatprep.subr.mxu0 0.0
    %2571 = vmatpush2.msra.mxu0 0.0
    %2572 = vmatprep.subr.mxu0 0.0
    %2573 = vmatpush2.msra.mxu0 0.0
    %2574 = vmatprep.subr.mxu0 0.0
    %2575 = vmatpush2.msra.mxu0 0.0
    %2576 = vmatprep.subr.mxu0 0.0
    %2577 = vmatpush2.msra.mxu0 0.0
    %2578 = vmatprep.subr.mxu0 0.0
    %2579 = vmatpush2.msra.mxu0 0.0
    %2580 = vmatprep.subr.mxu0 0.0
    %2581 = vmatpush2.msra.mxu0 0.0
    %2582 = vmatprep.mubr.f32.mxu0 0.0
    %2583 = vmatmul.mubr.f32.gmra.mxu0 %v2513
    %v2584 = vpop.f32.mrf.mxu0
    %v2585 = vadd.f32 0.0, %v2584
    %v2586 = vpop.f32.mrf.mxu0
    %2587 = vmatprep.mubr.f32.mxu0 0.0
    %2588 = vmatmul.mubr.f32.gmra.mxu0 %v2516
    %v2589 = vpop.f32.mrf.mxu0
    %v2590 = vadd.f32 0.0, %v2589
    %v2591 = vpop.f32.mrf.mxu0
    %2592 = vdwg.mxu0
    %v2593 = vadd.f32 %v1512, %v2585
    %v2594 = vadd.f32 %v1513, %v2590
    %2596 = vrot.lane.b32.xlu0 %v1570, 32
    %v2597 = vpop.permute.xlu0 %2596
    %v2599 = vadd.f32 %v2593, %v2597
    %v2600 = vadd.f32 %v2594, %v2597
    %v2601 = vsel %vm187, %v2599, 0.0
    %2602 = vadd.xlane.f32.xlu0 %v2601
    %v2603 = vpop.xlane.xlu0 %2602
    %v2604 = vsel %vm187, %v2600, 0.0
    %2605 = vadd.xlane.f32.xlu0 %v2604
    %v2606 = vpop.xlane.xlu0 %2605
    %v2607 = vmul.f32 %v2603, %v194
    %v2608 = vmul.f32 %v2606, %v194
    %v2609 = vsub.f32 %v2599, %v2607
    %v2610 = vsub.f32 %v2600, %v2608
    %v2611 = vmul.f32 %v2609, %v2609
    %v2612 = vmul.f32 %v2610, %v2610
    %v2613 = vsel %vm187, %v2611, 0.0
    %2614 = vadd.xlane.f32.xlu0 %v2613
    %v2615 = vpop.xlane.xlu0 %2614
    %v2616 = vsel %vm187, %v2612, 0.0
    %2617 = vadd.xlane.f32.xlu0 %v2616
    %v2618 = vpop.xlane.xlu0 %2617
    %v2619 = vmul.f32 %v2615, 0.032258064
    %v2620 = vmul.f32 %v2618, 0.032258064
    %v2621 = vadd.f32 %v2619, 1e-06
    %v2622 = vadd.f32 %v2620, 1e-06
    %v2623 = vrsqrt.pop %v2621
    %v2624 = vrsqrt.pop %v2622
    %2627 = vrot.lane.b32.xlu0 %v2609, 64
    %v2628 = vpop.permute.xlu0 %2627
    %2629 = vrot.lane.b32.xlu0 %v2610, 64
    %v2630 = vpop.permute.xlu0 %2629
    %v2633 = vmul.f32 %v1556, %v2628
    %v2634 = vmul.f32 %v1556, %v2630
    %v2635 = vmul.f32 %v2633, %v2623
    %v2636 = vmul.f32 %v2634, %v2624
    %v2637 = vadd.f32 %v2635, %v1563
    %v2638 = vadd.f32 %v2636, %v1563
    %v2639 = vlaneseq
    %v2640 = vshrl.u32 %v2639, 7
    %v2641 = vsub.s32 0, %v2640
    %v2642 = vrot.slane %v1528, %v2641
    %2645 = vrot.lane.b32.xlu0 %v2637, 64
    %v2646 = vpop.permute.xlu0 %2645
    %2647 = vrot.lane.b32.xlu0 %v2638, 64
    %v2648 = vpop.permute.xlu0 %2647
    %v2649 = vsel %vm187, %v2646, 0
    %v2651 = vsel %vm187, %v2648, 0
    %2653 = vmatprep.subr.mxu0 0.0
    %2654 = vmatpush1.msra.mxu0 0.0
    %2655 = vmatprep.subr.mxu0 0.0
    %2656 = vmatpush1.msra.mxu0 0.0
    %2657 = vmatprep.subr.mxu0 0.0
    %2658 = vmatpush1.msra.mxu0 0.0
    %2659 = vmatprep.subr.mxu0 0.0
    %2660 = vmatpush1.msra.mxu0 0.0
    %2661 = vmatprep.subr.mxu0 0.0
    %2662 = vmatpush1.msra.mxu0 0.0
    %2663 = vmatprep.subr.mxu0 0.0
    %2664 = vmatpush1.msra.mxu0 0.0
    %2665 = vmatprep.subr.mxu0 0.0
    %2666 = vmatpush1.msra.mxu0 0.0
    %2667 = vmatprep.subr.mxu0 0.0
    %2668 = vmatpush1.msra.mxu0 0.0
    %2669 = vmatprep.subr.mxu0 0.0
    %2670 = vmatpush1.msra.mxu0 0.0
    %2671 = vmatprep.subr.mxu0 0.0
    %2672 = vmatpush1.msra.mxu0 0.0
    %2673 = vmatprep.subr.mxu0 0.0
    %2674 = vmatpush1.msra.mxu0 0.0
    %2675 = vmatprep.subr.mxu0 0.0
    %2676 = vmatpush1.msra.mxu0 0.0
    %2677 = vmatprep.subr.mxu0 0.0
    %2678 = vmatpush1.msra.mxu0 %v1521
    %2679 = vmatprep.subr.mxu0 0.0
    %2680 = vmatpush1.msra.mxu0 %v1520
    %2681 = vmatprep.subr.mxu0 0.0
    %2682 = vmatpush1.msra.mxu0 %v1519
    %2683 = vmatprep.subr.mxu0 0.0
    %2684 = vmatpush1.msra.mxu0 %v1518
    %2685 = vmatprep.subr.mxu0 0.0
    %2686 = vmatpush2.msra.mxu0 0.0
    %2687 = vmatprep.subr.mxu0 0.0
    %2688 = vmatpush2.msra.mxu0 0.0
    %2689 = vmatprep.subr.mxu0 0.0
    %2690 = vmatpush2.msra.mxu0 0.0
    %2691 = vmatprep.subr.mxu0 0.0
    %2692 = vmatpush2.msra.mxu0 0.0
    %2693 = vmatprep.subr.mxu0 0.0
    %2694 = vmatpush2.msra.mxu0 0.0
    %2695 = vmatprep.subr.mxu0 0.0
    %2696 = vmatpush2.msra.mxu0 0.0
    %2697 = vmatprep.subr.mxu0 0.0
    %2698 = vmatpush2.msra.mxu0 0.0
    %2699 = vmatprep.subr.mxu0 0.0
    %2700 = vmatpush2.msra.mxu0 0.0
    %2701 = vmatprep.subr.mxu0 0.0
    %2702 = vmatpush2.msra.mxu0 0.0
    %2703 = vmatprep.subr.mxu0 0.0
    %2704 = vmatpush2.msra.mxu0 0.0
    %2705 = vmatprep.subr.mxu0 0.0
    %2706 = vmatpush2.msra.mxu0 0.0
    %2707 = vmatprep.subr.mxu0 0.0
    %2708 = vmatpush2.msra.mxu0 0.0
    %2709 = vmatprep.subr.mxu0 0.0
    %2710 = vmatpush2.msra.mxu0 0.0
    %2711 = vmatprep.subr.mxu0 0.0
    %2712 = vmatpush2.msra.mxu0 0.0
    %2713 = vmatprep.subr.mxu0 0.0
    %2714 = vmatpush2.msra.mxu0 0.0
    %2715 = vmatprep.subr.mxu0 0.0
    %2716 = vmatpush2.msra.mxu0 0.0
    %2717 = vmatprep.mubr.f32.mxu0 0.0
    %2718 = vmatmul.mubr.f32.gmra.mxu0 %v2649
    %v2719 = vpop.f32.mrf.mxu0
    %v2720 = vadd.f32 %v2642, %v2719
    %v2721 = vpop.f32.mrf.mxu0
    %2722 = vmatprep.mubr.f32.mxu0 0.0
    %2723 = vmatmul.mubr.f32.gmra.mxu0 %v2651
    %v2724 = vpop.f32.mrf.mxu0
    %v2725 = vadd.f32 %v2642, %v2724
    %v2726 = vpop.f32.mrf.mxu0
    %2727 = vdwg.mxu0
    %v2728 = vmax.f32 %v2720, 0.0
    %v2729 = vmax.f32 %v2725, 0.0
    %2738 = vrot.lane.b32.xlu0 %v1518, 64
    %v2739 = vpop.permute.xlu0 %2738
    %2740 = vrot.lane.b32.xlu0 %v1519, 64
    %v2741 = vpop.permute.xlu0 %2740
    %2742 = vrot.lane.b32.xlu0 %v1520, 64
    %v2743 = vpop.permute.xlu0 %2742
    %2744 = vrot.lane.b32.xlu0 %v1521, 64
    %v2745 = vpop.permute.xlu0 %2744
    %2746 = vrot.lane.b32.xlu0 %v1522, 64
    %v2747 = vpop.permute.xlu0 %2746
    %2748 = vrot.lane.b32.xlu0 %v1523, 64
    %v2749 = vpop.permute.xlu0 %2748
    %2750 = vrot.lane.b32.xlu0 %v1524, 64
    %v2751 = vpop.permute.xlu0 %2750
    %2752 = vrot.lane.b32.xlu0 %v1525, 64
    %v2753 = vpop.permute.xlu0 %2752
    %v2763 = vsel %vm1424, %v2728, 0
    %v2766 = vsel %vm1424, %v2729, 0
    %2768 = vmatprep.subr.mxu0 0.0
    %2769 = vmatpush1.msra.mxu0 0.0
    %2770 = vmatprep.subr.mxu0 0.0
    %2771 = vmatpush1.msra.mxu0 0.0
    %2772 = vmatprep.subr.mxu0 0.0
    %2773 = vmatpush1.msra.mxu0 0.0
    %2774 = vmatprep.subr.mxu0 0.0
    %2775 = vmatpush1.msra.mxu0 0.0
    %2776 = vmatprep.subr.mxu0 0.0
    %2777 = vmatpush1.msra.mxu0 0.0
    %2778 = vmatprep.subr.mxu0 0.0
    %2779 = vmatpush1.msra.mxu0 0.0
    %2780 = vmatprep.subr.mxu0 0.0
    %2781 = vmatpush1.msra.mxu0 0.0
    %2782 = vmatprep.subr.mxu0 0.0
    %2783 = vmatpush1.msra.mxu0 0.0
    %2784 = vmatprep.subr.mxu0 0.0
    %2785 = vmatpush1.msra.mxu0 %v2753
    %2786 = vmatprep.subr.mxu0 0.0
    %2787 = vmatpush1.msra.mxu0 %v2751
    %2788 = vmatprep.subr.mxu0 0.0
    %2789 = vmatpush1.msra.mxu0 %v2749
    %2790 = vmatprep.subr.mxu0 0.0
    %2791 = vmatpush1.msra.mxu0 %v2747
    %2792 = vmatprep.subr.mxu0 0.0
    %2793 = vmatpush1.msra.mxu0 %v2745
    %2794 = vmatprep.subr.mxu0 0.0
    %2795 = vmatpush1.msra.mxu0 %v2743
    %2796 = vmatprep.subr.mxu0 0.0
    %2797 = vmatpush1.msra.mxu0 %v2741
    %2798 = vmatprep.subr.mxu0 0.0
    %2799 = vmatpush1.msra.mxu0 %v2739
    %2800 = vmatprep.subr.mxu0 0.0
    %2801 = vmatpush2.msra.mxu0 0.0
    %2802 = vmatprep.subr.mxu0 0.0
    %2803 = vmatpush2.msra.mxu0 0.0
    %2804 = vmatprep.subr.mxu0 0.0
    %2805 = vmatpush2.msra.mxu0 0.0
    %2806 = vmatprep.subr.mxu0 0.0
    %2807 = vmatpush2.msra.mxu0 0.0
    %2808 = vmatprep.subr.mxu0 0.0
    %2809 = vmatpush2.msra.mxu0 0.0
    %2810 = vmatprep.subr.mxu0 0.0
    %2811 = vmatpush2.msra.mxu0 0.0
    %2812 = vmatprep.subr.mxu0 0.0
    %2813 = vmatpush2.msra.mxu0 0.0
    %2814 = vmatprep.subr.mxu0 0.0
    %2815 = vmatpush2.msra.mxu0 0.0
    %2816 = vmatprep.subr.mxu0 0.0
    %2817 = vmatpush2.msra.mxu0 0.0
    %2818 = vmatprep.subr.mxu0 0.0
    %2819 = vmatpush2.msra.mxu0 0.0
    %2820 = vmatprep.subr.mxu0 0.0
    %2821 = vmatpush2.msra.mxu0 0.0
    %2822 = vmatprep.subr.mxu0 0.0
    %2823 = vmatpush2.msra.mxu0 0.0
    %2824 = vmatprep.subr.mxu0 0.0
    %2825 = vmatpush2.msra.mxu0 0.0
    %2826 = vmatprep.subr.mxu0 0.0
    %2827 = vmatpush2.msra.mxu0 0.0
    %2828 = vmatprep.subr.mxu0 0.0
    %2829 = vmatpush2.msra.mxu0 0.0
    %2830 = vmatprep.subr.mxu0 0.0
    %2831 = vmatpush2.msra.mxu0 0.0
    %2832 = vmatprep.mubr.f32.mxu0 0.0
    %2833 = vmatmul.mubr.f32.gmra.mxu0 %v2763
    %v2834 = vpop.f32.mrf.mxu0
    %v2835 = vadd.f32 0.0, %v2834
    %v2836 = vpop.f32.mrf.mxu0
    %2837 = vmatprep.mubr.f32.mxu0 0.0
    %2838 = vmatmul.mubr.f32.gmra.mxu0 %v2766
    %v2839 = vpop.f32.mrf.mxu0
    %v2840 = vadd.f32 0.0, %v2839
    %v2841 = vpop.f32.mrf.mxu0
    %2842 = vdwg.mxu0
    %v2843 = vadd.f32 %v2599, %v2835
    %v2844 = vadd.f32 %v2600, %v2840
    %2846 = vrot.lane.b32.xlu0 %v2642, 64
    %v2847 = vpop.permute.xlu0 %2846
    %v2849 = vadd.f32 %v2843, %v2847
    %v2850 = vadd.f32 %v2844, %v2847
    %v2851 = vld [vmem:[#allocation2 + $0xf1] sm:$0x1]
    %v2852 = vld [vmem:[#allocation2 + $0xd0] sm:$0xff]
    %v2853 = vld [vmem:[#allocation2 + $0xd8] sm:$0xff]
    %v2854 = vld [vmem:[#allocation2 + $0xe0] sm:$0xff]
    %v2855 = vld [vmem:[#allocation2 + $0xe8] sm:$0xff]
    %v2856 = vld [vmem:[#allocation2 + $0xf0] sm:$0x1]
    %v2857 = vsel %vm187, %v2849, 0.0
    %2858 = vadd.xlane.f32.xlu0 %v2857
    %v2859 = vpop.xlane.xlu0 %2858
    %v2860 = vsel %vm187, %v2850, 0.0
    %2861 = vadd.xlane.f32.xlu0 %v2860
    %v2862 = vpop.xlane.xlu0 %2861
    %v2863 = vmul.f32 %v2859, %v194
    %v2864 = vmul.f32 %v2862, %v194
    %v2865 = vsub.f32 %v2849, %v2863
    %v2866 = vsub.f32 %v2850, %v2864
    %v2867 = vmul.f32 %v2865, %v2865
    %v2868 = vmul.f32 %v2866, %v2866
    %v2869 = vsel %vm187, %v2867, 0.0
    %2870 = vadd.xlane.f32.xlu0 %v2869
    %v2871 = vpop.xlane.xlu0 %2870
    %v2872 = vsel %vm187, %v2868, 0.0
    %2873 = vadd.xlane.f32.xlu0 %v2872
    %v2874 = vpop.xlane.xlu0 %2873
    %v2875 = vmul.f32 %v2871, 0.032258064
    %v2876 = vmul.f32 %v2874, 0.032258064
    %v2877 = vadd.f32 %v2875, 1e-06
    %v2878 = vadd.f32 %v2876, 1e-06
    %v2879 = vrsqrt.pop %v2877
    %v2880 = vrsqrt.pop %v2878
    %v2881 = vlaneseq
    %v2882 = vshrl.u32 %v2881, 7
    %v2883 = vsub.s32 0, %v2882
    %v2884 = vrot.slane %v2851, %v2883
    %v2885 = vmul.f32 %v2884, %v2865
    %v2886 = vmul.f32 %v2884, %v2866
    %v2887 = vmul.f32 %v2885, %v2879
    %v2888 = vmul.f32 %v2886, %v2880
    %2890 = vrot.lane.b32.xlu0 %v2884, 96
    %v2891 = vpop.permute.xlu0 %2890
    %v2893 = vadd.f32 %v2887, %v2891
    %v2894 = vadd.f32 %v2888, %v2891
    %v2895 = vlaneseq
    %v2896 = vshrl.u32 %v2895, 7
    %v2897 = vsub.s32 0, %v2896
    %v2898 = vrot.slane %v2856, %v2897
    %v2900 = vsel %vm187, %v2893, 0
    %v2903 = vsel %vm187, %v2894, 0
    %2905 = vmatprep.subr.mxu0 0.0
    %2906 = vmatpush1.msra.mxu0 0.0
    %2907 = vmatprep.subr.mxu0 0.0
    %2908 = vmatpush1.msra.mxu0 0.0
    %2909 = vmatprep.subr.mxu0 0.0
    %2910 = vmatpush1.msra.mxu0 0.0
    %2911 = vmatprep.subr.mxu0 0.0
    %2912 = vmatpush1.msra.mxu0 0.0
    %2913 = vmatprep.subr.mxu0 0.0
    %2914 = vmatpush1.msra.mxu0 0.0
    %2915 = vmatprep.subr.mxu0 0.0
    %2916 = vmatpush1.msra.mxu0 0.0
    %2917 = vmatprep.subr.mxu0 0.0
    %2918 = vmatpush1.msra.mxu0 0.0
    %2919 = vmatprep.subr.mxu0 0.0
    %2920 = vmatpush1.msra.mxu0 0.0
    %2921 = vmatprep.subr.mxu0 0.0
    %2922 = vmatpush1.msra.mxu0 0.0
    %2923 = vmatprep.subr.mxu0 0.0
    %2924 = vmatpush1.msra.mxu0 0.0
    %2925 = vmatprep.subr.mxu0 0.0
    %2926 = vmatpush1.msra.mxu0 0.0
    %2927 = vmatprep.subr.mxu0 0.0
    %2928 = vmatpush1.msra.mxu0 0.0
    %2929 = vmatprep.subr.mxu0 0.0
    %2930 = vmatpush1.msra.mxu0 %v2855
    %2931 = vmatprep.subr.mxu0 0.0
    %2932 = vmatpush1.msra.mxu0 %v2854
    %2933 = vmatprep.subr.mxu0 0.0
    %2934 = vmatpush1.msra.mxu0 %v2853
    %2935 = vmatprep.subr.mxu0 0.0
    %2936 = vmatpush1.msra.mxu0 %v2852
    %2937 = vmatprep.subr.mxu0 0.0
    %2938 = vmatpush2.msra.mxu0 0.0
    %2939 = vmatprep.subr.mxu0 0.0
    %2940 = vmatpush2.msra.mxu0 0.0
    %2941 = vmatprep.subr.mxu0 0.0
    %2942 = vmatpush2.msra.mxu0 0.0
    %2943 = vmatprep.subr.mxu0 0.0
    %2944 = vmatpush2.msra.mxu0 0.0
    %2945 = vmatprep.subr.mxu0 0.0
    %2946 = vmatpush2.msra.mxu0 0.0
    %2947 = vmatprep.subr.mxu0 0.0
    %2948 = vmatpush2.msra.mxu0 0.0
    %2949 = vmatprep.subr.mxu0 0.0
    %2950 = vmatpush2.msra.mxu0 0.0
    %2951 = vmatprep.subr.mxu0 0.0
    %2952 = vmatpush2.msra.mxu0 0.0
    %2953 = vmatprep.subr.mxu0 0.0
    %2954 = vmatpush2.msra.mxu0 0.0
    %2955 = vmatprep.subr.mxu0 0.0
    %2956 = vmatpush2.msra.mxu0 0.0
    %2957 = vmatprep.subr.mxu0 0.0
    %2958 = vmatpush2.msra.mxu0 0.0
    %2959 = vmatprep.subr.mxu0 0.0
    %2960 = vmatpush2.msra.mxu0 0.0
    %2961 = vmatprep.subr.mxu0 0.0
    %2962 = vmatpush2.msra.mxu0 0.0
    %2963 = vmatprep.subr.mxu0 0.0
    %2964 = vmatpush2.msra.mxu0 0.0
    %2965 = vmatprep.subr.mxu0 0.0
    %2966 = vmatpush2.msra.mxu0 0.0
    %2967 = vmatprep.subr.mxu0 0.0
    %2968 = vmatpush2.msra.mxu0 0.0
    %2969 = vmatprep.mubr.f32.mxu0 0.0
    %2970 = vmatmul.mubr.f32.gmra.mxu0 %v2900
    %v2971 = vpop.f32.mrf.mxu0
    %v2972 = vadd.f32 %v2898, %v2971
    %v2973 = vpop.f32.mrf.mxu0
    %2974 = vmatprep.mubr.f32.mxu0 0.0
    %2975 = vmatmul.mubr.f32.gmra.mxu0 %v2903
    %v2976 = vpop.f32.mrf.mxu0
    %v2977 = vadd.f32 %v2898, %v2976
    %v2978 = vpop.f32.mrf.mxu0
    %2979 = vdwg.mxu0
    %2980 = vmax.xlane.f32.xlu0 %v2972
    %v2981 = vpop.xlane.xlu0 %2980
    %2982 = vmax.xlane.f32.xlu0 %v2977
    %v2983 = vpop.xlane.xlu0 %2982
    %v2984 = vsub.f32 %v2972, %v2981
    %v2985 = vsub.f32 %v2977, %v2983
    %v2986 = vmul.f32 %v2984, 1.442695
    %v2987 = vpow.pop %v2986
    %v2988 = vmul.f32 %v2985, 1.442695
    %v2989 = vpow.pop %v2988
    %2990 = vadd.xlane.f32.xlu0 %v2987
    %v2991 = vpop.xlane.xlu0 %2990
    %2992 = vadd.xlane.f32.xlu0 %v2989
    %v2993 = vpop.xlane.xlu0 %2992
    %v2994 = vlog2.pop %v2991
    %v2995 = vmul.f32 %v2994, 0.6931472
    %v2996 = vlog2.pop %v2993
    %v2997 = vmul.f32 %v2996, 0.6931472
    %v2998 = vsub.f32 %v2984, %v2995
    %v2999 = vsub.f32 %v2985, %v2997
    %3000 = vst [vmem:[%s3] sm:$0xff] %v2998
    %3001 = vst [vmem:[%s3 + $0x8] sm:$0xff] %v2999
    // Predicated region
    $region18: #{encoder_decoder_forward.1} parent=1 // pred_check
      _
    $region19: #{encoder_decoder_forward.1} parent=1 // pred_check_branch
      %3003 = sbr.rel (0) target = $region21
    $region20: #{encoder_decoder_forward.1} parent=1 // pred_region
      _
    $region21: #{encoder_decoder_forward.1} parent=1 // pred_fallthru
      _
    // Predicated region
    $region22: #{encoder_decoder_forward.1} parent=1 // pred_check
      _
    $region23: #{encoder_decoder_forward.1} parent=1 // pred_check_branch
      %3005 = sbr.rel (0) target = $region25
    $region24: #{encoder_decoder_forward.1} parent=1 // pred_region
      _
    $region25: #{encoder_decoder_forward.1} parent=1 // pred_fallthru
      _
    %3006 = vsyncpa [#allocation3], 1

</llo_original>
